<compile_context>
chip_gen: v6e
topology: v6e:2x2x1
jax: 0.10.0
libtpu: 0.0.40
codegen_flags: <defaults>
</compile_context>

<pallas_src>
import functools

import jax
import jax.numpy as jnp
from jax.experimental import pallas as pl
from jax.experimental.pallas import tpu as pltpu

EPS = 1e-5                              # torch.nn.LayerNorm default eps
_PREC = jax.lax.Precision.HIGHEST       # full-accuracy f32 MXU matmuls


def _conv_as_matmul_weights(w, n_feats):
    """Fold Conv2d weights (Cout, Cin, K, K) into one dense (Cout*H, K*Cin*H) mat.

    For time offset kw, block kw of the result (columns kw*Cin*H .. ) is
        mat_kw[(co*H + h), (ci*H + h')] = w[co, ci, h'-h+K//2, kw]
    when |h' - h| <= K//2, else 0.  Channel mixing and the n_feats (H) direction
    of the convolution -- including its zero padding -- become one banded matmul
    applied to a (K*C*H, W) stack of time-shifted activation slabs.
    """
    c_out, c_in, k, _ = w.shape
    p = k // 2
    w = w.astype(jnp.float32)
    mats = []
    for kw in range(k):
        m = jnp.zeros((c_out * n_feats, c_in * n_feats), jnp.float32)
        for kh in range(k):
            band = jnp.eye(n_feats, n_feats, k=kh - p, dtype=jnp.float32)
            m = m + jnp.kron(w[:, :, kh, kw], band)
        mats.append(m)
    # (K, CoutH, CinH) -> (CoutH, K*CinH), block kw = mats[kw]
    stacked = jnp.stack(mats, axis=0)
    return jnp.transpose(stacked, (1, 0, 2)).reshape(
        c_out * n_feats, k * c_in * n_feats)


def _residual_cnn_kernel(C, H, W, K,
                         x_ref, g1_ref, be1_ref, g2_ref, be2_ref,
                         w1_ref, cb1_ref, w2_ref, cb2_ref,
                         o_ref):
    """One batch element per grid step.

    x_ref   : (1, C*H, W)     VMEM  input slab (time on lanes); also the residual
    g*/be*  : (H, 1)          VMEM  LayerNorm affine params (per n_feats)
    w*_ref  : (C*H, K*C*H)    VMEM  folded conv weights (time taps stacked on cols)
    cb*_ref : (C*H, 1)        VMEM  conv bias, repeated per n_feats row
    o_ref   : (1, C*H, W)     VMEM  output slab
    """
    CH = C * H
    P = K // 2
    # Lane index, used to zero the columns that pltpu.roll wraps around
    # (implements the conv's zero padding along time).  Hoisted: built once.
    col = jax.lax.broadcasted_iota(jnp.int32, (CH, W), 1)

    def ln_relu(a_flat, g_ref, b_ref):
        # LayerNorm over n_feats (H) per (channel, time), then ReLU.
        # Dropout (eval mode) == identity.
        a = a_flat.reshape(C, H, W)                 # cheap: H % 8 == 0
        mu = jnp.mean(a, axis=1, keepdims=True)
        var = jnp.mean((a - mu) ** 2, axis=1, keepdims=True)
        y = (a - mu) * jax.lax.rsqrt(var + EPS)
        y = y * g_ref[...][None, :, :] + b_ref[...][None, :, :]
        return jnp.maximum(y, 0.0).reshape(CH, W)

    def conv(a_flat, wm_ref, cb_ref):
        # "Same" conv = ONE (C*H, K*C*H) @ (K*C*H, W) MXU matmul on the stack
        # of time-shifted activations (shift via XLU roll + edge mask).
        taps = []
        for kw in range(K):
            dw = kw - P
            if dw == 0:
                taps.append(a_flat)
                continue
            tap = pltpu.roll(a_flat, shift=(-dw) % W, axis=1)
            if dw < 0:
                tap = jnp.where(col >= -dw, tap, 0.0)
            else:
                tap = jnp.where(col < W - dw, tap, 0.0)
            taps.append(tap)
        stacked = jnp.concatenate(taps, axis=0)     # (K*CH, W), tile-aligned
        acc = jnp.dot(wm_ref[...], stacked,
                      preferred_element_type=jnp.float32, precision=_PREC)
        return acc + cb_ref[...]

    x_flat = x_ref[0]                               # (C*H, W), residual
    y = ln_relu(x_flat, g1_ref, be1_ref)            # LN1 + ReLU (+ dropout=id)
    y = conv(y, w1_ref, cb1_ref)                    # conv1
    y = ln_relu(y, g2_ref, be2_ref)                 # LN2 + ReLU (+ dropout=id)
    y = conv(y, w2_ref, cb2_ref)                    # conv2
    o_ref[0] = y + x_flat                           # residual add


def residual_cnn(x, params, *, kernel_size):
    B, C, H, W = x.shape
    K = kernel_size

    # Residual add only makes sense for in_channels == out_channels, stride 1.
    assert params["w1"].shape == (C, C, K, K), "in_channels must equal out_channels"
    assert params["w2"].shape == (C, C, K, K), "in_channels must equal out_channels"
    assert H % 8 == 0, "n_feats should be a multiple of 8 (sublane tile)"
    assert W % 128 == 0, "time dim should be a multiple of 128 (lane tile)"
    CH = C * H

    g1 = params["ln1_gamma"].reshape(H, 1).astype(jnp.float32)
    be1 = params["ln1_beta"].reshape(H, 1).astype(jnp.float32)
    g2 = params["ln2_gamma"].reshape(H, 1).astype(jnp.float32)
    be2 = params["ln2_beta"].reshape(H, 1).astype(jnp.float32)
    w1m = _conv_as_matmul_weights(params["w1"], H)          # (CH, K*CH)
    w2m = _conv_as_matmul_weights(params["w2"], H)
    cb1 = jnp.repeat(params["b1"].astype(jnp.float32), H).reshape(CH, 1)
    cb2 = jnp.repeat(params["b2"].astype(jnp.float32), H).reshape(CH, 1)

    # Lane-dense layout: fold (C, H) onto sublanes, keep time on lanes.
    x_flat = x.astype(jnp.float32).reshape(B, CH, W)

    act_spec = pl.BlockSpec((1, CH, W), lambda b: (b, 0, 0))
    ln_spec = pl.BlockSpec((H, 1), lambda b: (0, 0))
    wm_spec = pl.BlockSpec((CH, K * CH), lambda b: (0, 0))
    cb_spec = pl.BlockSpec((CH, 1), lambda b: (0, 0))

    grid_spec = pltpu.PrefetchScalarGridSpec(
        num_scalar_prefetch=0,
        grid=(B,),
        in_specs=[act_spec,                 # x
                  ln_spec, ln_spec,         # ln1 gamma/beta
                  ln_spec, ln_spec,         # ln2 gamma/beta
                  wm_spec, cb_spec,         # conv1 folded weights / bias
                  wm_spec, cb_spec],        # conv2 folded weights / bias
        out_specs=act_spec,
    )

    kernel = functools.partial(_residual_cnn_kernel, C, H, W, K)
    out_flat = pl.pallas_call(
        kernel,
        out_shape=jax.ShapeDtypeStruct((B, CH, W), jnp.float32),
        grid_spec=grid_spec,
        compiler_params=pltpu.CompilerParams(
            dimension_semantics=("parallel",)),   # batch steps → v7x's 2 TCs
    )(x_flat, g1, be1, g2, be2, w1m, cb1, w2m, cb2)
    return out_flat.reshape(B, C, H, W)


def residual_cnn_reference(x, params, *, kernel_size):
    """Pure-JAX reference of the intended PyTorch forward (eval mode)."""
    K = kernel_size
    P = K // 2

    def ln(y, g, b):
        mu = jnp.mean(y, axis=2, keepdims=True)
        var = jnp.mean((y - mu) ** 2, axis=2, keepdims=True)
        yn = (y - mu) / jnp.sqrt(var + EPS)
        return yn * g.reshape(1, 1, -1, 1) + b.reshape(1, 1, -1, 1)

    def conv(y, w, b):
        out = jax.lax.conv_general_dilated(
            y, w, window_strides=(1, 1), padding=((P, P), (P, P)),
            dimension_numbers=("NCHW", "OIHW", "NCHW"),
            precision=jax.lax.Precision.HIGHEST)
        return out + b.reshape(1, -1, 1, 1)

    residual = x
    y = jax.nn.relu(ln(x, params["ln1_gamma"], params["ln1_beta"]))
    y = conv(y, params["w1"], params["b1"])
    y = jax.nn.relu(ln(y, params["ln2_gamma"], params["ln2_beta"]))
    y = conv(y, params["w2"], params["b2"])
    return y + residual


if __name__ == "__main__":
    # Shapes consistent with ResidualCNN(in=out=4, kernel=3, stride=1,
    # n_feats=16, dropout=0.1): x is (batch, channels, n_feats, time).
    # time=128 keeps the lane axis dense (one full lane tile); batch=2 gives the
    # pipeline two parallel grid steps.
    B, C, H, W, K = 2, 4, 16, 128, 3

    key = jax.random.PRNGKey(0)
    ks = jax.random.split(key, 9)
    x = jax.random.normal(ks[0], (B, C, H, W), jnp.float32)
    params = {
        "ln1_gamma": 1.0 + 0.1 * jax.random.normal(ks[1], (H,), jnp.float32),
        "ln1_beta": 0.1 * jax.random.normal(ks[2], (H,), jnp.float32),
        "ln2_gamma": 1.0 + 0.1 * jax.random.normal(ks[3], (H,), jnp.float32),
        "ln2_beta": 0.1 * jax.random.normal(ks[4], (H,), jnp.float32),
        "w1": 0.1 * jax.random.normal(ks[5], (C, C, K, K), jnp.float32),
        "b1": 0.1 * jax.random.normal(ks[6], (C,), jnp.float32),
        "w2": 0.1 * jax.random.normal(ks[7], (C, C, K, K), jnp.float32),
        "b2": 0.1 * jax.random.normal(ks[8], (C,), jnp.float32),
    }

    out = jax.block_until_ready(residual_cnn(x, params, kernel_size=K))
    ref = jax.block_until_ready(residual_cnn_reference(x, params, kernel_size=K))

    assert out.shape == (B, C, H, W)
    max_err = float(jnp.max(jnp.abs(out - ref)))
    assert jnp.allclose(out, ref, rtol=1e-3, atol=1e-3), (
        f"mismatch vs pure-JAX reference: max abs err = {max_err}")

    print("KERNEL_OK")
</pallas_src>

<mosaic_0001>
module attributes {stable_mosaic.version = 11 : i64} {
  func.func @_residual_cnn_kernel(%arg0: i32, %arg1: memref<1x64x128xf32, #tpu.memory_space<vmem>>, %arg2: memref<16x1xf32, #tpu.memory_space<vmem>>, %arg3: memref<16x1xf32, #tpu.memory_space<vmem>>, %arg4: memref<16x1xf32, #tpu.memory_space<vmem>>, %arg5: memref<16x1xf32, #tpu.memory_space<vmem>>, %arg6: memref<64x192xf32, #tpu.memory_space<vmem>>, %arg7: memref<64x1xf32, #tpu.memory_space<vmem>>, %arg8: memref<64x192xf32, #tpu.memory_space<vmem>>, %arg9: memref<64x1xf32, #tpu.memory_space<vmem>>, %arg10: memref<1x64x128xf32, #tpu.memory_space<vmem>>) attributes {dimension_semantics = [#tpu.dimension_semantics<parallel>], iteration_bounds = array<i64: 2>, scalar_prefetch = 0 : i64, scratch_operands = 0 : i64, tpu.core_type = #tpu.core_type<tc>, window_params = [{transform_indices = @transform_0, window_bounds = array<i64: 1, 64, 128>}, {pipeline_mode = #tpu.pipeline_mode<synchronous>, transform_indices = @transform_1, window_bounds = array<i64: 16, 1>}, {pipeline_mode = #tpu.pipeline_mode<synchronous>, transform_indices = @transform_2, window_bounds = array<i64: 16, 1>}, {pipeline_mode = #tpu.pipeline_mode<synchronous>, transform_indices = @transform_3, window_bounds = array<i64: 16, 1>}, {pipeline_mode = #tpu.pipeline_mode<synchronous>, transform_indices = @transform_4, window_bounds = array<i64: 16, 1>}, {pipeline_mode = #tpu.pipeline_mode<synchronous>, transform_indices = @transform_5, window_bounds = array<i64: 64, 192>}, {pipeline_mode = #tpu.pipeline_mode<synchronous>, transform_indices = @transform_6, window_bounds = array<i64: 64, 1>}, {pipeline_mode = #tpu.pipeline_mode<synchronous>, transform_indices = @transform_7, window_bounds = array<i64: 64, 192>}, {pipeline_mode = #tpu.pipeline_mode<synchronous>, transform_indices = @transform_8, window_bounds = array<i64: 64, 1>}, {transform_indices = @transform_9, window_bounds = array<i64: 1, 64, 128>}]} {
    %0 = tpu.iota {dimensions = array<i32: 1>} : vector<64x128xi32>
    %c0 = arith.constant 0 : index
    %c0_0 = arith.constant 0 : index
    %c0_1 = arith.constant 0 : index
    %1 = vector.load %arg1[%c0, %c0_0, %c0_1] : memref<1x64x128xf32, #tpu.memory_space<vmem>>, vector<1x64x128xf32>
    %2 = vector.shape_cast %1 : vector<1x64x128xf32> to vector<64x128xf32>
    %3 = vector.shape_cast %2 : vector<64x128xf32> to vector<4x16x128xf32>
    %cst = arith.constant dense<0.000000e+00> : vector<4x128xf32>
    %4 = vector.multi_reduction <add>, %3, %cst [1] : vector<4x16x128xf32> to vector<4x128xf32>
    %5 = vector.shape_cast %4 : vector<4x128xf32> to vector<4x1x128xf32>
    %cst_2 = arith.constant 1.600000e+01 : f32
    %6 = vector.broadcast %cst_2 : f32 to vector<4x1x128xf32>
    %7 = arith.divf %5, %6 : vector<4x1x128xf32>
    %8 = vector.broadcast %7 : vector<4x1x128xf32> to vector<4x16x128xf32>
    %9 = arith.subf %3, %8 : vector<4x16x128xf32>
    %10 = arith.mulf %9, %9 : vector<4x16x128xf32>
    %cst_3 = arith.constant dense<0.000000e+00> : vector<4x128xf32>
    %11 = vector.multi_reduction <add>, %10, %cst_3 [1] : vector<4x16x128xf32> to vector<4x128xf32>
    %12 = vector.shape_cast %11 : vector<4x128xf32> to vector<4x1x128xf32>
    %cst_4 = arith.constant 1.600000e+01 : f32
    %13 = vector.broadcast %cst_4 : f32 to vector<4x1x128xf32>
    %14 = arith.divf %12, %13 : vector<4x1x128xf32>
    %15 = vector.broadcast %7 : vector<4x1x128xf32> to vector<4x16x128xf32>
    %16 = arith.subf %3, %15 : vector<4x16x128xf32>
    %cst_5 = arith.constant 9.99999974E-6 : f32
    %17 = vector.broadcast %cst_5 : f32 to vector<4x1x128xf32>
    %18 = arith.addf %14, %17 : vector<4x1x128xf32>
    %19 = math.rsqrt %18 : vector<4x1x128xf32>
    %20 = vector.broadcast %19 : vector<4x1x128xf32> to vector<4x16x128xf32>
    %21 = arith.mulf %16, %20 : vector<4x16x128xf32>
    %c0_6 = arith.constant 0 : index
    %c0_7 = arith.constant 0 : index
    %22 = vector.load %arg2[%c0_6, %c0_7] : memref<16x1xf32, #tpu.memory_space<vmem>>, vector<16x1xf32>
    %23 = vector.shape_cast %22 : vector<16x1xf32> to vector<1x16x1xf32>
    %24 = vector.broadcast %23 : vector<1x16x1xf32> to vector<4x16x128xf32>
    %25 = arith.mulf %21, %24 : vector<4x16x128xf32>
    %c0_8 = arith.constant 0 : index
    %c0_9 = arith.constant 0 : index
    %26 = vector.load %arg3[%c0_8, %c0_9] : memref<16x1xf32, #tpu.memory_space<vmem>>, vector<16x1xf32>
    %27 = vector.shape_cast %26 : vector<16x1xf32> to vector<1x16x1xf32>
    %28 = vector.broadcast %27 : vector<1x16x1xf32> to vector<4x16x128xf32>
    %29 = arith.addf %25, %28 : vector<4x16x128xf32>
    %cst_10 = arith.constant 0.000000e+00 : f32
    %30 = vector.broadcast %cst_10 : f32 to vector<4x16x128xf32>
    %31 = arith.maximumf %29, %30 : vector<4x16x128xf32>
    %32 = vector.shape_cast %31 : vector<4x16x128xf32> to vector<64x128xf32>
    %c1_i32 = arith.constant 1 : i32
    %33 = tpu.dynamic_rotate %32 by %c1_i32 dim 1 : vector<64x128xf32>, i32 -> vector<64x128xf32>
    %c1_i32_11 = arith.constant 1 : i32
    %34 = vector.broadcast %c1_i32_11 : i32 to vector<64x128xi32>
    %35 = arith.cmpi sge, %0, %34 : vector<64x128xi32>
    %cst_12 = arith.constant 0.000000e+00 : f32
    %36 = vector.broadcast %cst_12 : f32 to vector<64x128xf32>
    %37 = arith.select %35, %33, %36 : vector<64x128xi1>, vector<64x128xf32>
    %c127_i32 = arith.constant 127 : i32
    %38 = tpu.dynamic_rotate %32 by %c127_i32 dim 1 : vector<64x128xf32>, i32 -> vector<64x128xf32>
    %c127_i32_13 = arith.constant 127 : i32
    %39 = vector.broadcast %c127_i32_13 : i32 to vector<64x128xi32>
    %40 = arith.cmpi slt, %0, %39 : vector<64x128xi32>
    %cst_14 = arith.constant 0.000000e+00 : f32
    %41 = vector.broadcast %cst_14 : f32 to vector<64x128xf32>
    %42 = arith.select %40, %38, %41 : vector<64x128xi1>, vector<64x128xf32>
    %43 = tpu.concatenate %37, %32, %42 in 0 : vector<64x128xf32>, vector<64x128xf32>, vector<64x128xf32> -> vector<192x128xf32>
    %c0_15 = arith.constant 0 : index
    %c0_16 = arith.constant 0 : index
    %44 = vector.load %arg6[%c0_15, %c0_16] : memref<64x192xf32, #tpu.memory_space<vmem>>, vector<64x192xf32>
    %cst_17 = arith.constant dense<0.000000e+00> : vector<64x128xf32>
    %45 = tpu.matmul %44, %43, %cst_17 {dimension_numbers = #tpu.dot_dimension_numbers<[1], [0], [0], [1], [0, 0, 1, 1], [], []>, precision = #tpu.contract_precision<fp32>} : vector<64x192xf32>, vector<192x128xf32>, vector<64x128xf32> -> vector<64x128xf32>
    %c0_18 = arith.constant 0 : index
    %c0_19 = arith.constant 0 : index
    %46 = vector.load %arg7[%c0_18, %c0_19] : memref<64x1xf32, #tpu.memory_space<vmem>>, vector<64x1xf32>
    %47 = vector.broadcast %46 : vector<64x1xf32> to vector<64x128xf32>
    %48 = arith.addf %45, %47 : vector<64x128xf32>
    %49 = vector.shape_cast %48 : vector<64x128xf32> to vector<4x16x128xf32>
    %cst_20 = arith.constant dense<0.000000e+00> : vector<4x128xf32>
    %50 = vector.multi_reduction <add>, %49, %cst_20 [1] : vector<4x16x128xf32> to vector<4x128xf32>
    %51 = vector.shape_cast %50 : vector<4x128xf32> to vector<4x1x128xf32>
    %cst_21 = arith.constant 1.600000e+01 : f32
    %52 = vector.broadcast %cst_21 : f32 to vector<4x1x128xf32>
    %53 = arith.divf %51, %52 : vector<4x1x128xf32>
    %54 = vector.broadcast %53 : vector<4x1x128xf32> to vector<4x16x128xf32>
    %55 = arith.subf %49, %54 : vector<4x16x128xf32>
    %56 = arith.mulf %55, %55 : vector<4x16x128xf32>
    %cst_22 = arith.constant dense<0.000000e+00> : vector<4x128xf32>
    %57 = vector.multi_reduction <add>, %56, %cst_22 [1] : vector<4x16x128xf32> to vector<4x128xf32>
    %58 = vector.shape_cast %57 : vector<4x128xf32> to vector<4x1x128xf32>
    %cst_23 = arith.constant 1.600000e+01 : f32
    %59 = vector.broadcast %cst_23 : f32 to vector<4x1x128xf32>
    %60 = arith.divf %58, %59 : vector<4x1x128xf32>
    %61 = vector.broadcast %53 : vector<4x1x128xf32> to vector<4x16x128xf32>
    %62 = arith.subf %49, %61 : vector<4x16x128xf32>
    %cst_24 = arith.constant 9.99999974E-6 : f32
    %63 = vector.broadcast %cst_24 : f32 to vector<4x1x128xf32>
    %64 = arith.addf %60, %63 : vector<4x1x128xf32>
    %65 = math.rsqrt %64 : vector<4x1x128xf32>
    %66 = vector.broadcast %65 : vector<4x1x128xf32> to vector<4x16x128xf32>
    %67 = arith.mulf %62, %66 : vector<4x16x128xf32>
    %c0_25 = arith.constant 0 : index
    %c0_26 = arith.constant 0 : index
    %68 = vector.load %arg4[%c0_25, %c0_26] : memref<16x1xf32, #tpu.memory_space<vmem>>, vector<16x1xf32>
    %69 = vector.shape_cast %68 : vector<16x1xf32> to vector<1x16x1xf32>
    %70 = vector.broadcast %69 : vector<1x16x1xf32> to vector<4x16x128xf32>
    %71 = arith.mulf %67, %70 : vector<4x16x128xf32>
    %c0_27 = arith.constant 0 : index
    %c0_28 = arith.constant 0 : index
    %72 = vector.load %arg5[%c0_27, %c0_28] : memref<16x1xf32, #tpu.memory_space<vmem>>, vector<16x1xf32>
    %73 = vector.shape_cast %72 : vector<16x1xf32> to vector<1x16x1xf32>
    %74 = vector.broadcast %73 : vector<1x16x1xf32> to vector<4x16x128xf32>
    %75 = arith.addf %71, %74 : vector<4x16x128xf32>
    %cst_29 = arith.constant 0.000000e+00 : f32
    %76 = vector.broadcast %cst_29 : f32 to vector<4x16x128xf32>
    %77 = arith.maximumf %75, %76 : vector<4x16x128xf32>
    %78 = vector.shape_cast %77 : vector<4x16x128xf32> to vector<64x128xf32>
    %c1_i32_30 = arith.constant 1 : i32
    %79 = tpu.dynamic_rotate %78 by %c1_i32_30 dim 1 : vector<64x128xf32>, i32 -> vector<64x128xf32>
    %c1_i32_31 = arith.constant 1 : i32
    %80 = vector.broadcast %c1_i32_31 : i32 to vector<64x128xi32>
    %81 = arith.cmpi sge, %0, %80 : vector<64x128xi32>
    %cst_32 = arith.constant 0.000000e+00 : f32
    %82 = vector.broadcast %cst_32 : f32 to vector<64x128xf32>
    %83 = arith.select %81, %79, %82 : vector<64x128xi1>, vector<64x128xf32>
    %c127_i32_33 = arith.constant 127 : i32
    %84 = tpu.dynamic_rotate %78 by %c127_i32_33 dim 1 : vector<64x128xf32>, i32 -> vector<64x128xf32>
    %c127_i32_34 = arith.constant 127 : i32
    %85 = vector.broadcast %c127_i32_34 : i32 to vector<64x128xi32>
    %86 = arith.cmpi slt, %0, %85 : vector<64x128xi32>
    %cst_35 = arith.constant 0.000000e+00 : f32
    %87 = vector.broadcast %cst_35 : f32 to vector<64x128xf32>
    %88 = arith.select %86, %84, %87 : vector<64x128xi1>, vector<64x128xf32>
    %89 = tpu.concatenate %83, %78, %88 in 0 : vector<64x128xf32>, vector<64x128xf32>, vector<64x128xf32> -> vector<192x128xf32>
    %c0_36 = arith.constant 0 : index
    %c0_37 = arith.constant 0 : index
    %90 = vector.load %arg8[%c0_36, %c0_37] : memref<64x192xf32, #tpu.memory_space<vmem>>, vector<64x192xf32>
    %cst_38 = arith.constant dense<0.000000e+00> : vector<64x128xf32>
    %91 = tpu.matmul %90, %89, %cst_38 {dimension_numbers = #tpu.dot_dimension_numbers<[1], [0], [0], [1], [0, 0, 1, 1], [], []>, precision = #tpu.contract_precision<fp32>} : vector<64x192xf32>, vector<192x128xf32>, vector<64x128xf32> -> vector<64x128xf32>
    %c0_39 = arith.constant 0 : index
    %c0_40 = arith.constant 0 : index
    %92 = vector.load %arg9[%c0_39, %c0_40] : memref<64x1xf32, #tpu.memory_space<vmem>>, vector<64x1xf32>
    %93 = vector.broadcast %92 : vector<64x1xf32> to vector<64x128xf32>
    %94 = arith.addf %91, %93 : vector<64x128xf32>
    %95 = arith.addf %94, %2 : vector<64x128xf32>
    %c0_41 = arith.constant 0 : index
    %c0_42 = arith.constant 0 : index
    %c0_43 = arith.constant 0 : index
    %96 = vector.load %arg10[%c0_41, %c0_42, %c0_43] : memref<1x64x128xf32, #tpu.memory_space<vmem>>, vector<1x64x128xf32>
    %97 = vector.shape_cast %96 : vector<1x64x128xf32> to vector<64x128xf32>
    %98 = vector.shape_cast %95 : vector<64x128xf32> to vector<1x64x128xf32>
    tpu.vector_store %arg10[%c0_41, %c0_42, %c0_43], %98 {strides = array<i32>} : memref<1x64x128xf32, #tpu.memory_space<vmem>>, vector<1x64x128xf32>,
    return
  }
  func.func @transform_0(%arg0: i32) -> (i32, i32, i32) {
    %c0_i32 = arith.constant 0 : i32
    %c0_i32_0 = arith.constant 0 : i32
    %c0_i32_1 = arith.constant 0 : i32
    return %arg0, %c0_i32, %c0_i32_0 : i32, i32, i32
  }
  func.func @transform_1(%arg0: i32) -> (i32, i32) {
    %c0_i32 = arith.constant 0 : i32
    %c0_i32_0 = arith.constant 0 : i32
    %c0_i32_1 = arith.constant 0 : i32
    return %c0_i32, %c0_i32_0 : i32, i32
  }
  func.func @transform_2(%arg0: i32) -> (i32, i32) {
    %c0_i32 = arith.constant 0 : i32
    %c0_i32_0 = arith.constant 0 : i32
    %c0_i32_1 = arith.constant 0 : i32
    return %c0_i32, %c0_i32_0 : i32, i32
  }
  func.func @transform_3(%arg0: i32) -> (i32, i32) {
    %c0_i32 = arith.constant 0 : i32
    %c0_i32_0 = arith.constant 0 : i32
    %c0_i32_1 = arith.constant 0 : i32
    return %c0_i32, %c0_i32_0 : i32, i32
  }
  func.func @transform_4(%arg0: i32) -> (i32, i32) {
    %c0_i32 = arith.constant 0 : i32
    %c0_i32_0 = arith.constant 0 : i32
    %c0_i32_1 = arith.constant 0 : i32
    return %c0_i32, %c0_i32_0 : i32, i32
  }
  func.func @transform_5(%arg0: i32) -> (i32, i32) {
    %c0_i32 = arith.constant 0 : i32
    %c0_i32_0 = arith.constant 0 : i32
    %c0_i32_1 = arith.constant 0 : i32
    return %c0_i32, %c0_i32_0 : i32, i32
  }
  func.func @transform_6(%arg0: i32) -> (i32, i32) {
    %c0_i32 = arith.constant 0 : i32
    %c0_i32_0 = arith.constant 0 : i32
    %c0_i32_1 = arith.constant 0 : i32
    return %c0_i32, %c0_i32_0 : i32, i32
  }
  func.func @transform_7(%arg0: i32) -> (i32, i32) {
    %c0_i32 = arith.constant 0 : i32
    %c0_i32_0 = arith.constant 0 : i32
    %c0_i32_1 = arith.constant 0 : i32
    return %c0_i32, %c0_i32_0 : i32, i32
  }
  func.func @transform_8(%arg0: i32) -> (i32, i32) {
    %c0_i32 = arith.constant 0 : i32
    %c0_i32_0 = arith.constant 0 : i32
    %c0_i32_1 = arith.constant 0 : i32
    return %c0_i32, %c0_i32_0 : i32, i32
  }
  func.func @transform_9(%arg0: i32) -> (i32, i32, i32) {
    %c0_i32 = arith.constant 0 : i32
    %c0_i32_0 = arith.constant 0 : i32
    %c0_i32_1 = arith.constant 0 : i32
    return %arg0, %c0_i32, %c0_i32_0 : i32, i32, i32
  }
}

</mosaic_0001>

<llo_original>
// kernel: tpu_custom_call.1
$region0: #{tpu_custom_call.1}
  #allocation0 [shape = 'u32[]', space=smem, size = 0x4, offset = 0x4, fixed_abs, tag = 'smem constant byte address 0x4 - core index']
  #allocation1 [shape = 'u32[144,128]{1,0:T(1,128)}', space=vmem, size = 0x12000, scoped, tag = 'internal scratch']
  %s0 = inlined_call_operand.vmem [shape: f32[2,64,128], index: 0, kind: input, shape index: {}]
  %s1 = inlined_call_operand.vmem [shape: f32[16,1], index: 1, kind: input, shape index: {}]
  %s2 = inlined_call_operand.vmem [shape: f32[16,1], index: 2, kind: input, shape index: {}]
  %s3 = inlined_call_operand.vmem [shape: f32[16,1], index: 3, kind: input, shape index: {}]
  %s4 = inlined_call_operand.vmem [shape: f32[16,1], index: 4, kind: input, shape index: {}]
  %s5 = inlined_call_operand.hbm [shape: f32[64,192], index: 5, kind: input, shape index: {}]
  %s6 = inlined_call_operand.vmem [shape: f32[64,1], index: 6, kind: input, shape index: {}]
  %s7 = inlined_call_operand.hbm [shape: f32[64,192], index: 7, kind: input, shape index: {}]
  %s8 = inlined_call_operand.vmem [shape: f32[64,1], index: 8, kind: input, shape index: {}]
  %s9 = inlined_call_operand.hbm [shape: f32[2,64,128], index: 9, kind: output, shape index: {}]
  %s10 = sld [smem:[#allocation0]]
  $region77: #{tpu_custom_call.1} parent=0
    _
  %s12 = ssub.s32 1, %s10
  %s13 = scalar_select 0, %s12, %s10
  $region1: #{tpu_custom_call.1} parent=0
    #allocation2 [shape = 'u8[65536]{0}', space=vmem, size = 0x10000, scoped, tag = 'input window, operand 5, single buffered']
    #allocation3 [shape = 's32[2]{0}', space=sflag, size = 0x8, scoped, tag = 'scoped memory for tpu_custom_call.1']
    #allocation4 [shape = 's32[2]{0}', space=sflag, size = 0x8, scoped, tag = 'scoped memory for tpu_custom_call.1']
    #allocation5 [shape = 'u8[65536]{0}', space=vmem, size = 0x10000, scoped, tag = 'input window, operand 7, single buffered']
    #allocation6 [shape = 's32[1]{0}', space=sflag, size = 0x4, scoped, tag = 'scoped memory for tpu_custom_call.1']
    #allocation7 [shape = 'u8[65536]{0}', space=vmem, size = 0x10000, scoped, tag = 'output window, operand 0']
    %14 = vsyncpa [#allocation3], 0
    %15 = vsyncpa [#allocation6], 0
    %16 = vsyncpa [#allocation4], 0
    %s17 = scalar_lea.sflag [#allocation4], 1
    %18 = vsyncpa %s17, 0
    loop: start=0, step=1, limit=4
    $region2: #{tpu_custom_call.1} parent=1 // loop_pre_header
      _
    $region3: #{tpu_custom_call.1} parent=1 // loop_header
      %s20 = sphi 0, %s24
      %p21 = scmp.ge.s32.totalorder %s20, 4
      %s30 = sphi 0, %s32
      %s33 = sphi 0, %s30
      %s34 = sphi 0, %s33
      %s50 = sphi 0, %s34
      %s54 = sphi 0, %s54
      %s56 = sphi 0, %s54
      %s57 = sphi 0, %s56
      %s71 = sphi 0, %s57
      %s75 = sphi 0, %s75
      %s77 = sphi 0, %s75
      %s78 = sphi 0, %s77
      %s92 = sphi 0, %s78
      %s96 = sphi 0, %s96
      %s98 = sphi 0, %s96
      %s99 = sphi 0, %s98
      %s113 = sphi 0, %s99
      %s117 = sphi 0, %s117
      %s119 = sphi 0, %s117
      %s120 = sphi 0, %s119
      %s134 = sphi 0, %s120
      %s138 = sphi 0, %s138
      %s140 = sphi 0, %s138
      %s141 = sphi 0, %s140
      %s155 = sphi 0, %s141
      %s159 = sphi 0, %s159
      %s161 = sphi 0, %s159
      %s162 = sphi 0, %s161
      %s176 = sphi 0, %s162
      %s180 = sphi 0, %s180
      %s182 = sphi 0, %s180
      %s183 = sphi 0, %s182
      %s197 = sphi 0, %s183
      %s201 = sphi 0, %s201
      %s203 = sphi 0, %s201
      %s204 = sphi 0, %s203
      %s218 = sphi 0, %s204
      %s224 = sphi 0, %s226
      %s227 = sphi 0, %s224
      %s228 = sphi 0, %s227
      %s244 = sphi 0, %s228
    $region4: #{tpu_custom_call.1} parent=1 // loop_header_branch
      %23 = sbr.rel (%p21) target = $region8
    $region5: #{tpu_custom_call.1} parent=1 // loop_body
      %s25 = ssub.s32 %s20, 1
      %s26 = ssub.s32 %s20, 2
      %s27 = sadd.s32 %s20, 1
      %s28 = ssub.s32 %s20, %s27
      %p29 = scmp.eq.s32.totalorder %s28, 0
      %s31 = sadd.s32 %s30, 1
      %s32 = scalar_select %p29, %s30, %s31
      %p35 = pneg %p29
      %p36 = scmp.eq.s32.totalorder %s20, 1
      %p37 = por %p35, %p36
      %p38 = scmp.ne.s32.totalorder %s30, %s33
      %p39 = scmp.eq.s32.totalorder %s20, 0
      %p40 = por %p38, %p39
      %p41 = scmp.ne.s32.totalorder %s30, %s33
      %p42 = scmp.eq.s32.totalorder %s25, 1
      %p43 = por %p41, %p42
      %p44 = scmp.ne.s32.totalorder %s33, %s34
      %p45 = scmp.eq.s32.totalorder %s25, 0
      %p46 = por %p44, %p45
      %p47 = scmp.ne.s32.totalorder %s33, %s34
      %p48 = scmp.eq.s32.totalorder %s26, 1
      %p49 = por %p47, %p48
      %p51 = scmp.ne.s32.totalorder %s34, %s50
      %p52 = scmp.eq.s32.totalorder %s26, 0
      %p53 = por %p51, %p52
      %s55 = sadd.s32 %s54, 1
      %p58 = scmp.eq.s32.totalorder %s20, 1
      %p59 = scmp.ne.s32.totalorder %s54, %s56
      %p60 = scmp.eq.s32.totalorder %s20, 0
      %p61 = por %p59, %p60
      %p62 = scmp.ne.s32.totalorder %s54, %s56
      %p63 = scmp.eq.s32.totalorder %s25, 1
      %p64 = por %p62, %p63
      %p65 = scmp.ne.s32.totalorder %s56, %s57
      %p66 = scmp.eq.s32.totalorder %s25, 0
      %p67 = por %p65, %p66
      %p68 = scmp.ne.s32.totalorder %s56, %s57
      %p69 = scmp.eq.s32.totalorder %s26, 1
      %p70 = por %p68, %p69
      %p72 = scmp.ne.s32.totalorder %s57, %s71
      %p73 = scmp.eq.s32.totalorder %s26, 0
      %p74 = por %p72, %p73
      %s76 = sadd.s32 %s75, 1
      %p79 = scmp.eq.s32.totalorder %s20, 1
      %p80 = scmp.ne.s32.totalorder %s75, %s77
      %p81 = scmp.eq.s32.totalorder %s20, 0
      %p82 = por %p80, %p81
      %p83 = scmp.ne.s32.totalorder %s75, %s77
      %p84 = scmp.eq.s32.totalorder %s25, 1
      %p85 = por %p83, %p84
      %p86 = scmp.ne.s32.totalorder %s77, %s78
      %p87 = scmp.eq.s32.totalorder %s25, 0
      %p88 = por %p86, %p87
      %p89 = scmp.ne.s32.totalorder %s77, %s78
      %p90 = scmp.eq.s32.totalorder %s26, 1
      %p91 = por %p89, %p90
      %p93 = scmp.ne.s32.totalorder %s78, %s92
      %p94 = scmp.eq.s32.totalorder %s26, 0
      %p95 = por %p93, %p94
      %s97 = sadd.s32 %s96, 1
      %p100 = scmp.eq.s32.totalorder %s20, 1
      %p101 = scmp.ne.s32.totalorder %s96, %s98
      %p102 = scmp.eq.s32.totalorder %s20, 0
      %p103 = por %p101, %p102
      %p104 = scmp.ne.s32.totalorder %s96, %s98
      %p105 = scmp.eq.s32.totalorder %s25, 1
      %p106 = por %p104, %p105
      %p107 = scmp.ne.s32.totalorder %s98, %s99
      %p108 = scmp.eq.s32.totalorder %s25, 0
      %p109 = por %p107, %p108
      %p110 = scmp.ne.s32.totalorder %s98, %s99
      %p111 = scmp.eq.s32.totalorder %s26, 1
      %p112 = por %p110, %p111
      %p114 = scmp.ne.s32.totalorder %s99, %s113
      %p115 = scmp.eq.s32.totalorder %s26, 0
      %p116 = por %p114, %p115
      %s118 = sadd.s32 %s117, 1
      %p121 = scmp.eq.s32.totalorder %s20, 1
      %p122 = scmp.ne.s32.totalorder %s117, %s119
      %p123 = scmp.eq.s32.totalorder %s20, 0
      %p124 = por %p122, %p123
      %p125 = scmp.ne.s32.totalorder %s117, %s119
      %p126 = scmp.eq.s32.totalorder %s25, 1
      %p127 = por %p125, %p126
      %p128 = scmp.ne.s32.totalorder %s119, %s120
      %p129 = scmp.eq.s32.totalorder %s25, 0
      %p130 = por %p128, %p129
      %p131 = scmp.ne.s32.totalorder %s119, %s120
      %p132 = scmp.eq.s32.totalorder %s26, 1
      %p133 = por %p131, %p132
      %p135 = scmp.ne.s32.totalorder %s120, %s134
      %p136 = scmp.eq.s32.totalorder %s26, 0
      %p137 = por %p135, %p136
      %s139 = sadd.s32 %s138, 1
      %p142 = scmp.eq.s32.totalorder %s20, 1
      %p143 = scmp.ne.s32.totalorder %s138, %s140
      %p144 = scmp.eq.s32.totalorder %s20, 0
      %p145 = por %p143, %p144
      %p146 = scmp.ne.s32.totalorder %s138, %s140
      %p147 = scmp.eq.s32.totalorder %s25, 1
      %p148 = por %p146, %p147
      %p149 = scmp.ne.s32.totalorder %s140, %s141
      %p150 = scmp.eq.s32.totalorder %s25, 0
      %p151 = por %p149, %p150
      %p152 = scmp.ne.s32.totalorder %s140, %s141
      %p153 = scmp.eq.s32.totalorder %s26, 1
      %p154 = por %p152, %p153
      %p156 = scmp.ne.s32.totalorder %s141, %s155
      %p157 = scmp.eq.s32.totalorder %s26, 0
      %p158 = por %p156, %p157
      %s160 = sadd.s32 %s159, 1
      %p163 = scmp.eq.s32.totalorder %s20, 1
      %p164 = scmp.ne.s32.totalorder %s159, %s161
      %p165 = scmp.eq.s32.totalorder %s20, 0
      %p166 = por %p164, %p165
      %p167 = scmp.ne.s32.totalorder %s159, %s161
      %p168 = scmp.eq.s32.totalorder %s25, 1
      %p169 = por %p167, %p168
      %p170 = scmp.ne.s32.totalorder %s161, %s162
      %p171 = scmp.eq.s32.totalorder %s25, 0
      %p172 = por %p170, %p171
      %p173 = scmp.ne.s32.totalorder %s161, %s162
      %p174 = scmp.eq.s32.totalorder %s26, 1
      %p175 = por %p173, %p174
      %p177 = scmp.ne.s32.totalorder %s162, %s176
      %p178 = scmp.eq.s32.totalorder %s26, 0
      %p179 = por %p177, %p178
      %s181 = sadd.s32 %s180, 1
      %p184 = scmp.eq.s32.totalorder %s20, 1
      %p185 = scmp.ne.s32.totalorder %s180, %s182
      %p186 = scmp.eq.s32.totalorder %s20, 0
      %p187 = por %p185, %p186
      %p188 = scmp.ne.s32.totalorder %s180, %s182
      %p189 = scmp.eq.s32.totalorder %s25, 1
      %p190 = por %p188, %p189
      %p191 = scmp.ne.s32.totalorder %s182, %s183
      %p192 = scmp.eq.s32.totalorder %s25, 0
      %p193 = por %p191, %p192
      %p194 = scmp.ne.s32.totalorder %s182, %s183
      %p195 = scmp.eq.s32.totalorder %s26, 1
      %p196 = por %p194, %p195
      %p198 = scmp.ne.s32.totalorder %s183, %s197
      %p199 = scmp.eq.s32.totalorder %s26, 0
      %p200 = por %p198, %p199
      %s202 = sadd.s32 %s201, 1
      %p205 = scmp.eq.s32.totalorder %s20, 1
      %p206 = scmp.ne.s32.totalorder %s201, %s203
      %p207 = scmp.eq.s32.totalorder %s20, 0
      %p208 = por %p206, %p207
      %p209 = scmp.ne.s32.totalorder %s201, %s203
      %p210 = scmp.eq.s32.totalorder %s25, 1
      %p211 = por %p209, %p210
      %p212 = scmp.ne.s32.totalorder %s203, %s204
      %p213 = scmp.eq.s32.totalorder %s25, 0
      %p214 = por %p212, %p213
      %p215 = scmp.ne.s32.totalorder %s203, %s204
      %p216 = scmp.eq.s32.totalorder %s26, 1
      %p217 = por %p215, %p216
      %p219 = scmp.ne.s32.totalorder %s204, %s218
      %p220 = scmp.eq.s32.totalorder %s26, 0
      %p221 = por %p219, %p220
      %s222 = ssub.s32 %s20, %s27
      %p223 = scmp.eq.s32.totalorder %s222, 0
      %s225 = sadd.s32 %s224, 1
      %s226 = scalar_select %p223, %s224, %s225
      %p229 = pneg %p223
      %p230 = scmp.eq.s32.totalorder %s20, 1
      %p231 = por %p229, %p230
      %p232 = scmp.ne.s32.totalorder %s224, %s227
      %p233 = scmp.eq.s32.totalorder %s20, 0
      %p234 = por %p232, %p233
      %p235 = scmp.ne.s32.totalorder %s224, %s227
      %p236 = scmp.eq.s32.totalorder %s25, 1
      %p237 = por %p235, %p236
      %p238 = scmp.ne.s32.totalorder %s227, %s228
      %p239 = scmp.eq.s32.totalorder %s25, 0
      %p240 = por %p238, %p239
      %p241 = scmp.ne.s32.totalorder %s227, %s228
      %p242 = scmp.eq.s32.totalorder %s26, 1
      %p243 = por %p241, %p242
      %p245 = scmp.ne.s32.totalorder %s228, %s244
      %p246 = scmp.eq.s32.totalorder %s26, 0
      %p247 = por %p245, %p246
      %p248 = scmp.le.s32.totalorder 1, %s20
      %p249 = scmp.lt.s32.totalorder %s20, 3
      %p250 = pnand %p248, %p249
      %p251 = pneg %p250
      // Predicated region
      $region9: #{tpu_custom_call.1} parent=5 // pred_check
        _
      $region10: #{tpu_custom_call.1} parent=5 // pred_check_branch
        %253 = sbr.rel (%p250) target = $region12
      $region11: #{tpu_custom_call.1} parent=5 // pred_region
        %s254 = ssub.s32 %s20, 1
        // Predicated region
        $region13: #{tpu_custom_call.1} parent=11 // pred_check
          %p255 = pneg %p67
        $region14: #{tpu_custom_call.1} parent=11 // pred_check_branch
          %257 = sbr.rel (%p255) target = $region16
        $region15: #{tpu_custom_call.1} parent=11 // pred_region
          _
        $region16: #{tpu_custom_call.1} parent=11 // pred_fallthru
          _
        // Predicated region
        $region17: #{tpu_custom_call.1} parent=11 // pred_check
          %p258 = pneg %p88
        $region18: #{tpu_custom_call.1} parent=11 // pred_check_branch
          %260 = sbr.rel (%p258) target = $region20
        $region19: #{tpu_custom_call.1} parent=11 // pred_region
          _
        $region20: #{tpu_custom_call.1} parent=11 // pred_fallthru
          _
        // Predicated region
        $region21: #{tpu_custom_call.1} parent=11 // pred_check
          %p261 = pneg %p109
        $region22: #{tpu_custom_call.1} parent=11 // pred_check_branch
          %263 = sbr.rel (%p261) target = $region24
        $region23: #{tpu_custom_call.1} parent=11 // pred_region
          _
        $region24: #{tpu_custom_call.1} parent=11 // pred_fallthru
          _
        // Predicated region
        $region25: #{tpu_custom_call.1} parent=11 // pred_check
          %p264 = pneg %p130
        $region26: #{tpu_custom_call.1} parent=11 // pred_check_branch
          %266 = sbr.rel (%p264) target = $region28
        $region27: #{tpu_custom_call.1} parent=11 // pred_region
          _
        $region28: #{tpu_custom_call.1} parent=11 // pred_fallthru
          _
        // Predicated region
        $region29: #{tpu_custom_call.1} parent=11 // pred_check
          %p267 = pneg %p151
        $region30: #{tpu_custom_call.1} parent=11 // pred_check_branch
          %269 = sbr.rel (%p267) target = $region32
        $region31: #{tpu_custom_call.1} parent=11 // pred_region
          %s271 = ssub.s32 2048, 2048
          %272 = vsyncadd [#allocation3], %s271
          %s273 = sshll.u32 [#allocation2], 4
          %s274 = int_to_ptr.vmem [resolvable:$true] %s273
          %279 = dma.hbm_to_vmem [thread:$0]  %s5, 2048, %s274, [#allocation3], 256, 256, 16
        $region32: #{tpu_custom_call.1} parent=11 // pred_fallthru
          _
        // Predicated region
        $region33: #{tpu_custom_call.1} parent=11 // pred_check
          %p280 = pneg %p172
        $region34: #{tpu_custom_call.1} parent=11 // pred_check_branch
          %282 = sbr.rel (%p280) target = $region36
        $region35: #{tpu_custom_call.1} parent=11 // pred_region
          _
        $region36: #{tpu_custom_call.1} parent=11 // pred_fallthru
          _
        // Predicated region
        $region37: #{tpu_custom_call.1} parent=11 // pred_check
          %p283 = pneg %p193
        $region38: #{tpu_custom_call.1} parent=11 // pred_check_branch
          %285 = sbr.rel (%p283) target = $region40
        $region39: #{tpu_custom_call.1} parent=11 // pred_region
          %s287 = ssub.s32 2048, 2048
          %288 = vsyncadd [#allocation6], %s287
          %s289 = sshll.u32 [#allocation5], 4
          %s290 = int_to_ptr.vmem [resolvable:$true] %s289
          %295 = dma.hbm_to_vmem [thread:$0]  %s7, 2048, %s290, [#allocation6], 256, 256, 16
        $region40: #{tpu_custom_call.1} parent=11 // pred_fallthru
          _
        // Predicated region
        $region41: #{tpu_custom_call.1} parent=11 // pred_check
          %p296 = pneg %p214
        $region42: #{tpu_custom_call.1} parent=11 // pred_check_branch
          %298 = sbr.rel (%p296) target = $region44
        $region43: #{tpu_custom_call.1} parent=11 // pred_region
          _
        $region44: #{tpu_custom_call.1} parent=11 // pred_fallthru
          _
      $region12: #{tpu_custom_call.1} parent=5 // pred_fallthru
        _
      %p299 = scmp.lt.s32.totalorder %s20, 2
      // Predicated region
      $region45: #{tpu_custom_call.1} parent=5 // pred_check
        %p300 = pneg %p299
      $region46: #{tpu_custom_call.1} parent=5 // pred_check_branch
        %302 = sbr.rel (%p300) target = $region48
      $region47: #{tpu_custom_call.1} parent=5 // pred_region
        // Predicated region
        $region49: #{tpu_custom_call.1} parent=47 // pred_check
          %p303 = pneg %p40
        $region50: #{tpu_custom_call.1} parent=47 // pred_check_branch
          %305 = sbr.rel (%p303) target = $region52
        $region51: #{tpu_custom_call.1} parent=47 // pred_region
          %p306 = scmp.lt.s32.totalorder %s20, 1
          %s307 = scalar_select %p306, %s20, 1
          %s308 = smul.addr %s307, 8
          %s309 = smul.addr %s308, 8
          %s310 = scalar_lea.vmem %s0, %s309
        $region52: #{tpu_custom_call.1} parent=47 // pred_fallthru
          _
      $region48: #{tpu_custom_call.1} parent=5 // pred_fallthru
        _
      %p311 = scmp.le.s32.totalorder 1, %s20
      %p312 = scmp.lt.s32.totalorder %s20, 3
      %p313 = pnand %p311, %p312
      %p314 = pneg %p313
      // Predicated region
      $region53: #{tpu_custom_call.1} parent=5 // pred_check
        _
      $region54: #{tpu_custom_call.1} parent=5 // pred_check_branch
        %316 = sbr.rel (%p313) target = $region56
      $region55: #{tpu_custom_call.1} parent=5 // pred_region
        %s317 = ssub.s32 %s20, 1
        // Predicated region
        $region57: #{tpu_custom_call.1} parent=55 // pred_check
          %p318 = pneg %p151
        $region58: #{tpu_custom_call.1} parent=55 // pred_check_branch
          %320 = sbr.rel (%p318) target = $region60
        $region59: #{tpu_custom_call.1} parent=55 // pred_region
          %321 = dma.done [#allocation3], 2048
        $region60: #{tpu_custom_call.1} parent=55 // pred_fallthru
          _
        // Predicated region
        $region61: #{tpu_custom_call.1} parent=55 // pred_check
          %p322 = pneg %p193
        $region62: #{tpu_custom_call.1} parent=55 // pred_check_branch
          %324 = sbr.rel (%p322) target = $region64
        $region63: #{tpu_custom_call.1} parent=55 // pred_region
          %325 = dma.done [#allocation6], 2048
        $region64: #{tpu_custom_call.1} parent=55 // pred_fallthru
          _
        %p326 = scmp.lt.s32.totalorder %s25, 1
        %s327 = scalar_select %p326, %s25, 1
        %s328 = smul.addr %s327, 8
        %s329 = smul.addr %s328, 8
        %s330 = scalar_lea.vmem %s0, %s329
        %p331 = pneg %p46
        %p332 = pneg %p43
        %p333 = pneg %p67
        %p334 = pneg %p64
        %p335 = pneg %p88
        %p336 = pneg %p85
        %p337 = pneg %p109
        %p338 = pneg %p106
        %p339 = pneg %p130
        %p340 = pneg %p127
        %p341 = pneg %p151
        %p342 = pneg %p148
        %p343 = pneg %p172
        %p344 = pneg %p169
        %p345 = pneg %p193
        %p346 = pneg %p190
        %p347 = pneg %p214
        %p348 = pneg %p211
        %p349 = pneg %p240
        %p350 = pneg %p237
        %s351 = sand.u32 %s227, 1
        %s352 = scalar_lea.sflag [#allocation4], %s351
        %s353 = sand.u32 %s227, 1
        %s354 = smul.addr %s353, 64
        %s355 = scalar_lea.vmem [#allocation7], %s354
        %p356 = scmp.lt.s32.totalorder %s25, 1
        %s357 = scalar_select %p356, %s25, 1
        %s358 = smul.addr %s357, 8
        %s359 = smul.addr %s358, 8
        %s360 = scalar_lea.vmem %s0, %s359
        %v361 = vlaneseq
        %v362 = vand.u32 %v361, 127
        %v363 = vld [vmem:[%s360] sm:$0xff]
        %v364 = vld [vmem:[%s360 + $0x8] sm:$0xff]
        %v365 = vld [vmem:[%s360 + $0x10] sm:$0xff]
        %v366 = vld [vmem:[%s360 + $0x18] sm:$0xff]
        %v367 = vld [vmem:[%s360 + $0x20] sm:$0xff]
        %v368 = vld [vmem:[%s360 + $0x28] sm:$0xff]
        %v369 = vld [vmem:[%s360 + $0x30] sm:$0xff]
        %v370 = vld [vmem:[%s360 + $0x38] sm:$0xff]
        %v371 = vadd.f32 %v363, %v364
        %v372 = vrot.slane %v371, 4
        %v373 = vadd.f32 %v371, %v372
        %v374 = vrot.slane %v373, 2
        %v375 = vadd.f32 %v373, %v374
        %v376 = vrot.slane %v375, 1
        %v377 = vadd.f32 %v375, %v376
        %v378 = vadd.f32 %v365, %v366
        %v379 = vrot.slane %v378, 4
        %v380 = vadd.f32 %v378, %v379
        %v381 = vrot.slane %v380, 2
        %v382 = vadd.f32 %v380, %v381
        %v383 = vrot.slane %v382, 1
        %v384 = vadd.f32 %v382, %v383
        %v385 = vadd.f32 %v367, %v368
        %v386 = vrot.slane %v385, 4
        %v387 = vadd.f32 %v385, %v386
        %v388 = vrot.slane %v387, 2
        %v389 = vadd.f32 %v387, %v388
        %v390 = vrot.slane %v389, 1
        %v391 = vadd.f32 %v389, %v390
        %v392 = vadd.f32 %v369, %v370
        %v393 = vrot.slane %v392, 4
        %v394 = vadd.f32 %v392, %v393
        %v395 = vrot.slane %v394, 2
        %v396 = vadd.f32 %v394, %v395
        %v397 = vrot.slane %v396, 1
        %v398 = vadd.f32 %v396, %v397
        %v399 = vrcp.pop 16.0
        %v400 = vmul.f32 %v377, %v399
        %v401 = vmul.f32 %v384, %v399
        %v402 = vmul.f32 %v391, %v399
        %v403 = vmul.f32 %v398, %v399
        %v404 = vsub.f32 %v363, %v400
        %v405 = vsub.f32 %v364, %v400
        %v406 = vsub.f32 %v365, %v401
        %v407 = vsub.f32 %v366, %v401
        %v408 = vsub.f32 %v367, %v402
        %v409 = vsub.f32 %v368, %v402
        %v410 = vsub.f32 %v369, %v403
        %v411 = vsub.f32 %v370, %v403
        %v412 = vmul.f32 %v404, %v404
        %v413 = vmul.f32 %v405, %v405
        %v414 = vmul.f32 %v406, %v406
        %v415 = vmul.f32 %v407, %v407
        %v416 = vmul.f32 %v408, %v408
        %v417 = vmul.f32 %v409, %v409
        %v418 = vmul.f32 %v410, %v410
        %v419 = vmul.f32 %v411, %v411
        %v420 = vadd.f32 %v412, %v413
        %v421 = vrot.slane %v420, 4
        %v422 = vadd.f32 %v420, %v421
        %v423 = vrot.slane %v422, 2
        %v424 = vadd.f32 %v422, %v423
        %v425 = vrot.slane %v424, 1
        %v426 = vadd.f32 %v424, %v425
        %v427 = vadd.f32 %v414, %v415
        %v428 = vrot.slane %v427, 4
        %v429 = vadd.f32 %v427, %v428
        %v430 = vrot.slane %v429, 2
        %v431 = vadd.f32 %v429, %v430
        %v432 = vrot.slane %v431, 1
        %v433 = vadd.f32 %v431, %v432
        %v434 = vadd.f32 %v416, %v417
        %v435 = vrot.slane %v434, 4
        %v436 = vadd.f32 %v434, %v435
        %v437 = vrot.slane %v436, 2
        %v438 = vadd.f32 %v436, %v437
        %v439 = vrot.slane %v438, 1
        %v440 = vadd.f32 %v438, %v439
        %v441 = vadd.f32 %v418, %v419
        %v442 = vrot.slane %v441, 4
        %v443 = vadd.f32 %v441, %v442
        %v444 = vrot.slane %v443, 2
        %v445 = vadd.f32 %v443, %v444
        %v446 = vrot.slane %v445, 1
        %v447 = vadd.f32 %v445, %v446
        %v448 = vmul.f32 %v426, %v399
        %v449 = vmul.f32 %v433, %v399
        %v450 = vmul.f32 %v440, %v399
        %v451 = vmul.f32 %v447, %v399
        %v452 = vadd.f32 %v448, 1e-05
        %v453 = vadd.f32 %v449, 1e-05
        %v454 = vadd.f32 %v450, 1e-05
        %v455 = vadd.f32 %v451, 1e-05
        %v456 = vrsqrt.pop %v452
        %v457 = vrsqrt.pop %v453
        %v458 = vrsqrt.pop %v454
        %v459 = vrsqrt.pop %v455
        %v460 = vmul.f32 %v404, %v456
        %v461 = vmul.f32 %v405, %v456
        %v462 = vmul.f32 %v406, %v457
        %v463 = vmul.f32 %v407, %v457
        %v464 = vmul.f32 %v408, %v458
        %v465 = vmul.f32 %v409, %v458
        %v466 = vmul.f32 %v410, %v459
        %v467 = vmul.f32 %v411, %v459
        %v468 = vld [vmem:[%s1] sm:$0xff]
        %v469 = vld [vmem:[%s1 + $0x8] sm:$0xff]
        %471 = vset.pattern.permute.xlu0 0
        %472 = vperm.xlu0 %471, %v468
        %v473 = vpop.permute.xlu0 %472
        %476 = vset.pattern.permute.xlu0 0
        %477 = vperm.xlu0 %476, %v469
        %v478 = vpop.permute.xlu0 %477
        %v480 = vmul.f32 %v460, %v473
        %v481 = vmul.f32 %v461, %v478
        %v482 = vmul.f32 %v462, %v473
        %v483 = vmul.f32 %v463, %v478
        %v484 = vmul.f32 %v464, %v473
        %v485 = vmul.f32 %v465, %v478
        %v486 = vmul.f32 %v466, %v473
        %v487 = vmul.f32 %v467, %v478
        %v488 = vld [vmem:[%s2] sm:$0xff]
        %v489 = vld [vmem:[%s2 + $0x8] sm:$0xff]
        %491 = vset.pattern.permute.xlu0 0
        %492 = vperm.xlu0 %491, %v488
        %v493 = vpop.permute.xlu0 %492
        %496 = vset.pattern.permute.xlu0 0
        %497 = vperm.xlu0 %496, %v489
        %v498 = vpop.permute.xlu0 %497
        %v500 = vadd.f32 %v480, %v493
        %v501 = vadd.f32 %v481, %v498
        %v502 = vadd.f32 %v482, %v493
        %v503 = vadd.f32 %v483, %v498
        %v504 = vadd.f32 %v484, %v493
        %v505 = vadd.f32 %v485, %v498
        %v506 = vadd.f32 %v486, %v493
        %v507 = vadd.f32 %v487, %v498
        %v508 = vmax.f32 %v500, 0.0
        %v509 = vmax.f32 %v501, 0.0
        %v510 = vmax.f32 %v502, 0.0
        %v511 = vmax.f32 %v503, 0.0
        %v512 = vmax.f32 %v504, 0.0
        %v513 = vmax.f32 %v505, 0.0
        %v514 = vmax.f32 %v506, 0.0
        %v515 = vmax.f32 %v507, 0.0
        %516 = vrot.lane.b32.xlu0 %v508, 1
        %v517 = vpop.permute.xlu0 %516
        %518 = vrot.lane.b32.xlu0 %v509, 1
        %v519 = vpop.permute.xlu0 %518
        %520 = vrot.lane.b32.xlu0 %v510, 1
        %v521 = vpop.permute.xlu0 %520
        %522 = vrot.lane.b32.xlu0 %v511, 1
        %v523 = vpop.permute.xlu0 %522
        %524 = vrot.lane.b32.xlu0 %v512, 1
        %v525 = vpop.permute.xlu0 %524
        %526 = vrot.lane.b32.xlu0 %v513, 1
        %v527 = vpop.permute.xlu0 %526
        %528 = vrot.lane.b32.xlu0 %v514, 1
        %v529 = vpop.permute.xlu0 %528
        %530 = vrot.lane.b32.xlu0 %v515, 1
        %v531 = vpop.permute.xlu0 %530
        %vm532 = vcmp.ge.s32.totalorder %v362, 1
        %v533 = vsel %vm532, %v517, 0.0
        %v534 = vsel %vm532, %v519, 0.0
        %v535 = vsel %vm532, %v521, 0.0
        %v536 = vsel %vm532, %v523, 0.0
        %v537 = vsel %vm532, %v525, 0.0
        %v538 = vsel %vm532, %v527, 0.0
        %v539 = vsel %vm532, %v529, 0.0
        %v540 = vsel %vm532, %v531, 0.0
        %541 = vrot.lane.b32.xlu0 %v508, 127
        %v542 = vpop.permute.xlu0 %541
        %543 = vrot.lane.b32.xlu0 %v509, 127
        %v544 = vpop.permute.xlu0 %543
        %545 = vrot.lane.b32.xlu0 %v510, 127
        %v546 = vpop.permute.xlu0 %545
        %547 = vrot.lane.b32.xlu0 %v511, 127
        %v548 = vpop.permute.xlu0 %547
        %549 = vrot.lane.b32.xlu0 %v512, 127
        %v550 = vpop.permute.xlu0 %549
        %551 = vrot.lane.b32.xlu0 %v513, 127
        %v552 = vpop.permute.xlu0 %551
        %553 = vrot.lane.b32.xlu0 %v514, 127
        %v554 = vpop.permute.xlu0 %553
        %555 = vrot.lane.b32.xlu0 %v515, 127
        %v556 = vpop.permute.xlu0 %555
        %vm557 = vcmp.lt.s32.totalorder %v362, 127
        %v558 = vsel %vm557, %v542, 0.0
        %v559 = vsel %vm557, %v544, 0.0
        %v560 = vsel %vm557, %v546, 0.0
        %v561 = vsel %vm557, %v548, 0.0
        %v562 = vsel %vm557, %v550, 0.0
        %v563 = vsel %vm557, %v552, 0.0
        %v564 = vsel %vm557, %v554, 0.0
        %v565 = vsel %vm557, %v556, 0.0
        %v566 = vld [vmem:[#allocation2] sm:$0xff]
        %v567 = vld [vmem:[#allocation2 + $0x8] sm:$0xff]
        %v568 = vld [vmem:[#allocation2 + $0x10] sm:$0xff]
        %v569 = vld [vmem:[#allocation2 + $0x18] sm:$0xff]
        %v570 = vld [vmem:[#allocation2 + $0x20] sm:$0xff]
        %v571 = vld [vmem:[#allocation2 + $0x28] sm:$0xff]
        %v572 = vld [vmem:[#allocation2 + $0x30] sm:$0xff]
        %v573 = vld [vmem:[#allocation2 + $0x38] sm:$0xff]
        %v574 = vld [vmem:[#allocation2 + $0x40] sm:$0xff]
        %v575 = vld [vmem:[#allocation2 + $0x48] sm:$0xff]
        %v576 = vld [vmem:[#allocation2 + $0x50] sm:$0xff]
        %v577 = vld [vmem:[#allocation2 + $0x58] sm:$0xff]
        %v578 = vld [vmem:[#allocation2 + $0x60] sm:$0xff]
        %v579 = vld [vmem:[#allocation2 + $0x68] sm:$0xff]
        %v580 = vld [vmem:[#allocation2 + $0x70] sm:$0xff]
        %v581 = vld [vmem:[#allocation2 + $0x78] sm:$0xff]
        %v582 = vld [vmem:[%s6] sm:$0xff]
        %v583 = vld [vmem:[%s6 + $0x8] sm:$0xff]
        %v584 = vld [vmem:[%s6 + $0x10] sm:$0xff]
        %v585 = vld [vmem:[%s6 + $0x18] sm:$0xff]
        %v586 = vld [vmem:[%s6 + $0x20] sm:$0xff]
        %v587 = vld [vmem:[%s6 + $0x28] sm:$0xff]
        %v588 = vld [vmem:[%s6 + $0x30] sm:$0xff]
        %v589 = vld [vmem:[%s6 + $0x38] sm:$0xff]
        %591 = vset.pattern.permute.xlu0 0
        %592 = vperm.xlu0 %591, %v582
        %v593 = vpop.permute.xlu0 %592
        %596 = vset.pattern.permute.xlu0 0
        %597 = vperm.xlu0 %596, %v583
        %v598 = vpop.permute.xlu0 %597
        %601 = vset.pattern.permute.xlu0 0
        %602 = vperm.xlu0 %601, %v584
        %v603 = vpop.permute.xlu0 %602
        %606 = vset.pattern.permute.xlu0 0
        %607 = vperm.xlu0 %606, %v585
        %v608 = vpop.permute.xlu0 %607
        %611 = vset.pattern.permute.xlu0 0
        %612 = vperm.xlu0 %611, %v586
        %v613 = vpop.permute.xlu0 %612
        %616 = vset.pattern.permute.xlu0 0
        %617 = vperm.xlu0 %616, %v587
        %v618 = vpop.permute.xlu0 %617
        %621 = vset.pattern.permute.xlu0 0
        %622 = vperm.xlu0 %621, %v588
        %v623 = vpop.permute.xlu0 %622
        %626 = vset.pattern.permute.xlu0 0
        %627 = vperm.xlu0 %626, %v589
        %v628 = vpop.permute.xlu0 %627
        %vm630 = vcmask 523264
        %v632 = vsel %vm630, %v567, 0
        %v635 = vsel %vm630, %v569, 0
        %v638 = vsel %vm630, %v571, 0
        %v641 = vsel %vm630, %v573, 0
        %v644 = vsel %vm630, %v575, 0
        %v647 = vsel %vm630, %v577, 0
        %v650 = vsel %vm630, %v579, 0
        %v653 = vsel %vm630, %v581, 0
        %655 = vmatprep.subr.mxu0 0.0
        %v656 = vand.u32 %v515, 4294901760
        %657 = vmatpush1.msra.mxu0 %v656
        %658 = vmatprep.subr.mxu0 0.0
        %v659 = vand.u32 %v514, 4294901760
        %660 = vmatpush1.msra.mxu0 %v659
        %661 = vmatprep.subr.mxu0 0.0
        %v662 = vand.u32 %v513, 4294901760
        %663 = vmatpush1.msra.mxu0 %v662
        %664 = vmatprep.subr.mxu0 0.0
        %v665 = vand.u32 %v512, 4294901760
        %666 = vmatpush1.msra.mxu0 %v665
        %667 = vmatprep.subr.mxu0 0.0
        %v668 = vand.u32 %v511, 4294901760
        %669 = vmatpush1.msra.mxu0 %v668
        %670 = vmatprep.subr.mxu0 0.0
        %v671 = vand.u32 %v510, 4294901760
        %672 = vmatpush1.msra.mxu0 %v671
        %673 = vmatprep.subr.mxu0 0.0
        %v674 = vand.u32 %v509, 4294901760
        %675 = vmatpush1.msra.mxu0 %v674
        %676 = vmatprep.subr.mxu0 0.0
        %v677 = vand.u32 %v508, 4294901760
        %678 = vmatpush1.msra.mxu0 %v677
        %679 = vmatprep.subr.mxu0 0.0
        %v680 = vand.u32 %v540, 4294901760
        %681 = vmatpush1.msra.mxu0 %v680
        %682 = vmatprep.subr.mxu0 0.0
        %v683 = vand.u32 %v539, 4294901760
        %684 = vmatpush1.msra.mxu0 %v683
        %685 = vmatprep.subr.mxu0 0.0
        %v686 = vand.u32 %v538, 4294901760
        %687 = vmatpush1.msra.mxu0 %v686
        %688 = vmatprep.subr.mxu0 0.0
        %v689 = vand.u32 %v537, 4294901760
        %690 = vmatpush1.msra.mxu0 %v689
        %691 = vmatprep.subr.mxu0 0.0
        %v692 = vand.u32 %v536, 4294901760
        %693 = vmatpush1.msra.mxu0 %v692
        %694 = vmatprep.subr.mxu0 0.0
        %v695 = vand.u32 %v535, 4294901760
        %696 = vmatpush1.msra.mxu0 %v695
        %697 = vmatprep.subr.mxu0 0.0
        %v698 = vand.u32 %v534, 4294901760
        %699 = vmatpush1.msra.mxu0 %v698
        %700 = vmatprep.subr.mxu0 0.0
        %v701 = vand.u32 %v533, 4294901760
        %702 = vmatpush1.msra.mxu0 %v701
        %703 = vmatprep.subr.mxu0 0.0
        %704 = vmatpush2.msra.mxu0 0.0
        %705 = vmatprep.subr.mxu0 0.0
        %706 = vmatpush2.msra.mxu0 0.0
        %707 = vmatprep.subr.mxu0 0.0
        %708 = vmatpush2.msra.mxu0 0.0
        %709 = vmatprep.subr.mxu0 0.0
        %710 = vmatpush2.msra.mxu0 0.0
        %711 = vmatprep.subr.mxu0 0.0
        %712 = vmatpush2.msra.mxu0 0.0
        %713 = vmatprep.subr.mxu0 0.0
        %714 = vmatpush2.msra.mxu0 0.0
        %715 = vmatprep.subr.mxu0 0.0
        %716 = vmatpush2.msra.mxu0 0.0
        %717 = vmatprep.subr.mxu0 0.0
        %718 = vmatpush2.msra.mxu0 0.0
        %719 = vmatprep.subr.mxu0 0.0
        %v720 = vand.u32 %v565, 4294901760
        %721 = vmatpush2.msra.mxu0 %v720
        %722 = vmatprep.subr.mxu0 0.0
        %v723 = vand.u32 %v564, 4294901760
        %724 = vmatpush2.msra.mxu0 %v723
        %725 = vmatprep.subr.mxu0 0.0
        %v726 = vand.u32 %v563, 4294901760
        %727 = vmatpush2.msra.mxu0 %v726
        %728 = vmatprep.subr.mxu0 0.0
        %v729 = vand.u32 %v562, 4294901760
        %730 = vmatpush2.msra.mxu0 %v729
        %731 = vmatprep.subr.mxu0 0.0
        %v732 = vand.u32 %v561, 4294901760
        %733 = vmatpush2.msra.mxu0 %v732
        %734 = vmatprep.subr.mxu0 0.0
        %v735 = vand.u32 %v560, 4294901760
        %736 = vmatpush2.msra.mxu0 %v735
        %737 = vmatprep.subr.mxu0 0.0
        %v738 = vand.u32 %v559, 4294901760
        %739 = vmatpush2.msra.mxu0 %v738
        %740 = vmatprep.subr.mxu0 0.0
        %v741 = vand.u32 %v558, 4294901760
        %742 = vmatpush2.msra.mxu0 %v741
        %v743 = vand.u32 %v632, 4294901760
        %v744 = vsub.f32 %v632, %v743
        %v745 = vand.u32 %v744, 4294901760
        %v746 = vsub.f32 %v744, %v745
        %v747 = vand.u32 %v746, 4294901760
        %748 = vmatprep.mubr.f32.mxu0 %v747
        %v749 = vand.u32 %v566, 4294901760
        %v750 = vsub.f32 %v566, %v749
        %v751 = vand.u32 %v750, 4294901760
        %v752 = vsub.f32 %v750, %v751
        %v753 = vand.u32 %v752, 4294901760
        %754 = vmatmul.mubr.f32.gmra.mxu0 %v753
        %v755 = vpop.f32.mrf.mxu0
        %v756 = vadd.f32 %v593, %v755
        %v757 = vpop.f32.mrf.mxu0
        %v758 = vand.u32 %v635, 4294901760
        %v759 = vsub.f32 %v635, %v758
        %v760 = vand.u32 %v759, 4294901760
        %v761 = vsub.f32 %v759, %v760
        %v762 = vand.u32 %v761, 4294901760
        %763 = vmatprep.mubr.f32.mxu0 %v762
        %v764 = vand.u32 %v568, 4294901760
        %v765 = vsub.f32 %v568, %v764
        %v766 = vand.u32 %v765, 4294901760
        %v767 = vsub.f32 %v765, %v766
        %v768 = vand.u32 %v767, 4294901760
        %769 = vmatmul.mubr.f32.gmra.mxu0 %v768
        %v770 = vpop.f32.mrf.mxu0
        %v771 = vadd.f32 %v598, %v770
        %v772 = vpop.f32.mrf.mxu0
        %v773 = vand.u32 %v638, 4294901760
        %v774 = vsub.f32 %v638, %v773
        %v775 = vand.u32 %v774, 4294901760
        %v776 = vsub.f32 %v774, %v775
        %v777 = vand.u32 %v776, 4294901760
        %778 = vmatprep.mubr.f32.mxu0 %v777
        %v779 = vand.u32 %v570, 4294901760
        %v780 = vsub.f32 %v570, %v779
        %v781 = vand.u32 %v780, 4294901760
        %v782 = vsub.f32 %v780, %v781
        %v783 = vand.u32 %v782, 4294901760
        %784 = vmatmul.mubr.f32.gmra.mxu0 %v783
        %v785 = vpop.f32.mrf.mxu0
        %v786 = vadd.f32 %v603, %v785
        %v787 = vpop.f32.mrf.mxu0
        %v788 = vand.u32 %v641, 4294901760
        %v789 = vsub.f32 %v641, %v788
        %v790 = vand.u32 %v789, 4294901760
        %v791 = vsub.f32 %v789, %v790
        %v792 = vand.u32 %v791, 4294901760
        %793 = vmatprep.mubr.f32.mxu0 %v792
        %v794 = vand.u32 %v572, 4294901760
        %v795 = vsub.f32 %v572, %v794
        %v796 = vand.u32 %v795, 4294901760
        %v797 = vsub.f32 %v795, %v796
        %v798 = vand.u32 %v797, 4294901760
        %799 = vmatmul.mubr.f32.gmra.mxu0 %v798
        %v800 = vpop.f32.mrf.mxu0
        %v801 = vadd.f32 %v608, %v800
        %v802 = vpop.f32.mrf.mxu0
        %v803 = vand.u32 %v644, 4294901760
        %v804 = vsub.f32 %v644, %v803
        %v805 = vand.u32 %v804, 4294901760
        %v806 = vsub.f32 %v804, %v805
        %v807 = vand.u32 %v806, 4294901760
        %808 = vmatprep.mubr.f32.mxu0 %v807
        %v809 = vand.u32 %v574, 4294901760
        %v810 = vsub.f32 %v574, %v809
        %v811 = vand.u32 %v810, 4294901760
        %v812 = vsub.f32 %v810, %v811
        %v813 = vand.u32 %v812, 4294901760
        %814 = vmatmul.mubr.f32.gmra.mxu0 %v813
        %v815 = vpop.f32.mrf.mxu0
        %v816 = vadd.f32 %v613, %v815
        %v817 = vpop.f32.mrf.mxu0
        %v818 = vand.u32 %v647, 4294901760
        %v819 = vsub.f32 %v647, %v818
        %v820 = vand.u32 %v819, 4294901760
        %v821 = vsub.f32 %v819, %v820
        %v822 = vand.u32 %v821, 4294901760
        %823 = vmatprep.mubr.f32.mxu0 %v822
        %v824 = vand.u32 %v576, 4294901760
        %v825 = vsub.f32 %v576, %v824
        %v826 = vand.u32 %v825, 4294901760
        %v827 = vsub.f32 %v825, %v826
        %v828 = vand.u32 %v827, 4294901760
        %829 = vmatmul.mubr.f32.gmra.mxu0 %v828
        %v830 = vpop.f32.mrf.mxu0
        %v831 = vadd.f32 %v618, %v830
        %v832 = vpop.f32.mrf.mxu0
        %v833 = vand.u32 %v650, 4294901760
        %v834 = vsub.f32 %v650, %v833
        %v835 = vand.u32 %v834, 4294901760
        %v836 = vsub.f32 %v834, %v835
        %v837 = vand.u32 %v836, 4294901760
        %838 = vmatprep.mubr.f32.mxu0 %v837
        %v839 = vand.u32 %v578, 4294901760
        %v840 = vsub.f32 %v578, %v839
        %v841 = vand.u32 %v840, 4294901760
        %v842 = vsub.f32 %v840, %v841
        %v843 = vand.u32 %v842, 4294901760
        %844 = vmatmul.mubr.f32.gmra.mxu0 %v843
        %v845 = vpop.f32.mrf.mxu0
        %v846 = vadd.f32 %v623, %v845
        %v847 = vpop.f32.mrf.mxu0
        %v848 = vand.u32 %v653, 4294901760
        %v849 = vsub.f32 %v653, %v848
        %v850 = vand.u32 %v849, 4294901760
        %v851 = vsub.f32 %v849, %v850
        %v852 = vand.u32 %v851, 4294901760
        %853 = vmatprep.mubr.f32.mxu0 %v852
        %v854 = vand.u32 %v580, 4294901760
        %v855 = vsub.f32 %v580, %v854
        %v856 = vand.u32 %v855, 4294901760
        %v857 = vsub.f32 %v855, %v856
        %v858 = vand.u32 %v857, 4294901760
        %859 = vmatmul.mubr.f32.gmra.mxu0 %v858
        %v860 = vpop.f32.mrf.mxu0
        %v861 = vadd.f32 %v628, %v860
        %v862 = vpop.f32.mrf.mxu0
        %863 = vdwg.mxu0
        %864 = vmatprep.subr.mxu0 0.0
        %v865 = vand.u32 %v515, 4294901760
        %v866 = vsub.f32 %v515, %v865
        %v867 = vand.u32 %v866, 4294901760
        %v868 = vsub.f32 %v866, %v867
        %v869 = vand.u32 %v868, 4294901760
        %870 = vmatpush1.msra.mxu0 %v869
        %871 = vmatprep.subr.mxu0 0.0
        %v872 = vand.u32 %v514, 4294901760
        %v873 = vsub.f32 %v514, %v872
        %v874 = vand.u32 %v873, 4294901760
        %v875 = vsub.f32 %v873, %v874
        %v876 = vand.u32 %v875, 4294901760
        %877 = vmatpush1.msra.mxu0 %v876
        %878 = vmatprep.subr.mxu0 0.0
        %v879 = vand.u32 %v513, 4294901760
        %v880 = vsub.f32 %v513, %v879
        %v881 = vand.u32 %v880, 4294901760
        %v882 = vsub.f32 %v880, %v881
        %v883 = vand.u32 %v882, 4294901760
        %884 = vmatpush1.msra.mxu0 %v883
        %885 = vmatprep.subr.mxu0 0.0
        %v886 = vand.u32 %v512, 4294901760
        %v887 = vsub.f32 %v512, %v886
        %v888 = vand.u32 %v887, 4294901760
        %v889 = vsub.f32 %v887, %v888
        %v890 = vand.u32 %v889, 4294901760
        %891 = vmatpush1.msra.mxu0 %v890
        %892 = vmatprep.subr.mxu0 0.0
        %v893 = vand.u32 %v511, 4294901760
        %v894 = vsub.f32 %v511, %v893
        %v895 = vand.u32 %v894, 4294901760
        %v896 = vsub.f32 %v894, %v895
        %v897 = vand.u32 %v896, 4294901760
        %898 = vmatpush1.msra.mxu0 %v897
        %899 = vmatprep.subr.mxu0 0.0
        %v900 = vand.u32 %v510, 4294901760
        %v901 = vsub.f32 %v510, %v900
        %v902 = vand.u32 %v901, 4294901760
        %v903 = vsub.f32 %v901, %v902
        %v904 = vand.u32 %v903, 4294901760
        %905 = vmatpush1.msra.mxu0 %v904
        %906 = vmatprep.subr.mxu0 0.0
        %v907 = vand.u32 %v509, 4294901760
        %v908 = vsub.f32 %v509, %v907
        %v909 = vand.u32 %v908, 4294901760
        %v910 = vsub.f32 %v908, %v909
        %v911 = vand.u32 %v910, 4294901760
        %912 = vmatpush1.msra.mxu0 %v911
        %913 = vmatprep.subr.mxu0 0.0
        %v914 = vand.u32 %v508, 4294901760
        %v915 = vsub.f32 %v508, %v914
        %v916 = vand.u32 %v915, 4294901760
        %v917 = vsub.f32 %v915, %v916
        %v918 = vand.u32 %v917, 4294901760
        %919 = vmatpush1.msra.mxu0 %v918
        %920 = vmatprep.subr.mxu0 0.0
        %v921 = vand.u32 %v540, 4294901760
        %v922 = vsub.f32 %v540, %v921
        %v923 = vand.u32 %v922, 4294901760
        %v924 = vsub.f32 %v922, %v923
        %v925 = vand.u32 %v924, 4294901760
        %926 = vmatpush1.msra.mxu0 %v925
        %927 = vmatprep.subr.mxu0 0.0
        %v928 = vand.u32 %v539, 4294901760
        %v929 = vsub.f32 %v539, %v928
        %v930 = vand.u32 %v929, 4294901760
        %v931 = vsub.f32 %v929, %v930
        %v932 = vand.u32 %v931, 4294901760
        %933 = vmatpush1.msra.mxu0 %v932
        %934 = vmatprep.subr.mxu0 0.0
        %v935 = vand.u32 %v538, 4294901760
        %v936 = vsub.f32 %v538, %v935
        %v937 = vand.u32 %v936, 4294901760
        %v938 = vsub.f32 %v936, %v937
        %v939 = vand.u32 %v938, 4294901760
        %940 = vmatpush1.msra.mxu0 %v939
        %941 = vmatprep.subr.mxu0 0.0
        %v942 = vand.u32 %v537, 4294901760
        %v943 = vsub.f32 %v537, %v942
        %v944 = vand.u32 %v943, 4294901760
        %v945 = vsub.f32 %v943, %v944
        %v946 = vand.u32 %v945, 4294901760
        %947 = vmatpush1.msra.mxu0 %v946
        %948 = vmatprep.subr.mxu0 0.0
        %v949 = vand.u32 %v536, 4294901760
        %v950 = vsub.f32 %v536, %v949
        %v951 = vand.u32 %v950, 4294901760
        %v952 = vsub.f32 %v950, %v951
        %v953 = vand.u32 %v952, 4294901760
        %954 = vmatpush1.msra.mxu0 %v953
        %955 = vmatprep.subr.mxu0 0.0
        %v956 = vand.u32 %v535, 4294901760
        %v957 = vsub.f32 %v535, %v956
        %v958 = vand.u32 %v957, 4294901760
        %v959 = vsub.f32 %v957, %v958
        %v960 = vand.u32 %v959, 4294901760
        %961 = vmatpush1.msra.mxu0 %v960
        %962 = vmatprep.subr.mxu0 0.0
        %v963 = vand.u32 %v534, 4294901760
        %v964 = vsub.f32 %v534, %v963
        %v965 = vand.u32 %v964, 4294901760
        %v966 = vsub.f32 %v964, %v965
        %v967 = vand.u32 %v966, 4294901760
        %968 = vmatpush1.msra.mxu0 %v967
        %969 = vmatprep.subr.mxu0 0.0
        %v970 = vand.u32 %v533, 4294901760
        %v971 = vsub.f32 %v533, %v970
        %v972 = vand.u32 %v971, 4294901760
        %v973 = vsub.f32 %v971, %v972
        %v974 = vand.u32 %v973, 4294901760
        %975 = vmatpush1.msra.mxu0 %v974
        %976 = vmatprep.subr.mxu0 0.0
        %977 = vmatpush2.msra.mxu0 0.0
        %978 = vmatprep.subr.mxu0 0.0
        %979 = vmatpush2.msra.mxu0 0.0
        %980 = vmatprep.subr.mxu0 0.0
        %981 = vmatpush2.msra.mxu0 0.0
        %982 = vmatprep.subr.mxu0 0.0
        %983 = vmatpush2.msra.mxu0 0.0
        %984 = vmatprep.subr.mxu0 0.0
        %985 = vmatpush2.msra.mxu0 0.0
        %986 = vmatprep.subr.mxu0 0.0
        %987 = vmatpush2.msra.mxu0 0.0
        %988 = vmatprep.subr.mxu0 0.0
        %989 = vmatpush2.msra.mxu0 0.0
        %990 = vmatprep.subr.mxu0 0.0
        %991 = vmatpush2.msra.mxu0 0.0
        %992 = vmatprep.subr.mxu0 0.0
        %v993 = vand.u32 %v565, 4294901760
        %v994 = vsub.f32 %v565, %v993
        %v995 = vand.u32 %v994, 4294901760
        %v996 = vsub.f32 %v994, %v995
        %v997 = vand.u32 %v996, 4294901760
        %998 = vmatpush2.msra.mxu0 %v997
        %999 = vmatprep.subr.mxu0 0.0
        %v1000 = vand.u32 %v564, 4294901760
        %v1001 = vsub.f32 %v564, %v1000
        %v1002 = vand.u32 %v1001, 4294901760
        %v1003 = vsub.f32 %v1001, %v1002
        %v1004 = vand.u32 %v1003, 4294901760
        %1005 = vmatpush2.msra.mxu0 %v1004
        %1006 = vmatprep.subr.mxu0 0.0
        %v1007 = vand.u32 %v563, 4294901760
        %v1008 = vsub.f32 %v563, %v1007
        %v1009 = vand.u32 %v1008, 4294901760
        %v1010 = vsub.f32 %v1008, %v1009
        %v1011 = vand.u32 %v1010, 4294901760
        %1012 = vmatpush2.msra.mxu0 %v1011
        %1013 = vmatprep.subr.mxu0 0.0
        %v1014 = vand.u32 %v562, 4294901760
        %v1015 = vsub.f32 %v562, %v1014
        %v1016 = vand.u32 %v1015, 4294901760
        %v1017 = vsub.f32 %v1015, %v1016
        %v1018 = vand.u32 %v1017, 4294901760
        %1019 = vmatpush2.msra.mxu0 %v1018
        %1020 = vmatprep.subr.mxu0 0.0
        %v1021 = vand.u32 %v561, 4294901760
        %v1022 = vsub.f32 %v561, %v1021
        %v1023 = vand.u32 %v1022, 4294901760
        %v1024 = vsub.f32 %v1022, %v1023
        %v1025 = vand.u32 %v1024, 4294901760
        %1026 = vmatpush2.msra.mxu0 %v1025
        %1027 = vmatprep.subr.mxu0 0.0
        %v1028 = vand.u32 %v560, 4294901760
        %v1029 = vsub.f32 %v560, %v1028
        %v1030 = vand.u32 %v1029, 4294901760
        %v1031 = vsub.f32 %v1029, %v1030
        %v1032 = vand.u32 %v1031, 4294901760
        %1033 = vmatpush2.msra.mxu0 %v1032
        %1034 = vmatprep.subr.mxu0 0.0
        %v1035 = vand.u32 %v559, 4294901760
        %v1036 = vsub.f32 %v559, %v1035
        %v1037 = vand.u32 %v1036, 4294901760
        %v1038 = vsub.f32 %v1036, %v1037
        %v1039 = vand.u32 %v1038, 4294901760
        %1040 = vmatpush2.msra.mxu0 %v1039
        %1041 = vmatprep.subr.mxu0 0.0
        %v1042 = vand.u32 %v558, 4294901760
        %v1043 = vsub.f32 %v558, %v1042
        %v1044 = vand.u32 %v1043, 4294901760
        %v1045 = vsub.f32 %v1043, %v1044
        %v1046 = vand.u32 %v1045, 4294901760
        %1047 = vmatpush2.msra.mxu0 %v1046
        %v1048 = vand.u32 %v632, 4294901760
        %1049 = vmatprep.mubr.f32.mxu0 %v1048
        %v1050 = vand.u32 %v566, 4294901760
        %1051 = vmatmul.mubr.f32.gmra.mxu0 %v1050
        %v1052 = vpop.f32.mrf.mxu0
        %v1053 = vadd.f32 %v756, %v1052
        %v1054 = vpop.f32.mrf.mxu0
        %v1055 = vand.u32 %v635, 4294901760
        %1056 = vmatprep.mubr.f32.mxu0 %v1055
        %v1057 = vand.u32 %v568, 4294901760
        %1058 = vmatmul.mubr.f32.gmra.mxu0 %v1057
        %v1059 = vpop.f32.mrf.mxu0
        %v1060 = vadd.f32 %v771, %v1059
        %v1061 = vpop.f32.mrf.mxu0
        %v1062 = vand.u32 %v638, 4294901760
        %1063 = vmatprep.mubr.f32.mxu0 %v1062
        %v1064 = vand.u32 %v570, 4294901760
        %1065 = vmatmul.mubr.f32.gmra.mxu0 %v1064
        %v1066 = vpop.f32.mrf.mxu0
        %v1067 = vadd.f32 %v786, %v1066
        %v1068 = vpop.f32.mrf.mxu0
        %v1069 = vand.u32 %v641, 4294901760
        %1070 = vmatprep.mubr.f32.mxu0 %v1069
        %v1071 = vand.u32 %v572, 4294901760
        %1072 = vmatmul.mubr.f32.gmra.mxu0 %v1071
        %v1073 = vpop.f32.mrf.mxu0
        %v1074 = vadd.f32 %v801, %v1073
        %v1075 = vpop.f32.mrf.mxu0
        %v1076 = vand.u32 %v644, 4294901760
        %1077 = vmatprep.mubr.f32.mxu0 %v1076
        %v1078 = vand.u32 %v574, 4294901760
        %1079 = vmatmul.mubr.f32.gmra.mxu0 %v1078
        %v1080 = vpop.f32.mrf.mxu0
        %v1081 = vadd.f32 %v816, %v1080
        %v1082 = vpop.f32.mrf.mxu0
        %v1083 = vand.u32 %v647, 4294901760
        %1084 = vmatprep.mubr.f32.mxu0 %v1083
        %v1085 = vand.u32 %v576, 4294901760
        %1086 = vmatmul.mubr.f32.gmra.mxu0 %v1085
        %v1087 = vpop.f32.mrf.mxu0
        %v1088 = vadd.f32 %v831, %v1087
        %v1089 = vpop.f32.mrf.mxu0
        %v1090 = vand.u32 %v650, 4294901760
        %1091 = vmatprep.mubr.f32.mxu0 %v1090
        %v1092 = vand.u32 %v578, 4294901760
        %1093 = vmatmul.mubr.f32.gmra.mxu0 %v1092
        %v1094 = vpop.f32.mrf.mxu0
        %v1095 = vadd.f32 %v846, %v1094
        %v1096 = vpop.f32.mrf.mxu0
        %v1097 = vand.u32 %v653, 4294901760
        %1098 = vmatprep.mubr.f32.mxu0 %v1097
        %v1099 = vand.u32 %v580, 4294901760
        %1100 = vmatmul.mubr.f32.gmra.mxu0 %v1099
        %v1101 = vpop.f32.mrf.mxu0
        %v1102 = vadd.f32 %v861, %v1101
        %v1103 = vpop.f32.mrf.mxu0
        %1104 = vdwg.mxu0
        %1105 = vmatprep.subr.mxu0 0.0
        %v1106 = vand.u32 %v515, 4294901760
        %v1107 = vsub.f32 %v515, %v1106
        %1108 = vmatpush1.msra.mxu0 %v1107
        %1109 = vmatprep.subr.mxu0 0.0
        %v1110 = vand.u32 %v514, 4294901760
        %v1111 = vsub.f32 %v514, %v1110
        %1112 = vmatpush1.msra.mxu0 %v1111
        %1113 = vmatprep.subr.mxu0 0.0
        %v1114 = vand.u32 %v513, 4294901760
        %v1115 = vsub.f32 %v513, %v1114
        %1116 = vmatpush1.msra.mxu0 %v1115
        %1117 = vmatprep.subr.mxu0 0.0
        %v1118 = vand.u32 %v512, 4294901760
        %v1119 = vsub.f32 %v512, %v1118
        %1120 = vmatpush1.msra.mxu0 %v1119
        %1121 = vmatprep.subr.mxu0 0.0
        %v1122 = vand.u32 %v511, 4294901760
        %v1123 = vsub.f32 %v511, %v1122
        %1124 = vmatpush1.msra.mxu0 %v1123
        %1125 = vmatprep.subr.mxu0 0.0
        %v1126 = vand.u32 %v510, 4294901760
        %v1127 = vsub.f32 %v510, %v1126
        %1128 = vmatpush1.msra.mxu0 %v1127
        %1129 = vmatprep.subr.mxu0 0.0
        %v1130 = vand.u32 %v509, 4294901760
        %v1131 = vsub.f32 %v509, %v1130
        %1132 = vmatpush1.msra.mxu0 %v1131
        %1133 = vmatprep.subr.mxu0 0.0
        %v1134 = vand.u32 %v508, 4294901760
        %v1135 = vsub.f32 %v508, %v1134
        %1136 = vmatpush1.msra.mxu0 %v1135
        %1137 = vmatprep.subr.mxu0 0.0
        %v1138 = vand.u32 %v540, 4294901760
        %v1139 = vsub.f32 %v540, %v1138
        %1140 = vmatpush1.msra.mxu0 %v1139
        %1141 = vmatprep.subr.mxu0 0.0
        %v1142 = vand.u32 %v539, 4294901760
        %v1143 = vsub.f32 %v539, %v1142
        %1144 = vmatpush1.msra.mxu0 %v1143
        %1145 = vmatprep.subr.mxu0 0.0
        %v1146 = vand.u32 %v538, 4294901760
        %v1147 = vsub.f32 %v538, %v1146
        %1148 = vmatpush1.msra.mxu0 %v1147
        %1149 = vmatprep.subr.mxu0 0.0
        %v1150 = vand.u32 %v537, 4294901760
        %v1151 = vsub.f32 %v537, %v1150
        %1152 = vmatpush1.msra.mxu0 %v1151
        %1153 = vmatprep.subr.mxu0 0.0
        %v1154 = vand.u32 %v536, 4294901760
        %v1155 = vsub.f32 %v536, %v1154
        %1156 = vmatpush1.msra.mxu0 %v1155
        %1157 = vmatprep.subr.mxu0 0.0
        %v1158 = vand.u32 %v535, 4294901760
        %v1159 = vsub.f32 %v535, %v1158
        %1160 = vmatpush1.msra.mxu0 %v1159
        %1161 = vmatprep.subr.mxu0 0.0
        %v1162 = vand.u32 %v534, 4294901760
        %v1163 = vsub.f32 %v534, %v1162
        %1164 = vmatpush1.msra.mxu0 %v1163
        %1165 = vmatprep.subr.mxu0 0.0
        %v1166 = vand.u32 %v533, 4294901760
        %v1167 = vsub.f32 %v533, %v1166
        %1168 = vmatpush1.msra.mxu0 %v1167
        %1169 = vmatprep.subr.mxu0 0.0
        %1170 = vmatpush2.msra.mxu0 0.0
        %1171 = vmatprep.subr.mxu0 0.0
        %1172 = vmatpush2.msra.mxu0 0.0
        %1173 = vmatprep.subr.mxu0 0.0
        %1174 = vmatpush2.msra.mxu0 0.0
        %1175 = vmatprep.subr.mxu0 0.0
        %1176 = vmatpush2.msra.mxu0 0.0
        %1177 = vmatprep.subr.mxu0 0.0
        %1178 = vmatpush2.msra.mxu0 0.0
        %1179 = vmatprep.subr.mxu0 0.0
        %1180 = vmatpush2.msra.mxu0 0.0
        %1181 = vmatprep.subr.mxu0 0.0
        %1182 = vmatpush2.msra.mxu0 0.0
        %1183 = vmatprep.subr.mxu0 0.0
        %1184 = vmatpush2.msra.mxu0 0.0
        %1185 = vmatprep.subr.mxu0 0.0
        %v1186 = vand.u32 %v565, 4294901760
        %v1187 = vsub.f32 %v565, %v1186
        %1188 = vmatpush2.msra.mxu0 %v1187
        %1189 = vmatprep.subr.mxu0 0.0
        %v1190 = vand.u32 %v564, 4294901760
        %v1191 = vsub.f32 %v564, %v1190
        %1192 = vmatpush2.msra.mxu0 %v1191
        %1193 = vmatprep.subr.mxu0 0.0
        %v1194 = vand.u32 %v563, 4294901760
        %v1195 = vsub.f32 %v563, %v1194
        %1196 = vmatpush2.msra.mxu0 %v1195
        %1197 = vmatprep.subr.mxu0 0.0
        %v1198 = vand.u32 %v562, 4294901760
        %v1199 = vsub.f32 %v562, %v1198
        %1200 = vmatpush2.msra.mxu0 %v1199
        %1201 = vmatprep.subr.mxu0 0.0
        %v1202 = vand.u32 %v561, 4294901760
        %v1203 = vsub.f32 %v561, %v1202
        %1204 = vmatpush2.msra.mxu0 %v1203
        %1205 = vmatprep.subr.mxu0 0.0
        %v1206 = vand.u32 %v560, 4294901760
        %v1207 = vsub.f32 %v560, %v1206
        %1208 = vmatpush2.msra.mxu0 %v1207
        %1209 = vmatprep.subr.mxu0 0.0
        %v1210 = vand.u32 %v559, 4294901760
        %v1211 = vsub.f32 %v559, %v1210
        %1212 = vmatpush2.msra.mxu0 %v1211
        %1213 = vmatprep.subr.mxu0 0.0
        %v1214 = vand.u32 %v558, 4294901760
        %v1215 = vsub.f32 %v558, %v1214
        %1216 = vmatpush2.msra.mxu0 %v1215
        %v1217 = vand.u32 %v632, 4294901760
        %v1218 = vsub.f32 %v632, %v1217
        %1219 = vmatprep.mubr.f32.mxu0 %v1218
        %v1220 = vand.u32 %v566, 4294901760
        %v1221 = vsub.f32 %v566, %v1220
        %1222 = vmatmul.mubr.f32.gmra.mxu0 %v1221
        %v1223 = vpop.f32.mrf.mxu0
        %v1224 = vadd.f32 %v1053, %v1223
        %v1225 = vpop.f32.mrf.mxu0
        %v1226 = vand.u32 %v635, 4294901760
        %v1227 = vsub.f32 %v635, %v1226
        %1228 = vmatprep.mubr.f32.mxu0 %v1227
        %v1229 = vand.u32 %v568, 4294901760
        %v1230 = vsub.f32 %v568, %v1229
        %1231 = vmatmul.mubr.f32.gmra.mxu0 %v1230
        %v1232 = vpop.f32.mrf.mxu0
        %v1233 = vadd.f32 %v1060, %v1232
        %v1234 = vpop.f32.mrf.mxu0
        %v1235 = vand.u32 %v638, 4294901760
        %v1236 = vsub.f32 %v638, %v1235
        %1237 = vmatprep.mubr.f32.mxu0 %v1236
        %v1238 = vand.u32 %v570, 4294901760
        %v1239 = vsub.f32 %v570, %v1238
        %1240 = vmatmul.mubr.f32.gmra.mxu0 %v1239
        %v1241 = vpop.f32.mrf.mxu0
        %v1242 = vadd.f32 %v1067, %v1241
        %v1243 = vpop.f32.mrf.mxu0
        %v1244 = vand.u32 %v641, 4294901760
        %v1245 = vsub.f32 %v641, %v1244
        %1246 = vmatprep.mubr.f32.mxu0 %v1245
        %v1247 = vand.u32 %v572, 4294901760
        %v1248 = vsub.f32 %v572, %v1247
        %1249 = vmatmul.mubr.f32.gmra.mxu0 %v1248
        %v1250 = vpop.f32.mrf.mxu0
        %v1251 = vadd.f32 %v1074, %v1250
        %v1252 = vpop.f32.mrf.mxu0
        %v1253 = vand.u32 %v644, 4294901760
        %v1254 = vsub.f32 %v644, %v1253
        %1255 = vmatprep.mubr.f32.mxu0 %v1254
        %v1256 = vand.u32 %v574, 4294901760
        %v1257 = vsub.f32 %v574, %v1256
        %1258 = vmatmul.mubr.f32.gmra.mxu0 %v1257
        %v1259 = vpop.f32.mrf.mxu0
        %v1260 = vadd.f32 %v1081, %v1259
        %v1261 = vpop.f32.mrf.mxu0
        %v1262 = vand.u32 %v647, 4294901760
        %v1263 = vsub.f32 %v647, %v1262
        %1264 = vmatprep.mubr.f32.mxu0 %v1263
        %v1265 = vand.u32 %v576, 4294901760
        %v1266 = vsub.f32 %v576, %v1265
        %1267 = vmatmul.mubr.f32.gmra.mxu0 %v1266
        %v1268 = vpop.f32.mrf.mxu0
        %v1269 = vadd.f32 %v1088, %v1268
        %v1270 = vpop.f32.mrf.mxu0
        %v1271 = vand.u32 %v650, 4294901760
        %v1272 = vsub.f32 %v650, %v1271
        %1273 = vmatprep.mubr.f32.mxu0 %v1272
        %v1274 = vand.u32 %v578, 4294901760
        %v1275 = vsub.f32 %v578, %v1274
        %1276 = vmatmul.mubr.f32.gmra.mxu0 %v1275
        %v1277 = vpop.f32.mrf.mxu0
        %v1278 = vadd.f32 %v1095, %v1277
        %v1279 = vpop.f32.mrf.mxu0
        %v1280 = vand.u32 %v653, 4294901760
        %v1281 = vsub.f32 %v653, %v1280
        %1282 = vmatprep.mubr.f32.mxu0 %v1281
        %v1283 = vand.u32 %v580, 4294901760
        %v1284 = vsub.f32 %v580, %v1283
        %1285 = vmatmul.mubr.f32.gmra.mxu0 %v1284
        %v1286 = vpop.f32.mrf.mxu0
        %v1287 = vadd.f32 %v1102, %v1286
        %v1288 = vpop.f32.mrf.mxu0
        %1289 = vdwg.mxu0
        %1290 = vmatprep.subr.mxu0 0.0
        %v1291 = vand.u32 %v515, 4294901760
        %1292 = vmatpush1.msra.mxu0 %v1291
        %1293 = vmatprep.subr.mxu0 0.0
        %v1294 = vand.u32 %v514, 4294901760
        %1295 = vmatpush1.msra.mxu0 %v1294
        %1296 = vmatprep.subr.mxu0 0.0
        %v1297 = vand.u32 %v513, 4294901760
        %1298 = vmatpush1.msra.mxu0 %v1297
        %1299 = vmatprep.subr.mxu0 0.0
        %v1300 = vand.u32 %v512, 4294901760
        %1301 = vmatpush1.msra.mxu0 %v1300
        %1302 = vmatprep.subr.mxu0 0.0
        %v1303 = vand.u32 %v511, 4294901760
        %1304 = vmatpush1.msra.mxu0 %v1303
        %1305 = vmatprep.subr.mxu0 0.0
        %v1306 = vand.u32 %v510, 4294901760
        %1307 = vmatpush1.msra.mxu0 %v1306
        %1308 = vmatprep.subr.mxu0 0.0
        %v1309 = vand.u32 %v509, 4294901760
        %1310 = vmatpush1.msra.mxu0 %v1309
        %1311 = vmatprep.subr.mxu0 0.0
        %v1312 = vand.u32 %v508, 4294901760
        %1313 = vmatpush1.msra.mxu0 %v1312
        %1314 = vmatprep.subr.mxu0 0.0
        %v1315 = vand.u32 %v540, 4294901760
        %1316 = vmatpush1.msra.mxu0 %v1315
        %1317 = vmatprep.subr.mxu0 0.0
        %v1318 = vand.u32 %v539, 4294901760
        %1319 = vmatpush1.msra.mxu0 %v1318
        %1320 = vmatprep.subr.mxu0 0.0
        %v1321 = vand.u32 %v538, 4294901760
        %1322 = vmatpush1.msra.mxu0 %v1321
        %1323 = vmatprep.subr.mxu0 0.0
        %v1324 = vand.u32 %v537, 4294901760
        %1325 = vmatpush1.msra.mxu0 %v1324
        %1326 = vmatprep.subr.mxu0 0.0
        %v1327 = vand.u32 %v536, 4294901760
        %1328 = vmatpush1.msra.mxu0 %v1327
        %1329 = vmatprep.subr.mxu0 0.0
        %v1330 = vand.u32 %v535, 4294901760
        %1331 = vmatpush1.msra.mxu0 %v1330
        %1332 = vmatprep.subr.mxu0 0.0
        %v1333 = vand.u32 %v534, 4294901760
        %1334 = vmatpush1.msra.mxu0 %v1333
        %1335 = vmatprep.subr.mxu0 0.0
        %v1336 = vand.u32 %v533, 4294901760
        %1337 = vmatpush1.msra.mxu0 %v1336
        %1338 = vmatprep.subr.mxu0 0.0
        %1339 = vmatpush2.msra.mxu0 0.0
        %1340 = vmatprep.subr.mxu0 0.0
        %1341 = vmatpush2.msra.mxu0 0.0
        %1342 = vmatprep.subr.mxu0 0.0
        %1343 = vmatpush2.msra.mxu0 0.0
        %1344 = vmatprep.subr.mxu0 0.0
        %1345 = vmatpush2.msra.mxu0 0.0
        %1346 = vmatprep.subr.mxu0 0.0
        %1347 = vmatpush2.msra.mxu0 0.0
        %1348 = vmatprep.subr.mxu0 0.0
        %1349 = vmatpush2.msra.mxu0 0.0
        %1350 = vmatprep.subr.mxu0 0.0
        %1351 = vmatpush2.msra.mxu0 0.0
        %1352 = vmatprep.subr.mxu0 0.0
        %1353 = vmatpush2.msra.mxu0 0.0
        %1354 = vmatprep.subr.mxu0 0.0
        %v1355 = vand.u32 %v565, 4294901760
        %1356 = vmatpush2.msra.mxu0 %v1355
        %1357 = vmatprep.subr.mxu0 0.0
        %v1358 = vand.u32 %v564, 4294901760
        %1359 = vmatpush2.msra.mxu0 %v1358
        %1360 = vmatprep.subr.mxu0 0.0
        %v1361 = vand.u32 %v563, 4294901760
        %1362 = vmatpush2.msra.mxu0 %v1361
        %1363 = vmatprep.subr.mxu0 0.0
        %v1364 = vand.u32 %v562, 4294901760
        %1365 = vmatpush2.msra.mxu0 %v1364
        %1366 = vmatprep.subr.mxu0 0.0
        %v1367 = vand.u32 %v561, 4294901760
        %1368 = vmatpush2.msra.mxu0 %v1367
        %1369 = vmatprep.subr.mxu0 0.0
        %v1370 = vand.u32 %v560, 4294901760
        %1371 = vmatpush2.msra.mxu0 %v1370
        %1372 = vmatprep.subr.mxu0 0.0
        %v1373 = vand.u32 %v559, 4294901760
        %1374 = vmatpush2.msra.mxu0 %v1373
        %1375 = vmatprep.subr.mxu0 0.0
        %v1376 = vand.u32 %v558, 4294901760
        %1377 = vmatpush2.msra.mxu0 %v1376
        %v1378 = vand.u32 %v632, 4294901760
        %v1379 = vsub.f32 %v632, %v1378
        %v1380 = vand.u32 %v1379, 4294901760
        %1381 = vmatprep.mubr.f32.mxu0 %v1380
        %v1382 = vand.u32 %v566, 4294901760
        %v1383 = vsub.f32 %v566, %v1382
        %v1384 = vand.u32 %v1383, 4294901760
        %1385 = vmatmul.mubr.f32.gmra.mxu0 %v1384
        %v1386 = vpop.f32.mrf.mxu0
        %v1387 = vadd.f32 %v1224, %v1386
        %v1388 = vpop.f32.mrf.mxu0
        %v1389 = vand.u32 %v635, 4294901760
        %v1390 = vsub.f32 %v635, %v1389
        %v1391 = vand.u32 %v1390, 4294901760
        %1392 = vmatprep.mubr.f32.mxu0 %v1391
        %v1393 = vand.u32 %v568, 4294901760
        %v1394 = vsub.f32 %v568, %v1393
        %v1395 = vand.u32 %v1394, 4294901760
        %1396 = vmatmul.mubr.f32.gmra.mxu0 %v1395
        %v1397 = vpop.f32.mrf.mxu0
        %v1398 = vadd.f32 %v1233, %v1397
        %v1399 = vpop.f32.mrf.mxu0
        %v1400 = vand.u32 %v638, 4294901760
        %v1401 = vsub.f32 %v638, %v1400
        %v1402 = vand.u32 %v1401, 4294901760
        %1403 = vmatprep.mubr.f32.mxu0 %v1402
        %v1404 = vand.u32 %v570, 4294901760
        %v1405 = vsub.f32 %v570, %v1404
        %v1406 = vand.u32 %v1405, 4294901760
        %1407 = vmatmul.mubr.f32.gmra.mxu0 %v1406
        %v1408 = vpop.f32.mrf.mxu0
        %v1409 = vadd.f32 %v1242, %v1408
        %v1410 = vpop.f32.mrf.mxu0
        %v1411 = vand.u32 %v641, 4294901760
        %v1412 = vsub.f32 %v641, %v1411
        %v1413 = vand.u32 %v1412, 4294901760
        %1414 = vmatprep.mubr.f32.mxu0 %v1413
        %v1415 = vand.u32 %v572, 4294901760
        %v1416 = vsub.f32 %v572, %v1415
        %v1417 = vand.u32 %v1416, 4294901760
        %1418 = vmatmul.mubr.f32.gmra.mxu0 %v1417
        %v1419 = vpop.f32.mrf.mxu0
        %v1420 = vadd.f32 %v1251, %v1419
        %v1421 = vpop.f32.mrf.mxu0
        %v1422 = vand.u32 %v644, 4294901760
        %v1423 = vsub.f32 %v644, %v1422
        %v1424 = vand.u32 %v1423, 4294901760
        %1425 = vmatprep.mubr.f32.mxu0 %v1424
        %v1426 = vand.u32 %v574, 4294901760
        %v1427 = vsub.f32 %v574, %v1426
        %v1428 = vand.u32 %v1427, 4294901760
        %1429 = vmatmul.mubr.f32.gmra.mxu0 %v1428
        %v1430 = vpop.f32.mrf.mxu0
        %v1431 = vadd.f32 %v1260, %v1430
        %v1432 = vpop.f32.mrf.mxu0
        %v1433 = vand.u32 %v647, 4294901760
        %v1434 = vsub.f32 %v647, %v1433
        %v1435 = vand.u32 %v1434, 4294901760
        %1436 = vmatprep.mubr.f32.mxu0 %v1435
        %v1437 = vand.u32 %v576, 4294901760
        %v1438 = vsub.f32 %v576, %v1437
        %v1439 = vand.u32 %v1438, 4294901760
        %1440 = vmatmul.mubr.f32.gmra.mxu0 %v1439
        %v1441 = vpop.f32.mrf.mxu0
        %v1442 = vadd.f32 %v1269, %v1441
        %v1443 = vpop.f32.mrf.mxu0
        %v1444 = vand.u32 %v650, 4294901760
        %v1445 = vsub.f32 %v650, %v1444
        %v1446 = vand.u32 %v1445, 4294901760
        %1447 = vmatprep.mubr.f32.mxu0 %v1446
        %v1448 = vand.u32 %v578, 4294901760
        %v1449 = vsub.f32 %v578, %v1448
        %v1450 = vand.u32 %v1449, 4294901760
        %1451 = vmatmul.mubr.f32.gmra.mxu0 %v1450
        %v1452 = vpop.f32.mrf.mxu0
        %v1453 = vadd.f32 %v1278, %v1452
        %v1454 = vpop.f32.mrf.mxu0
        %v1455 = vand.u32 %v653, 4294901760
        %v1456 = vsub.f32 %v653, %v1455
        %v1457 = vand.u32 %v1456, 4294901760
        %1458 = vmatprep.mubr.f32.mxu0 %v1457
        %v1459 = vand.u32 %v580, 4294901760
        %v1460 = vsub.f32 %v580, %v1459
        %v1461 = vand.u32 %v1460, 4294901760
        %1462 = vmatmul.mubr.f32.gmra.mxu0 %v1461
        %v1463 = vpop.f32.mrf.mxu0
        %v1464 = vadd.f32 %v1287, %v1463
        %v1465 = vpop.f32.mrf.mxu0
        %1466 = vdwg.mxu0
        %1467 = vmatprep.subr.mxu0 0.0
        %v1468 = vand.u32 %v515, 4294901760
        %v1469 = vsub.f32 %v515, %v1468
        %v1470 = vand.u32 %v1469, 4294901760
        %1471 = vmatpush1.msra.mxu0 %v1470
        %1472 = vmatprep.subr.mxu0 0.0
        %v1473 = vand.u32 %v514, 4294901760
        %v1474 = vsub.f32 %v514, %v1473
        %v1475 = vand.u32 %v1474, 4294901760
        %1476 = vmatpush1.msra.mxu0 %v1475
        %1477 = vmatprep.subr.mxu0 0.0
        %v1478 = vand.u32 %v513, 4294901760
        %v1479 = vsub.f32 %v513, %v1478
        %v1480 = vand.u32 %v1479, 4294901760
        %1481 = vmatpush1.msra.mxu0 %v1480
        %1482 = vmatprep.subr.mxu0 0.0
        %v1483 = vand.u32 %v512, 4294901760
        %v1484 = vsub.f32 %v512, %v1483
        %v1485 = vand.u32 %v1484, 4294901760
        %1486 = vmatpush1.msra.mxu0 %v1485
        %1487 = vmatprep.subr.mxu0 0.0
        %v1488 = vand.u32 %v511, 4294901760
        %v1489 = vsub.f32 %v511, %v1488
        %v1490 = vand.u32 %v1489, 4294901760
        %1491 = vmatpush1.msra.mxu0 %v1490
        %1492 = vmatprep.subr.mxu0 0.0
        %v1493 = vand.u32 %v510, 4294901760
        %v1494 = vsub.f32 %v510, %v1493
        %v1495 = vand.u32 %v1494, 4294901760
        %1496 = vmatpush1.msra.mxu0 %v1495
        %1497 = vmatprep.subr.mxu0 0.0
        %v1498 = vand.u32 %v509, 4294901760
        %v1499 = vsub.f32 %v509, %v1498
        %v1500 = vand.u32 %v1499, 4294901760
        %1501 = vmatpush1.msra.mxu0 %v1500
        %1502 = vmatprep.subr.mxu0 0.0
        %v1503 = vand.u32 %v508, 4294901760
        %v1504 = vsub.f32 %v508, %v1503
        %v1505 = vand.u32 %v1504, 4294901760
        %1506 = vmatpush1.msra.mxu0 %v1505
        %1507 = vmatprep.subr.mxu0 0.0
        %v1508 = vand.u32 %v540, 4294901760
        %v1509 = vsub.f32 %v540, %v1508
        %v1510 = vand.u32 %v1509, 4294901760
        %1511 = vmatpush1.msra.mxu0 %v1510
        %1512 = vmatprep.subr.mxu0 0.0
        %v1513 = vand.u32 %v539, 4294901760
        %v1514 = vsub.f32 %v539, %v1513
        %v1515 = vand.u32 %v1514, 4294901760
        %1516 = vmatpush1.msra.mxu0 %v1515
        %1517 = vmatprep.subr.mxu0 0.0
        %v1518 = vand.u32 %v538, 4294901760
        %v1519 = vsub.f32 %v538, %v1518
        %v1520 = vand.u32 %v1519, 4294901760
        %1521 = vmatpush1.msra.mxu0 %v1520
        %1522 = vmatprep.subr.mxu0 0.0
        %v1523 = vand.u32 %v537, 4294901760
        %v1524 = vsub.f32 %v537, %v1523
        %v1525 = vand.u32 %v1524, 4294901760
        %1526 = vmatpush1.msra.mxu0 %v1525
        %1527 = vmatprep.subr.mxu0 0.0
        %v1528 = vand.u32 %v536, 4294901760
        %v1529 = vsub.f32 %v536, %v1528
        %v1530 = vand.u32 %v1529, 4294901760
        %1531 = vmatpush1.msra.mxu0 %v1530
        %1532 = vmatprep.subr.mxu0 0.0
        %v1533 = vand.u32 %v535, 4294901760
        %v1534 = vsub.f32 %v535, %v1533
        %v1535 = vand.u32 %v1534, 4294901760
        %1536 = vmatpush1.msra.mxu0 %v1535
        %1537 = vmatprep.subr.mxu0 0.0
        %v1538 = vand.u32 %v534, 4294901760
        %v1539 = vsub.f32 %v534, %v1538
        %v1540 = vand.u32 %v1539, 4294901760
        %1541 = vmatpush1.msra.mxu0 %v1540
        %1542 = vmatprep.subr.mxu0 0.0
        %v1543 = vand.u32 %v533, 4294901760
        %v1544 = vsub.f32 %v533, %v1543
        %v1545 = vand.u32 %v1544, 4294901760
        %1546 = vmatpush1.msra.mxu0 %v1545
        %1547 = vmatprep.subr.mxu0 0.0
        %1548 = vmatpush2.msra.mxu0 0.0
        %1549 = vmatprep.subr.mxu0 0.0
        %1550 = vmatpush2.msra.mxu0 0.0
        %1551 = vmatprep.subr.mxu0 0.0
        %1552 = vmatpush2.msra.mxu0 0.0
        %1553 = vmatprep.subr.mxu0 0.0
        %1554 = vmatpush2.msra.mxu0 0.0
        %1555 = vmatprep.subr.mxu0 0.0
        %1556 = vmatpush2.msra.mxu0 0.0
        %1557 = vmatprep.subr.mxu0 0.0
        %1558 = vmatpush2.msra.mxu0 0.0
        %1559 = vmatprep.subr.mxu0 0.0
        %1560 = vmatpush2.msra.mxu0 0.0
        %1561 = vmatprep.subr.mxu0 0.0
        %1562 = vmatpush2.msra.mxu0 0.0
        %1563 = vmatprep.subr.mxu0 0.0
        %v1564 = vand.u32 %v565, 4294901760
        %v1565 = vsub.f32 %v565, %v1564
        %v1566 = vand.u32 %v1565, 4294901760
        %1567 = vmatpush2.msra.mxu0 %v1566
        %1568 = vmatprep.subr.mxu0 0.0
        %v1569 = vand.u32 %v564, 4294901760
        %v1570 = vsub.f32 %v564, %v1569
        %v1571 = vand.u32 %v1570, 4294901760
        %1572 = vmatpush2.msra.mxu0 %v1571
        %1573 = vmatprep.subr.mxu0 0.0
        %v1574 = vand.u32 %v563, 4294901760
        %v1575 = vsub.f32 %v563, %v1574
        %v1576 = vand.u32 %v1575, 4294901760
        %1577 = vmatpush2.msra.mxu0 %v1576
        %1578 = vmatprep.subr.mxu0 0.0
        %v1579 = vand.u32 %v562, 4294901760
        %v1580 = vsub.f32 %v562, %v1579
        %v1581 = vand.u32 %v1580, 4294901760
        %1582 = vmatpush2.msra.mxu0 %v1581
        %1583 = vmatprep.subr.mxu0 0.0
        %v1584 = vand.u32 %v561, 4294901760
        %v1585 = vsub.f32 %v561, %v1584
        %v1586 = vand.u32 %v1585, 4294901760
        %1587 = vmatpush2.msra.mxu0 %v1586
        %1588 = vmatprep.subr.mxu0 0.0
        %v1589 = vand.u32 %v560, 4294901760
        %v1590 = vsub.f32 %v560, %v1589
        %v1591 = vand.u32 %v1590, 4294901760
        %1592 = vmatpush2.msra.mxu0 %v1591
        %1593 = vmatprep.subr.mxu0 0.0
        %v1594 = vand.u32 %v559, 4294901760
        %v1595 = vsub.f32 %v559, %v1594
        %v1596 = vand.u32 %v1595, 4294901760
        %1597 = vmatpush2.msra.mxu0 %v1596
        %1598 = vmatprep.subr.mxu0 0.0
        %v1599 = vand.u32 %v558, 4294901760
        %v1600 = vsub.f32 %v558, %v1599
        %v1601 = vand.u32 %v1600, 4294901760
        %1602 = vmatpush2.msra.mxu0 %v1601
        %v1603 = vand.u32 %v632, 4294901760
        %1604 = vmatprep.mubr.f32.mxu0 %v1603
        %v1605 = vand.u32 %v566, 4294901760
        %1606 = vmatmul.mubr.f32.gmra.mxu0 %v1605
        %v1607 = vpop.f32.mrf.mxu0
        %v1608 = vadd.f32 %v1387, %v1607
        %v1609 = vpop.f32.mrf.mxu0
        %v1610 = vand.u32 %v635, 4294901760
        %1611 = vmatprep.mubr.f32.mxu0 %v1610
        %v1612 = vand.u32 %v568, 4294901760
        %1613 = vmatmul.mubr.f32.gmra.mxu0 %v1612
        %v1614 = vpop.f32.mrf.mxu0
        %v1615 = vadd.f32 %v1398, %v1614
        %v1616 = vpop.f32.mrf.mxu0
        %v1617 = vand.u32 %v638, 4294901760
        %1618 = vmatprep.mubr.f32.mxu0 %v1617
        %v1619 = vand.u32 %v570, 4294901760
        %1620 = vmatmul.mubr.f32.gmra.mxu0 %v1619
        %v1621 = vpop.f32.mrf.mxu0
        %v1622 = vadd.f32 %v1409, %v1621
        %v1623 = vpop.f32.mrf.mxu0
        %v1624 = vand.u32 %v641, 4294901760
        %1625 = vmatprep.mubr.f32.mxu0 %v1624
        %v1626 = vand.u32 %v572, 4294901760
        %1627 = vmatmul.mubr.f32.gmra.mxu0 %v1626
        %v1628 = vpop.f32.mrf.mxu0
        %v1629 = vadd.f32 %v1420, %v1628
        %v1630 = vpop.f32.mrf.mxu0
        %v1631 = vand.u32 %v644, 4294901760
        %1632 = vmatprep.mubr.f32.mxu0 %v1631
        %v1633 = vand.u32 %v574, 4294901760
        %1634 = vmatmul.mubr.f32.gmra.mxu0 %v1633
        %v1635 = vpop.f32.mrf.mxu0
        %v1636 = vadd.f32 %v1431, %v1635
        %v1637 = vpop.f32.mrf.mxu0
        %v1638 = vand.u32 %v647, 4294901760
        %1639 = vmatprep.mubr.f32.mxu0 %v1638
        %v1640 = vand.u32 %v576, 4294901760
        %1641 = vmatmul.mubr.f32.gmra.mxu0 %v1640
        %v1642 = vpop.f32.mrf.mxu0
        %v1643 = vadd.f32 %v1442, %v1642
        %v1644 = vpop.f32.mrf.mxu0
        %v1645 = vand.u32 %v650, 4294901760
        %1646 = vmatprep.mubr.f32.mxu0 %v1645
        %v1647 = vand.u32 %v578, 4294901760
        %1648 = vmatmul.mubr.f32.gmra.mxu0 %v1647
        %v1649 = vpop.f32.mrf.mxu0
        %v1650 = vadd.f32 %v1453, %v1649
        %v1651 = vpop.f32.mrf.mxu0
        %v1652 = vand.u32 %v653, 4294901760
        %1653 = vmatprep.mubr.f32.mxu0 %v1652
        %v1654 = vand.u32 %v580, 4294901760
        %1655 = vmatmul.mubr.f32.gmra.mxu0 %v1654
        %v1656 = vpop.f32.mrf.mxu0
        %v1657 = vadd.f32 %v1464, %v1656
        %v1658 = vpop.f32.mrf.mxu0
        %1659 = vdwg.mxu0
        %1660 = vmatprep.subr.mxu0 0.0
        %v1661 = vand.u32 %v515, 4294901760
        %1662 = vmatpush1.msra.mxu0 %v1661
        %1663 = vmatprep.subr.mxu0 0.0
        %v1664 = vand.u32 %v514, 4294901760
        %1665 = vmatpush1.msra.mxu0 %v1664
        %1666 = vmatprep.subr.mxu0 0.0
        %v1667 = vand.u32 %v513, 4294901760
        %1668 = vmatpush1.msra.mxu0 %v1667
        %1669 = vmatprep.subr.mxu0 0.0
        %v1670 = vand.u32 %v512, 4294901760
        %1671 = vmatpush1.msra.mxu0 %v1670
        %1672 = vmatprep.subr.mxu0 0.0
        %v1673 = vand.u32 %v511, 4294901760
        %1674 = vmatpush1.msra.mxu0 %v1673
        %1675 = vmatprep.subr.mxu0 0.0
        %v1676 = vand.u32 %v510, 4294901760
        %1677 = vmatpush1.msra.mxu0 %v1676
        %1678 = vmatprep.subr.mxu0 0.0
        %v1679 = vand.u32 %v509, 4294901760
        %1680 = vmatpush1.msra.mxu0 %v1679
        %1681 = vmatprep.subr.mxu0 0.0
        %v1682 = vand.u32 %v508, 4294901760
        %1683 = vmatpush1.msra.mxu0 %v1682
        %1684 = vmatprep.subr.mxu0 0.0
        %v1685 = vand.u32 %v540, 4294901760
        %1686 = vmatpush1.msra.mxu0 %v1685
        %1687 = vmatprep.subr.mxu0 0.0
        %v1688 = vand.u32 %v539, 4294901760
        %1689 = vmatpush1.msra.mxu0 %v1688
        %1690 = vmatprep.subr.mxu0 0.0
        %v1691 = vand.u32 %v538, 4294901760
        %1692 = vmatpush1.msra.mxu0 %v1691
        %1693 = vmatprep.subr.mxu0 0.0
        %v1694 = vand.u32 %v537, 4294901760
        %1695 = vmatpush1.msra.mxu0 %v1694
        %1696 = vmatprep.subr.mxu0 0.0
        %v1697 = vand.u32 %v536, 4294901760
        %1698 = vmatpush1.msra.mxu0 %v1697
        %1699 = vmatprep.subr.mxu0 0.0
        %v1700 = vand.u32 %v535, 4294901760
        %1701 = vmatpush1.msra.mxu0 %v1700
        %1702 = vmatprep.subr.mxu0 0.0
        %v1703 = vand.u32 %v534, 4294901760
        %1704 = vmatpush1.msra.mxu0 %v1703
        %1705 = vmatprep.subr.mxu0 0.0
        %v1706 = vand.u32 %v533, 4294901760
        %1707 = vmatpush1.msra.mxu0 %v1706
        %1708 = vmatprep.subr.mxu0 0.0
        %1709 = vmatpush2.msra.mxu0 0.0
        %1710 = vmatprep.subr.mxu0 0.0
        %1711 = vmatpush2.msra.mxu0 0.0
        %1712 = vmatprep.subr.mxu0 0.0
        %1713 = vmatpush2.msra.mxu0 0.0
        %1714 = vmatprep.subr.mxu0 0.0
        %1715 = vmatpush2.msra.mxu0 0.0
        %1716 = vmatprep.subr.mxu0 0.0
        %1717 = vmatpush2.msra.mxu0 0.0
        %1718 = vmatprep.subr.mxu0 0.0
        %1719 = vmatpush2.msra.mxu0 0.0
        %1720 = vmatprep.subr.mxu0 0.0
        %1721 = vmatpush2.msra.mxu0 0.0
        %1722 = vmatprep.subr.mxu0 0.0
        %1723 = vmatpush2.msra.mxu0 0.0
        %1724 = vmatprep.subr.mxu0 0.0
        %v1725 = vand.u32 %v565, 4294901760
        %1726 = vmatpush2.msra.mxu0 %v1725
        %1727 = vmatprep.subr.mxu0 0.0
        %v1728 = vand.u32 %v564, 4294901760
        %1729 = vmatpush2.msra.mxu0 %v1728
        %1730 = vmatprep.subr.mxu0 0.0
        %v1731 = vand.u32 %v563, 4294901760
        %1732 = vmatpush2.msra.mxu0 %v1731
        %1733 = vmatprep.subr.mxu0 0.0
        %v1734 = vand.u32 %v562, 4294901760
        %1735 = vmatpush2.msra.mxu0 %v1734
        %1736 = vmatprep.subr.mxu0 0.0
        %v1737 = vand.u32 %v561, 4294901760
        %1738 = vmatpush2.msra.mxu0 %v1737
        %1739 = vmatprep.subr.mxu0 0.0
        %v1740 = vand.u32 %v560, 4294901760
        %1741 = vmatpush2.msra.mxu0 %v1740
        %1742 = vmatprep.subr.mxu0 0.0
        %v1743 = vand.u32 %v559, 4294901760
        %1744 = vmatpush2.msra.mxu0 %v1743
        %1745 = vmatprep.subr.mxu0 0.0
        %v1746 = vand.u32 %v558, 4294901760
        %1747 = vmatpush2.msra.mxu0 %v1746
        %v1748 = vand.u32 %v632, 4294901760
        %1749 = vmatprep.mubr.f32.mxu0 %v1748
        %v1750 = vand.u32 %v566, 4294901760
        %1751 = vmatmul.mubr.f32.gmra.mxu0 %v1750
        %v1752 = vpop.f32.mrf.mxu0
        %v1753 = vadd.f32 %v1608, %v1752
        %v1754 = vpop.f32.mrf.mxu0
        %v1755 = vand.u32 %v635, 4294901760
        %1756 = vmatprep.mubr.f32.mxu0 %v1755
        %v1757 = vand.u32 %v568, 4294901760
        %1758 = vmatmul.mubr.f32.gmra.mxu0 %v1757
        %v1759 = vpop.f32.mrf.mxu0
        %v1760 = vadd.f32 %v1615, %v1759
        %v1761 = vpop.f32.mrf.mxu0
        %v1762 = vand.u32 %v638, 4294901760
        %1763 = vmatprep.mubr.f32.mxu0 %v1762
        %v1764 = vand.u32 %v570, 4294901760
        %1765 = vmatmul.mubr.f32.gmra.mxu0 %v1764
        %v1766 = vpop.f32.mrf.mxu0
        %v1767 = vadd.f32 %v1622, %v1766
        %v1768 = vpop.f32.mrf.mxu0
        %v1769 = vand.u32 %v641, 4294901760
        %1770 = vmatprep.mubr.f32.mxu0 %v1769
        %v1771 = vand.u32 %v572, 4294901760
        %1772 = vmatmul.mubr.f32.gmra.mxu0 %v1771
        %v1773 = vpop.f32.mrf.mxu0
        %v1774 = vadd.f32 %v1629, %v1773
        %v1775 = vpop.f32.mrf.mxu0
        %v1776 = vand.u32 %v644, 4294901760
        %1777 = vmatprep.mubr.f32.mxu0 %v1776
        %v1778 = vand.u32 %v574, 4294901760
        %1779 = vmatmul.mubr.f32.gmra.mxu0 %v1778
        %v1780 = vpop.f32.mrf.mxu0
        %v1781 = vadd.f32 %v1636, %v1780
        %v1782 = vpop.f32.mrf.mxu0
        %v1783 = vand.u32 %v647, 4294901760
        %1784 = vmatprep.mubr.f32.mxu0 %v1783
        %v1785 = vand.u32 %v576, 4294901760
        %1786 = vmatmul.mubr.f32.gmra.mxu0 %v1785
        %v1787 = vpop.f32.mrf.mxu0
        %v1788 = vadd.f32 %v1643, %v1787
        %v1789 = vpop.f32.mrf.mxu0
        %v1790 = vand.u32 %v650, 4294901760
        %1791 = vmatprep.mubr.f32.mxu0 %v1790
        %v1792 = vand.u32 %v578, 4294901760
        %1793 = vmatmul.mubr.f32.gmra.mxu0 %v1792
        %v1794 = vpop.f32.mrf.mxu0
        %v1795 = vadd.f32 %v1650, %v1794
        %v1796 = vpop.f32.mrf.mxu0
        %v1797 = vand.u32 %v653, 4294901760
        %1798 = vmatprep.mubr.f32.mxu0 %v1797
        %v1799 = vand.u32 %v580, 4294901760
        %1800 = vmatmul.mubr.f32.gmra.mxu0 %v1799
        %v1801 = vpop.f32.mrf.mxu0
        %v1802 = vadd.f32 %v1657, %v1801
        %v1803 = vpop.f32.mrf.mxu0
        %1804 = vdwg.mxu0
        %v1805 = vadd.f32 %v1753, %v1760
        %v1806 = vrot.slane %v1805, 4
        %v1807 = vadd.f32 %v1805, %v1806
        %v1808 = vrot.slane %v1807, 2
        %v1809 = vadd.f32 %v1807, %v1808
        %v1810 = vrot.slane %v1809, 1
        %v1811 = vadd.f32 %v1809, %v1810
        %v1812 = vadd.f32 %v1767, %v1774
        %v1813 = vrot.slane %v1812, 4
        %v1814 = vadd.f32 %v1812, %v1813
        %v1815 = vrot.slane %v1814, 2
        %v1816 = vadd.f32 %v1814, %v1815
        %v1817 = vrot.slane %v1816, 1
        %v1818 = vadd.f32 %v1816, %v1817
        %v1819 = vadd.f32 %v1781, %v1788
        %v1820 = vrot.slane %v1819, 4
        %v1821 = vadd.f32 %v1819, %v1820
        %v1822 = vrot.slane %v1821, 2
        %v1823 = vadd.f32 %v1821, %v1822
        %v1824 = vrot.slane %v1823, 1
        %v1825 = vadd.f32 %v1823, %v1824
        %v1826 = vadd.f32 %v1795, %v1802
        %v1827 = vrot.slane %v1826, 4
        %v1828 = vadd.f32 %v1826, %v1827
        %v1829 = vrot.slane %v1828, 2
        %v1830 = vadd.f32 %v1828, %v1829
        %v1831 = vrot.slane %v1830, 1
        %v1832 = vadd.f32 %v1830, %v1831
        %v1833 = vmul.f32 %v1811, %v399
        %v1834 = vmul.f32 %v1818, %v399
        %v1835 = vmul.f32 %v1825, %v399
        %v1836 = vmul.f32 %v1832, %v399
        %v1837 = vsub.f32 %v1753, %v1833
        %v1838 = vsub.f32 %v1760, %v1833
        %v1839 = vsub.f32 %v1767, %v1834
        %v1840 = vsub.f32 %v1774, %v1834
        %v1841 = vsub.f32 %v1781, %v1835
        %v1842 = vsub.f32 %v1788, %v1835
        %v1843 = vsub.f32 %v1795, %v1836
        %v1844 = vsub.f32 %v1802, %v1836
        %v1845 = vmul.f32 %v1837, %v1837
        %v1846 = vmul.f32 %v1838, %v1838
        %v1847 = vmul.f32 %v1839, %v1839
        %v1848 = vmul.f32 %v1840, %v1840
        %v1849 = vmul.f32 %v1841, %v1841
        %v1850 = vmul.f32 %v1842, %v1842
        %v1851 = vmul.f32 %v1843, %v1843
        %v1852 = vmul.f32 %v1844, %v1844
        %v1853 = vadd.f32 %v1845, %v1846
        %v1854 = vrot.slane %v1853, 4
        %v1855 = vadd.f32 %v1853, %v1854
        %v1856 = vrot.slane %v1855, 2
        %v1857 = vadd.f32 %v1855, %v1856
        %v1858 = vrot.slane %v1857, 1
        %v1859 = vadd.f32 %v1857, %v1858
        %v1860 = vadd.f32 %v1847, %v1848
        %v1861 = vrot.slane %v1860, 4
        %v1862 = vadd.f32 %v1860, %v1861
        %v1863 = vrot.slane %v1862, 2
        %v1864 = vadd.f32 %v1862, %v1863
        %v1865 = vrot.slane %v1864, 1
        %v1866 = vadd.f32 %v1864, %v1865
        %v1867 = vadd.f32 %v1849, %v1850
        %v1868 = vrot.slane %v1867, 4
        %v1869 = vadd.f32 %v1867, %v1868
        %v1870 = vrot.slane %v1869, 2
        %v1871 = vadd.f32 %v1869, %v1870
        %v1872 = vrot.slane %v1871, 1
        %v1873 = vadd.f32 %v1871, %v1872
        %v1874 = vadd.f32 %v1851, %v1852
        %v1875 = vrot.slane %v1874, 4
        %v1876 = vadd.f32 %v1874, %v1875
        %v1877 = vrot.slane %v1876, 2
        %v1878 = vadd.f32 %v1876, %v1877
        %v1879 = vrot.slane %v1878, 1
        %v1880 = vadd.f32 %v1878, %v1879
        %v1881 = vmul.f32 %v1859, %v399
        %v1882 = vmul.f32 %v1866, %v399
        %v1883 = vmul.f32 %v1873, %v399
        %v1884 = vmul.f32 %v1880, %v399
        %v1885 = vadd.f32 %v1881, 1e-05
        %v1886 = vadd.f32 %v1882, 1e-05
        %v1887 = vadd.f32 %v1883, 1e-05
        %v1888 = vadd.f32 %v1884, 1e-05
        %v1889 = vrsqrt.pop %v1885
        %v1890 = vrsqrt.pop %v1886
        %v1891 = vrsqrt.pop %v1887
        %v1892 = vrsqrt.pop %v1888
        %v1893 = vmul.f32 %v1837, %v1889
        %v1894 = vmul.f32 %v1838, %v1889
        %v1895 = vmul.f32 %v1839, %v1890
        %v1896 = vmul.f32 %v1840, %v1890
        %v1897 = vmul.f32 %v1841, %v1891
        %v1898 = vmul.f32 %v1842, %v1891
        %v1899 = vmul.f32 %v1843, %v1892
        %v1900 = vmul.f32 %v1844, %v1892
        %v1901 = vld [vmem:[%s3] sm:$0xff]
        %v1902 = vld [vmem:[%s3 + $0x8] sm:$0xff]
        %1904 = vset.pattern.permute.xlu0 0
        %1905 = vperm.xlu0 %1904, %v1901
        %v1906 = vpop.permute.xlu0 %1905
        %1909 = vset.pattern.permute.xlu0 0
        %1910 = vperm.xlu0 %1909, %v1902
        %v1911 = vpop.permute.xlu0 %1910
        %v1913 = vmul.f32 %v1893, %v1906
        %v1914 = vmul.f32 %v1894, %v1911
        %v1915 = vmul.f32 %v1895, %v1906
        %v1916 = vmul.f32 %v1896, %v1911
        %v1917 = vmul.f32 %v1897, %v1906
        %v1918 = vmul.f32 %v1898, %v1911
        %v1919 = vmul.f32 %v1899, %v1906
        %v1920 = vmul.f32 %v1900, %v1911
        %v1921 = vld [vmem:[%s4] sm:$0xff]
        %v1922 = vld [vmem:[%s4 + $0x8] sm:$0xff]
        %1924 = vset.pattern.permute.xlu0 0
        %1925 = vperm.xlu0 %1924, %v1921
        %v1926 = vpop.permute.xlu0 %1925
        %1929 = vset.pattern.permute.xlu0 0
        %1930 = vperm.xlu0 %1929, %v1922
        %v1931 = vpop.permute.xlu0 %1930
        %v1933 = vadd.f32 %v1913, %v1926
        %v1934 = vadd.f32 %v1914, %v1931
        %v1935 = vadd.f32 %v1915, %v1926
        %v1936 = vadd.f32 %v1916, %v1931
        %v1937 = vadd.f32 %v1917, %v1926
        %v1938 = vadd.f32 %v1918, %v1931
        %v1939 = vadd.f32 %v1919, %v1926
        %v1940 = vadd.f32 %v1920, %v1931
        %v1941 = vmax.f32 %v1933, 0.0
        %v1942 = vmax.f32 %v1934, 0.0
        %v1943 = vmax.f32 %v1935, 0.0
        %v1944 = vmax.f32 %v1936, 0.0
        %v1945 = vmax.f32 %v1937, 0.0
        %v1946 = vmax.f32 %v1938, 0.0
        %v1947 = vmax.f32 %v1939, 0.0
        %v1948 = vmax.f32 %v1940, 0.0
        %1949 = vrot.lane.b32.xlu0 %v1941, 1
        %v1950 = vpop.permute.xlu0 %1949
        %1951 = vrot.lane.b32.xlu0 %v1942, 1
        %v1952 = vpop.permute.xlu0 %1951
        %1953 = vrot.lane.b32.xlu0 %v1943, 1
        %v1954 = vpop.permute.xlu0 %1953
        %1955 = vrot.lane.b32.xlu0 %v1944, 1
        %v1956 = vpop.permute.xlu0 %1955
        %1957 = vrot.lane.b32.xlu0 %v1945, 1
        %v1958 = vpop.permute.xlu0 %1957
        %1959 = vrot.lane.b32.xlu0 %v1946, 1
        %v1960 = vpop.permute.xlu0 %1959
        %1961 = vrot.lane.b32.xlu0 %v1947, 1
        %v1962 = vpop.permute.xlu0 %1961
        %1963 = vrot.lane.b32.xlu0 %v1948, 1
        %v1964 = vpop.permute.xlu0 %1963
        %v1965 = vsel %vm532, %v1950, 0.0
        %v1966 = vsel %vm532, %v1952, 0.0
        %v1967 = vsel %vm532, %v1954, 0.0
        %v1968 = vsel %vm532, %v1956, 0.0
        %v1969 = vsel %vm532, %v1958, 0.0
        %v1970 = vsel %vm532, %v1960, 0.0
        %v1971 = vsel %vm532, %v1962, 0.0
        %v1972 = vsel %vm532, %v1964, 0.0
        %1973 = vrot.lane.b32.xlu0 %v1941, 127
        %v1974 = vpop.permute.xlu0 %1973
        %1975 = vrot.lane.b32.xlu0 %v1942, 127
        %v1976 = vpop.permute.xlu0 %1975
        %1977 = vrot.lane.b32.xlu0 %v1943, 127
        %v1978 = vpop.permute.xlu0 %1977
        %1979 = vrot.lane.b32.xlu0 %v1944, 127
        %v1980 = vpop.permute.xlu0 %1979
        %1981 = vrot.lane.b32.xlu0 %v1945, 127
        %v1982 = vpop.permute.xlu0 %1981
        %1983 = vrot.lane.b32.xlu0 %v1946, 127
        %v1984 = vpop.permute.xlu0 %1983
        %1985 = vrot.lane.b32.xlu0 %v1947, 127
        %v1986 = vpop.permute.xlu0 %1985
        %1987 = vrot.lane.b32.xlu0 %v1948, 127
        %v1988 = vpop.permute.xlu0 %1987
        %v1989 = vsel %vm557, %v1974, 0.0
        %v1990 = vsel %vm557, %v1976, 0.0
        %v1991 = vsel %vm557, %v1978, 0.0
        %v1992 = vsel %vm557, %v1980, 0.0
        %v1993 = vsel %vm557, %v1982, 0.0
        %v1994 = vsel %vm557, %v1984, 0.0
        %v1995 = vsel %vm557, %v1986, 0.0
        %v1996 = vsel %vm557, %v1988, 0.0
        %v1997 = vld [vmem:[#allocation5] sm:$0xff]
        %v1998 = vld [vmem:[#allocation5 + $0x8] sm:$0xff]
        %v1999 = vld [vmem:[#allocation5 + $0x10] sm:$0xff]
        %v2000 = vld [vmem:[#allocation5 + $0x18] sm:$0xff]
        %v2001 = vld [vmem:[#allocation5 + $0x20] sm:$0xff]
        %v2002 = vld [vmem:[#allocation5 + $0x28] sm:$0xff]
        %v2003 = vld [vmem:[#allocation5 + $0x30] sm:$0xff]
        %v2004 = vld [vmem:[#allocation5 + $0x38] sm:$0xff]
        %v2005 = vld [vmem:[#allocation5 + $0x40] sm:$0xff]
        %v2006 = vld [vmem:[#allocation5 + $0x48] sm:$0xff]
        %v2007 = vld [vmem:[#allocation5 + $0x50] sm:$0xff]
        %v2008 = vld [vmem:[#allocation5 + $0x58] sm:$0xff]
        %v2009 = vld [vmem:[#allocation5 + $0x60] sm:$0xff]
        %v2010 = vld [vmem:[#allocation5 + $0x68] sm:$0xff]
        %v2011 = vld [vmem:[#allocation5 + $0x70] sm:$0xff]
        %v2012 = vld [vmem:[#allocation5 + $0x78] sm:$0xff]
        %v2013 = vld [vmem:[%s8] sm:$0xff]
        %v2014 = vld [vmem:[%s8 + $0x8] sm:$0xff]
        %v2015 = vld [vmem:[%s8 + $0x10] sm:$0xff]
        %v2016 = vld [vmem:[%s8 + $0x18] sm:$0xff]
        %v2017 = vld [vmem:[%s8 + $0x20] sm:$0xff]
        %v2018 = vld [vmem:[%s8 + $0x28] sm:$0xff]
        %v2019 = vld [vmem:[%s8 + $0x30] sm:$0xff]
        %v2020 = vld [vmem:[%s8 + $0x38] sm:$0xff]
        %2022 = vset.pattern.permute.xlu0 0
        %2023 = vperm.xlu0 %2022, %v2013
        %v2024 = vpop.permute.xlu0 %2023
        %2027 = vset.pattern.permute.xlu0 0
        %2028 = vperm.xlu0 %2027, %v2014
        %v2029 = vpop.permute.xlu0 %2028
        %2032 = vset.pattern.permute.xlu0 0
        %2033 = vperm.xlu0 %2032, %v2015
        %v2034 = vpop.permute.xlu0 %2033
        %2037 = vset.pattern.permute.xlu0 0
        %2038 = vperm.xlu0 %2037, %v2016
        %v2039 = vpop.permute.xlu0 %2038
        %2042 = vset.pattern.permute.xlu0 0
        %2043 = vperm.xlu0 %2042, %v2017
        %v2044 = vpop.permute.xlu0 %2043
        %2047 = vset.pattern.permute.xlu0 0
        %2048 = vperm.xlu0 %2047, %v2018
        %v2049 = vpop.permute.xlu0 %2048
        %2052 = vset.pattern.permute.xlu0 0
        %2053 = vperm.xlu0 %2052, %v2019
        %v2054 = vpop.permute.xlu0 %2053
        %2057 = vset.pattern.permute.xlu0 0
        %2058 = vperm.xlu0 %2057, %v2020
        %v2059 = vpop.permute.xlu0 %2058
        %v2062 = vsel %vm630, %v1998, 0
        %v2065 = vsel %vm630, %v2000, 0
        %v2068 = vsel %vm630, %v2002, 0
        %v2071 = vsel %vm630, %v2004, 0
        %v2074 = vsel %vm630, %v2006, 0
        %v2077 = vsel %vm630, %v2008, 0
        %v2080 = vsel %vm630, %v2010, 0
        %v2083 = vsel %vm630, %v2012, 0
        %2085 = vmatprep.subr.mxu0 0.0
        %v2086 = vand.u32 %v1948, 4294901760
        %2087 = vmatpush1.msra.mxu0 %v2086
        %2088 = vmatprep.subr.mxu0 0.0
        %v2089 = vand.u32 %v1947, 4294901760
        %2090 = vmatpush1.msra.mxu0 %v2089
        %2091 = vmatprep.subr.mxu0 0.0
        %v2092 = vand.u32 %v1946, 4294901760
        %2093 = vmatpush1.msra.mxu0 %v2092
        %2094 = vmatprep.subr.mxu0 0.0
        %v2095 = vand.u32 %v1945, 4294901760
        %2096 = vmatpush1.msra.mxu0 %v2095
        %2097 = vmatprep.subr.mxu0 0.0
        %v2098 = vand.u32 %v1944, 4294901760
        %2099 = vmatpush1.msra.mxu0 %v2098
        %2100 = vmatprep.subr.mxu0 0.0
        %v2101 = vand.u32 %v1943, 4294901760
        %2102 = vmatpush1.msra.mxu0 %v2101
        %2103 = vmatprep.subr.mxu0 0.0
        %v2104 = vand.u32 %v1942, 4294901760
        %2105 = vmatpush1.msra.mxu0 %v2104
        %2106 = vmatprep.subr.mxu0 0.0
        %v2107 = vand.u32 %v1941, 4294901760
        %2108 = vmatpush1.msra.mxu0 %v2107
        %2109 = vmatprep.subr.mxu0 0.0
        %v2110 = vand.u32 %v1972, 4294901760
        %2111 = vmatpush1.msra.mxu0 %v2110
        %2112 = vmatprep.subr.mxu0 0.0
        %v2113 = vand.u32 %v1971, 4294901760
        %2114 = vmatpush1.msra.mxu0 %v2113
        %2115 = vmatprep.subr.mxu0 0.0
        %v2116 = vand.u32 %v1970, 4294901760
        %2117 = vmatpush1.msra.mxu0 %v2116
        %2118 = vmatprep.subr.mxu0 0.0
        %v2119 = vand.u32 %v1969, 4294901760
        %2120 = vmatpush1.msra.mxu0 %v2119
        %2121 = vmatprep.subr.mxu0 0.0
        %v2122 = vand.u32 %v1968, 4294901760
        %2123 = vmatpush1.msra.mxu0 %v2122
        %2124 = vmatprep.subr.mxu0 0.0
        %v2125 = vand.u32 %v1967, 4294901760
        %2126 = vmatpush1.msra.mxu0 %v2125
        %2127 = vmatprep.subr.mxu0 0.0
        %v2128 = vand.u32 %v1966, 4294901760
        %2129 = vmatpush1.msra.mxu0 %v2128
        %2130 = vmatprep.subr.mxu0 0.0
        %v2131 = vand.u32 %v1965, 4294901760
        %2132 = vmatpush1.msra.mxu0 %v2131
        %2133 = vmatprep.subr.mxu0 0.0
        %2134 = vmatpush2.msra.mxu0 0.0
        %2135 = vmatprep.subr.mxu0 0.0
        %2136 = vmatpush2.msra.mxu0 0.0
        %2137 = vmatprep.subr.mxu0 0.0
        %2138 = vmatpush2.msra.mxu0 0.0
        %2139 = vmatprep.subr.mxu0 0.0
        %2140 = vmatpush2.msra.mxu0 0.0
        %2141 = vmatprep.subr.mxu0 0.0
        %2142 = vmatpush2.msra.mxu0 0.0
        %2143 = vmatprep.subr.mxu0 0.0
        %2144 = vmatpush2.msra.mxu0 0.0
        %2145 = vmatprep.subr.mxu0 0.0
        %2146 = vmatpush2.msra.mxu0 0.0
        %2147 = vmatprep.subr.mxu0 0.0
        %2148 = vmatpush2.msra.mxu0 0.0
        %2149 = vmatprep.subr.mxu0 0.0
        %v2150 = vand.u32 %v1996, 4294901760
        %2151 = vmatpush2.msra.mxu0 %v2150
        %2152 = vmatprep.subr.mxu0 0.0
        %v2153 = vand.u32 %v1995, 4294901760
        %2154 = vmatpush2.msra.mxu0 %v2153
        %2155 = vmatprep.subr.mxu0 0.0
        %v2156 = vand.u32 %v1994, 4294901760
        %2157 = vmatpush2.msra.mxu0 %v2156
        %2158 = vmatprep.subr.mxu0 0.0
        %v2159 = vand.u32 %v1993, 4294901760
        %2160 = vmatpush2.msra.mxu0 %v2159
        %2161 = vmatprep.subr.mxu0 0.0
        %v2162 = vand.u32 %v1992, 4294901760
        %2163 = vmatpush2.msra.mxu0 %v2162
        %2164 = vmatprep.subr.mxu0 0.0
        %v2165 = vand.u32 %v1991, 4294901760
        %2166 = vmatpush2.msra.mxu0 %v2165
        %2167 = vmatprep.subr.mxu0 0.0
        %v2168 = vand.u32 %v1990, 4294901760
        %2169 = vmatpush2.msra.mxu0 %v2168
        %2170 = vmatprep.subr.mxu0 0.0
        %v2171 = vand.u32 %v1989, 4294901760
        %2172 = vmatpush2.msra.mxu0 %v2171
        %v2173 = vand.u32 %v2062, 4294901760
        %v2174 = vsub.f32 %v2062, %v2173
        %v2175 = vand.u32 %v2174, 4294901760
        %v2176 = vsub.f32 %v2174, %v2175
        %v2177 = vand.u32 %v2176, 4294901760
        %2178 = vmatprep.mubr.f32.mxu0 %v2177
        %v2179 = vand.u32 %v1997, 4294901760
        %v2180 = vsub.f32 %v1997, %v2179
        %v2181 = vand.u32 %v2180, 4294901760
        %v2182 = vsub.f32 %v2180, %v2181
        %v2183 = vand.u32 %v2182, 4294901760
        %2184 = vmatmul.mubr.f32.gmra.mxu0 %v2183
        %v2185 = vpop.f32.mrf.mxu0
        %v2186 = vadd.f32 %v2024, %v2185
        %v2187 = vpop.f32.mrf.mxu0
        %v2188 = vand.u32 %v2065, 4294901760
        %v2189 = vsub.f32 %v2065, %v2188
        %v2190 = vand.u32 %v2189, 4294901760
        %v2191 = vsub.f32 %v2189, %v2190
        %v2192 = vand.u32 %v2191, 4294901760
        %2193 = vmatprep.mubr.f32.mxu0 %v2192
        %v2194 = vand.u32 %v1999, 4294901760
        %v2195 = vsub.f32 %v1999, %v2194
        %v2196 = vand.u32 %v2195, 4294901760
        %v2197 = vsub.f32 %v2195, %v2196
        %v2198 = vand.u32 %v2197, 4294901760
        %2199 = vmatmul.mubr.f32.gmra.mxu0 %v2198
        %v2200 = vpop.f32.mrf.mxu0
        %v2201 = vadd.f32 %v2029, %v2200
        %v2202 = vpop.f32.mrf.mxu0
        %v2203 = vand.u32 %v2068, 4294901760
        %v2204 = vsub.f32 %v2068, %v2203
        %v2205 = vand.u32 %v2204, 4294901760
        %v2206 = vsub.f32 %v2204, %v2205
        %v2207 = vand.u32 %v2206, 4294901760
        %2208 = vmatprep.mubr.f32.mxu0 %v2207
        %v2209 = vand.u32 %v2001, 4294901760
        %v2210 = vsub.f32 %v2001, %v2209
        %v2211 = vand.u32 %v2210, 4294901760
        %v2212 = vsub.f32 %v2210, %v2211
        %v2213 = vand.u32 %v2212, 4294901760
        %2214 = vmatmul.mubr.f32.gmra.mxu0 %v2213
        %v2215 = vpop.f32.mrf.mxu0
        %v2216 = vadd.f32 %v2034, %v2215
        %v2217 = vpop.f32.mrf.mxu0
        %v2218 = vand.u32 %v2071, 4294901760
        %v2219 = vsub.f32 %v2071, %v2218
        %v2220 = vand.u32 %v2219, 4294901760
        %v2221 = vsub.f32 %v2219, %v2220
        %v2222 = vand.u32 %v2221, 4294901760
        %2223 = vmatprep.mubr.f32.mxu0 %v2222
        %v2224 = vand.u32 %v2003, 4294901760
        %v2225 = vsub.f32 %v2003, %v2224
        %v2226 = vand.u32 %v2225, 4294901760
        %v2227 = vsub.f32 %v2225, %v2226
        %v2228 = vand.u32 %v2227, 4294901760
        %2229 = vmatmul.mubr.f32.gmra.mxu0 %v2228
        %v2230 = vpop.f32.mrf.mxu0
        %v2231 = vadd.f32 %v2039, %v2230
        %v2232 = vpop.f32.mrf.mxu0
        %v2233 = vand.u32 %v2074, 4294901760
        %v2234 = vsub.f32 %v2074, %v2233
        %v2235 = vand.u32 %v2234, 4294901760
        %v2236 = vsub.f32 %v2234, %v2235
        %v2237 = vand.u32 %v2236, 4294901760
        %2238 = vmatprep.mubr.f32.mxu0 %v2237
        %v2239 = vand.u32 %v2005, 4294901760
        %v2240 = vsub.f32 %v2005, %v2239
        %v2241 = vand.u32 %v2240, 4294901760
        %v2242 = vsub.f32 %v2240, %v2241
        %v2243 = vand.u32 %v2242, 4294901760
        %2244 = vmatmul.mubr.f32.gmra.mxu0 %v2243
        %v2245 = vpop.f32.mrf.mxu0
        %v2246 = vadd.f32 %v2044, %v2245
        %v2247 = vpop.f32.mrf.mxu0
        %v2248 = vand.u32 %v2077, 4294901760
        %v2249 = vsub.f32 %v2077, %v2248
        %v2250 = vand.u32 %v2249, 4294901760
        %v2251 = vsub.f32 %v2249, %v2250
        %v2252 = vand.u32 %v2251, 4294901760
        %2253 = vmatprep.mubr.f32.mxu0 %v2252
        %v2254 = vand.u32 %v2007, 4294901760
        %v2255 = vsub.f32 %v2007, %v2254
        %v2256 = vand.u32 %v2255, 4294901760
        %v2257 = vsub.f32 %v2255, %v2256
        %v2258 = vand.u32 %v2257, 4294901760
        %2259 = vmatmul.mubr.f32.gmra.mxu0 %v2258
        %v2260 = vpop.f32.mrf.mxu0
        %v2261 = vadd.f32 %v2049, %v2260
        %v2262 = vpop.f32.mrf.mxu0
        %v2263 = vand.u32 %v2080, 4294901760
        %v2264 = vsub.f32 %v2080, %v2263
        %v2265 = vand.u32 %v2264, 4294901760
        %v2266 = vsub.f32 %v2264, %v2265
        %v2267 = vand.u32 %v2266, 4294901760
        %2268 = vmatprep.mubr.f32.mxu0 %v2267
        %v2269 = vand.u32 %v2009, 4294901760
        %v2270 = vsub.f32 %v2009, %v2269
        %v2271 = vand.u32 %v2270, 4294901760
        %v2272 = vsub.f32 %v2270, %v2271
        %v2273 = vand.u32 %v2272, 4294901760
        %2274 = vmatmul.mubr.f32.gmra.mxu0 %v2273
        %v2275 = vpop.f32.mrf.mxu0
        %v2276 = vadd.f32 %v2054, %v2275
        %v2277 = vpop.f32.mrf.mxu0
        %v2278 = vand.u32 %v2083, 4294901760
        %v2279 = vsub.f32 %v2083, %v2278
        %v2280 = vand.u32 %v2279, 4294901760
        %v2281 = vsub.f32 %v2279, %v2280
        %v2282 = vand.u32 %v2281, 4294901760
        %2283 = vmatprep.mubr.f32.mxu0 %v2282
        %v2284 = vand.u32 %v2011, 4294901760
        %v2285 = vsub.f32 %v2011, %v2284
        %v2286 = vand.u32 %v2285, 4294901760
        %v2287 = vsub.f32 %v2285, %v2286
        %v2288 = vand.u32 %v2287, 4294901760
        %2289 = vmatmul.mubr.f32.gmra.mxu0 %v2288
        %v2290 = vpop.f32.mrf.mxu0
        %v2291 = vadd.f32 %v2059, %v2290
        %v2292 = vpop.f32.mrf.mxu0
        %2293 = vdwg.mxu0
        %2294 = vmatprep.subr.mxu0 0.0
        %v2295 = vand.u32 %v1948, 4294901760
        %v2296 = vsub.f32 %v1948, %v2295
        %v2297 = vand.u32 %v2296, 4294901760
        %v2298 = vsub.f32 %v2296, %v2297
        %v2299 = vand.u32 %v2298, 4294901760
        %2300 = vmatpush1.msra.mxu0 %v2299
        %2301 = vmatprep.subr.mxu0 0.0
        %v2302 = vand.u32 %v1947, 4294901760
        %v2303 = vsub.f32 %v1947, %v2302
        %v2304 = vand.u32 %v2303, 4294901760
        %v2305 = vsub.f32 %v2303, %v2304
        %v2306 = vand.u32 %v2305, 4294901760
        %2307 = vmatpush1.msra.mxu0 %v2306
        %2308 = vmatprep.subr.mxu0 0.0
        %v2309 = vand.u32 %v1946, 4294901760
        %v2310 = vsub.f32 %v1946, %v2309
        %v2311 = vand.u32 %v2310, 4294901760
        %v2312 = vsub.f32 %v2310, %v2311
        %v2313 = vand.u32 %v2312, 4294901760
        %2314 = vmatpush1.msra.mxu0 %v2313
        %2315 = vmatprep.subr.mxu0 0.0
        %v2316 = vand.u32 %v1945, 4294901760
        %v2317 = vsub.f32 %v1945, %v2316
        %v2318 = vand.u32 %v2317, 4294901760
        %v2319 = vsub.f32 %v2317, %v2318
        %v2320 = vand.u32 %v2319, 4294901760
        %2321 = vmatpush1.msra.mxu0 %v2320
        %2322 = vmatprep.subr.mxu0 0.0
        %v2323 = vand.u32 %v1944, 4294901760
        %v2324 = vsub.f32 %v1944, %v2323
        %v2325 = vand.u32 %v2324, 4294901760
        %v2326 = vsub.f32 %v2324, %v2325
        %v2327 = vand.u32 %v2326, 4294901760
        %2328 = vmatpush1.msra.mxu0 %v2327
        %2329 = vmatprep.subr.mxu0 0.0
        %v2330 = vand.u32 %v1943, 4294901760
        %v2331 = vsub.f32 %v1943, %v2330
        %v2332 = vand.u32 %v2331, 4294901760
        %v2333 = vsub.f32 %v2331, %v2332
        %v2334 = vand.u32 %v2333, 4294901760
        %2335 = vmatpush1.msra.mxu0 %v2334
        %2336 = vmatprep.subr.mxu0 0.0
        %v2337 = vand.u32 %v1942, 4294901760
        %v2338 = vsub.f32 %v1942, %v2337
        %v2339 = vand.u32 %v2338, 4294901760
        %v2340 = vsub.f32 %v2338, %v2339
        %v2341 = vand.u32 %v2340, 4294901760
        %2342 = vmatpush1.msra.mxu0 %v2341
        %2343 = vmatprep.subr.mxu0 0.0
        %v2344 = vand.u32 %v1941, 4294901760
        %v2345 = vsub.f32 %v1941, %v2344
        %v2346 = vand.u32 %v2345, 4294901760
        %v2347 = vsub.f32 %v2345, %v2346
        %v2348 = vand.u32 %v2347, 4294901760
        %2349 = vmatpush1.msra.mxu0 %v2348
        %2350 = vmatprep.subr.mxu0 0.0
        %v2351 = vand.u32 %v1972, 4294901760
        %v2352 = vsub.f32 %v1972, %v2351
        %v2353 = vand.u32 %v2352, 4294901760
        %v2354 = vsub.f32 %v2352, %v2353
        %v2355 = vand.u32 %v2354, 4294901760
        %2356 = vmatpush1.msra.mxu0 %v2355
        %2357 = vmatprep.subr.mxu0 0.0
        %v2358 = vand.u32 %v1971, 4294901760
        %v2359 = vsub.f32 %v1971, %v2358
        %v2360 = vand.u32 %v2359, 4294901760
        %v2361 = vsub.f32 %v2359, %v2360
        %v2362 = vand.u32 %v2361, 4294901760
        %2363 = vmatpush1.msra.mxu0 %v2362
        %2364 = vmatprep.subr.mxu0 0.0
        %v2365 = vand.u32 %v1970, 4294901760
        %v2366 = vsub.f32 %v1970, %v2365
        %v2367 = vand.u32 %v2366, 4294901760
        %v2368 = vsub.f32 %v2366, %v2367
        %v2369 = vand.u32 %v2368, 4294901760
        %2370 = vmatpush1.msra.mxu0 %v2369
        %2371 = vmatprep.subr.mxu0 0.0
        %v2372 = vand.u32 %v1969, 4294901760
        %v2373 = vsub.f32 %v1969, %v2372
        %v2374 = vand.u32 %v2373, 4294901760
        %v2375 = vsub.f32 %v2373, %v2374
        %v2376 = vand.u32 %v2375, 4294901760
        %2377 = vmatpush1.msra.mxu0 %v2376
        %2378 = vmatprep.subr.mxu0 0.0
        %v2379 = vand.u32 %v1968, 4294901760
        %v2380 = vsub.f32 %v1968, %v2379
        %v2381 = vand.u32 %v2380, 4294901760
        %v2382 = vsub.f32 %v2380, %v2381
        %v2383 = vand.u32 %v2382, 4294901760
        %2384 = vmatpush1.msra.mxu0 %v2383
        %2385 = vmatprep.subr.mxu0 0.0
        %v2386 = vand.u32 %v1967, 4294901760
        %v2387 = vsub.f32 %v1967, %v2386
        %v2388 = vand.u32 %v2387, 4294901760
        %v2389 = vsub.f32 %v2387, %v2388
        %v2390 = vand.u32 %v2389, 4294901760
        %2391 = vmatpush1.msra.mxu0 %v2390
        %2392 = vmatprep.subr.mxu0 0.0
        %v2393 = vand.u32 %v1966, 4294901760
        %v2394 = vsub.f32 %v1966, %v2393
        %v2395 = vand.u32 %v2394, 4294901760
        %v2396 = vsub.f32 %v2394, %v2395
        %v2397 = vand.u32 %v2396, 4294901760
        %2398 = vmatpush1.msra.mxu0 %v2397
        %2399 = vmatprep.subr.mxu0 0.0
        %v2400 = vand.u32 %v1965, 4294901760
        %v2401 = vsub.f32 %v1965, %v2400
        %v2402 = vand.u32 %v2401, 4294901760
        %v2403 = vsub.f32 %v2401, %v2402
        %v2404 = vand.u32 %v2403, 4294901760
        %2405 = vmatpush1.msra.mxu0 %v2404
        %2406 = vmatprep.subr.mxu0 0.0
        %2407 = vmatpush2.msra.mxu0 0.0
        %2408 = vmatprep.subr.mxu0 0.0
        %2409 = vmatpush2.msra.mxu0 0.0
        %2410 = vmatprep.subr.mxu0 0.0
        %2411 = vmatpush2.msra.mxu0 0.0
        %2412 = vmatprep.subr.mxu0 0.0
        %2413 = vmatpush2.msra.mxu0 0.0
        %2414 = vmatprep.subr.mxu0 0.0
        %2415 = vmatpush2.msra.mxu0 0.0
        %2416 = vmatprep.subr.mxu0 0.0
        %2417 = vmatpush2.msra.mxu0 0.0
        %2418 = vmatprep.subr.mxu0 0.0
        %2419 = vmatpush2.msra.mxu0 0.0
        %2420 = vmatprep.subr.mxu0 0.0
        %2421 = vmatpush2.msra.mxu0 0.0
        %2422 = vmatprep.subr.mxu0 0.0
        %v2423 = vand.u32 %v1996, 4294901760
        %v2424 = vsub.f32 %v1996, %v2423
        %v2425 = vand.u32 %v2424, 4294901760
        %v2426 = vsub.f32 %v2424, %v2425
        %v2427 = vand.u32 %v2426, 4294901760
        %2428 = vmatpush2.msra.mxu0 %v2427
        %2429 = vmatprep.subr.mxu0 0.0
        %v2430 = vand.u32 %v1995, 4294901760
        %v2431 = vsub.f32 %v1995, %v2430
        %v2432 = vand.u32 %v2431, 4294901760
        %v2433 = vsub.f32 %v2431, %v2432
        %v2434 = vand.u32 %v2433, 4294901760
        %2435 = vmatpush2.msra.mxu0 %v2434
        %2436 = vmatprep.subr.mxu0 0.0
        %v2437 = vand.u32 %v1994, 4294901760
        %v2438 = vsub.f32 %v1994, %v2437
        %v2439 = vand.u32 %v2438, 4294901760
        %v2440 = vsub.f32 %v2438, %v2439
        %v2441 = vand.u32 %v2440, 4294901760
        %2442 = vmatpush2.msra.mxu0 %v2441
        %2443 = vmatprep.subr.mxu0 0.0
        %v2444 = vand.u32 %v1993, 4294901760
        %v2445 = vsub.f32 %v1993, %v2444
        %v2446 = vand.u32 %v2445, 4294901760
        %v2447 = vsub.f32 %v2445, %v2446
        %v2448 = vand.u32 %v2447, 4294901760
        %2449 = vmatpush2.msra.mxu0 %v2448
        %2450 = vmatprep.subr.mxu0 0.0
        %v2451 = vand.u32 %v1992, 4294901760
        %v2452 = vsub.f32 %v1992, %v2451
        %v2453 = vand.u32 %v2452, 4294901760
        %v2454 = vsub.f32 %v2452, %v2453
        %v2455 = vand.u32 %v2454, 4294901760
        %2456 = vmatpush2.msra.mxu0 %v2455
        %2457 = vmatprep.subr.mxu0 0.0
        %v2458 = vand.u32 %v1991, 4294901760
        %v2459 = vsub.f32 %v1991, %v2458
        %v2460 = vand.u32 %v2459, 4294901760
        %v2461 = vsub.f32 %v2459, %v2460
        %v2462 = vand.u32 %v2461, 4294901760
        %2463 = vmatpush2.msra.mxu0 %v2462
        %2464 = vmatprep.subr.mxu0 0.0
        %v2465 = vand.u32 %v1990, 4294901760
        %v2466 = vsub.f32 %v1990, %v2465
        %v2467 = vand.u32 %v2466, 4294901760
        %v2468 = vsub.f32 %v2466, %v2467
        %v2469 = vand.u32 %v2468, 4294901760
        %2470 = vmatpush2.msra.mxu0 %v2469
        %2471 = vmatprep.subr.mxu0 0.0
        %v2472 = vand.u32 %v1989, 4294901760
        %v2473 = vsub.f32 %v1989, %v2472
        %v2474 = vand.u32 %v2473, 4294901760
        %v2475 = vsub.f32 %v2473, %v2474
        %v2476 = vand.u32 %v2475, 4294901760
        %2477 = vmatpush2.msra.mxu0 %v2476
        %v2478 = vand.u32 %v2062, 4294901760
        %2479 = vmatprep.mubr.f32.mxu0 %v2478
        %v2480 = vand.u32 %v1997, 4294901760
        %2481 = vmatmul.mubr.f32.gmra.mxu0 %v2480
        %v2482 = vpop.f32.mrf.mxu0
        %v2483 = vadd.f32 %v2186, %v2482
        %v2484 = vpop.f32.mrf.mxu0
        %v2485 = vand.u32 %v2065, 4294901760
        %2486 = vmatprep.mubr.f32.mxu0 %v2485
        %v2487 = vand.u32 %v1999, 4294901760
        %2488 = vmatmul.mubr.f32.gmra.mxu0 %v2487
        %v2489 = vpop.f32.mrf.mxu0
        %v2490 = vadd.f32 %v2201, %v2489
        %v2491 = vpop.f32.mrf.mxu0
        %v2492 = vand.u32 %v2068, 4294901760
        %2493 = vmatprep.mubr.f32.mxu0 %v2492
        %v2494 = vand.u32 %v2001, 4294901760
        %2495 = vmatmul.mubr.f32.gmra.mxu0 %v2494
        %v2496 = vpop.f32.mrf.mxu0
        %v2497 = vadd.f32 %v2216, %v2496
        %v2498 = vpop.f32.mrf.mxu0
        %v2499 = vand.u32 %v2071, 4294901760
        %2500 = vmatprep.mubr.f32.mxu0 %v2499
        %v2501 = vand.u32 %v2003, 4294901760
        %2502 = vmatmul.mubr.f32.gmra.mxu0 %v2501
        %v2503 = vpop.f32.mrf.mxu0
        %v2504 = vadd.f32 %v2231, %v2503
        %v2505 = vpop.f32.mrf.mxu0
        %v2506 = vand.u32 %v2074, 4294901760
        %2507 = vmatprep.mubr.f32.mxu0 %v2506
        %v2508 = vand.u32 %v2005, 4294901760
        %2509 = vmatmul.mubr.f32.gmra.mxu0 %v2508
        %v2510 = vpop.f32.mrf.mxu0
        %v2511 = vadd.f32 %v2246, %v2510
        %v2512 = vpop.f32.mrf.mxu0
        %v2513 = vand.u32 %v2077, 4294901760
        %2514 = vmatprep.mubr.f32.mxu0 %v2513
        %v2515 = vand.u32 %v2007, 4294901760
        %2516 = vmatmul.mubr.f32.gmra.mxu0 %v2515
        %v2517 = vpop.f32.mrf.mxu0
        %v2518 = vadd.f32 %v2261, %v2517
        %v2519 = vpop.f32.mrf.mxu0
        %v2520 = vand.u32 %v2080, 4294901760
        %2521 = vmatprep.mubr.f32.mxu0 %v2520
        %v2522 = vand.u32 %v2009, 4294901760
        %2523 = vmatmul.mubr.f32.gmra.mxu0 %v2522
        %v2524 = vpop.f32.mrf.mxu0
        %v2525 = vadd.f32 %v2276, %v2524
        %v2526 = vpop.f32.mrf.mxu0
        %v2527 = vand.u32 %v2083, 4294901760
        %2528 = vmatprep.mubr.f32.mxu0 %v2527
        %v2529 = vand.u32 %v2011, 4294901760
        %2530 = vmatmul.mubr.f32.gmra.mxu0 %v2529
        %v2531 = vpop.f32.mrf.mxu0
        %v2532 = vadd.f32 %v2291, %v2531
        %v2533 = vpop.f32.mrf.mxu0
        %2534 = vdwg.mxu0
        %2535 = vmatprep.subr.mxu0 0.0
        %v2536 = vand.u32 %v1948, 4294901760
        %v2537 = vsub.f32 %v1948, %v2536
        %2538 = vmatpush1.msra.mxu0 %v2537
        %2539 = vmatprep.subr.mxu0 0.0
        %v2540 = vand.u32 %v1947, 4294901760
        %v2541 = vsub.f32 %v1947, %v2540
        %2542 = vmatpush1.msra.mxu0 %v2541
        %2543 = vmatprep.subr.mxu0 0.0
        %v2544 = vand.u32 %v1946, 4294901760
        %v2545 = vsub.f32 %v1946, %v2544
        %2546 = vmatpush1.msra.mxu0 %v2545
        %2547 = vmatprep.subr.mxu0 0.0
        %v2548 = vand.u32 %v1945, 4294901760
        %v2549 = vsub.f32 %v1945, %v2548
        %2550 = vmatpush1.msra.mxu0 %v2549
        %2551 = vmatprep.subr.mxu0 0.0
        %v2552 = vand.u32 %v1944, 4294901760
        %v2553 = vsub.f32 %v1944, %v2552
        %2554 = vmatpush1.msra.mxu0 %v2553
        %2555 = vmatprep.subr.mxu0 0.0
        %v2556 = vand.u32 %v1943, 4294901760
        %v2557 = vsub.f32 %v1943, %v2556
        %2558 = vmatpush1.msra.mxu0 %v2557
        %2559 = vmatprep.subr.mxu0 0.0
        %v2560 = vand.u32 %v1942, 4294901760
        %v2561 = vsub.f32 %v1942, %v2560
        %2562 = vmatpush1.msra.mxu0 %v2561
        %2563 = vmatprep.subr.mxu0 0.0
        %v2564 = vand.u32 %v1941, 4294901760
        %v2565 = vsub.f32 %v1941, %v2564
        %2566 = vmatpush1.msra.mxu0 %v2565
        %2567 = vmatprep.subr.mxu0 0.0
        %v2568 = vand.u32 %v1972, 4294901760
        %v2569 = vsub.f32 %v1972, %v2568
        %2570 = vmatpush1.msra.mxu0 %v2569
        %2571 = vmatprep.subr.mxu0 0.0
        %v2572 = vand.u32 %v1971, 4294901760
        %v2573 = vsub.f32 %v1971, %v2572
        %2574 = vmatpush1.msra.mxu0 %v2573
        %2575 = vmatprep.subr.mxu0 0.0
        %v2576 = vand.u32 %v1970, 4294901760
        %v2577 = vsub.f32 %v1970, %v2576
        %2578 = vmatpush1.msra.mxu0 %v2577
        %2579 = vmatprep.subr.mxu0 0.0
        %v2580 = vand.u32 %v1969, 4294901760
        %v2581 = vsub.f32 %v1969, %v2580
        %2582 = vmatpush1.msra.mxu0 %v2581
        %2583 = vmatprep.subr.mxu0 0.0
        %v2584 = vand.u32 %v1968, 4294901760
        %v2585 = vsub.f32 %v1968, %v2584
        %2586 = vmatpush1.msra.mxu0 %v2585
        %2587 = vmatprep.subr.mxu0 0.0
        %v2588 = vand.u32 %v1967, 4294901760
        %v2589 = vsub.f32 %v1967, %v2588
        %2590 = vmatpush1.msra.mxu0 %v2589
        %2591 = vmatprep.subr.mxu0 0.0
        %v2592 = vand.u32 %v1966, 4294901760
        %v2593 = vsub.f32 %v1966, %v2592
        %2594 = vmatpush1.msra.mxu0 %v2593
        %2595 = vmatprep.subr.mxu0 0.0
        %v2596 = vand.u32 %v1965, 4294901760
        %v2597 = vsub.f32 %v1965, %v2596
        %2598 = vmatpush1.msra.mxu0 %v2597
        %2599 = vmatprep.subr.mxu0 0.0
        %2600 = vmatpush2.msra.mxu0 0.0
        %2601 = vmatprep.subr.mxu0 0.0
        %2602 = vmatpush2.msra.mxu0 0.0
        %2603 = vmatprep.subr.mxu0 0.0
        %2604 = vmatpush2.msra.mxu0 0.0
        %2605 = vmatprep.subr.mxu0 0.0
        %2606 = vmatpush2.msra.mxu0 0.0
        %2607 = vmatprep.subr.mxu0 0.0
        %2608 = vmatpush2.msra.mxu0 0.0
        %2609 = vmatprep.subr.mxu0 0.0
        %2610 = vmatpush2.msra.mxu0 0.0
        %2611 = vmatprep.subr.mxu0 0.0
        %2612 = vmatpush2.msra.mxu0 0.0
        %2613 = vmatprep.subr.mxu0 0.0
        %2614 = vmatpush2.msra.mxu0 0.0
        %2615 = vmatprep.subr.mxu0 0.0
        %v2616 = vand.u32 %v1996, 4294901760
        %v2617 = vsub.f32 %v1996, %v2616
        %2618 = vmatpush2.msra.mxu0 %v2617
        %2619 = vmatprep.subr.mxu0 0.0
        %v2620 = vand.u32 %v1995, 4294901760
        %v2621 = vsub.f32 %v1995, %v2620
        %2622 = vmatpush2.msra.mxu0 %v2621
        %2623 = vmatprep.subr.mxu0 0.0
        %v2624 = vand.u32 %v1994, 4294901760
        %v2625 = vsub.f32 %v1994, %v2624
        %2626 = vmatpush2.msra.mxu0 %v2625
        %2627 = vmatprep.subr.mxu0 0.0
        %v2628 = vand.u32 %v1993, 4294901760
        %v2629 = vsub.f32 %v1993, %v2628
        %2630 = vmatpush2.msra.mxu0 %v2629
        %2631 = vmatprep.subr.mxu0 0.0
        %v2632 = vand.u32 %v1992, 4294901760
        %v2633 = vsub.f32 %v1992, %v2632
        %2634 = vmatpush2.msra.mxu0 %v2633
        %2635 = vmatprep.subr.mxu0 0.0
        %v2636 = vand.u32 %v1991, 4294901760
        %v2637 = vsub.f32 %v1991, %v2636
        %2638 = vmatpush2.msra.mxu0 %v2637
        %2639 = vmatprep.subr.mxu0 0.0
        %v2640 = vand.u32 %v1990, 4294901760
        %v2641 = vsub.f32 %v1990, %v2640
        %2642 = vmatpush2.msra.mxu0 %v2641
        %2643 = vmatprep.subr.mxu0 0.0
        %v2644 = vand.u32 %v1989, 4294901760
        %v2645 = vsub.f32 %v1989, %v2644
        %2646 = vmatpush2.msra.mxu0 %v2645
        %v2647 = vand.u32 %v2062, 4294901760
        %v2648 = vsub.f32 %v2062, %v2647
        %2649 = vmatprep.mubr.f32.mxu0 %v2648
        %v2650 = vand.u32 %v1997, 4294901760
        %v2651 = vsub.f32 %v1997, %v2650
        %2652 = vmatmul.mubr.f32.gmra.mxu0 %v2651
        %v2653 = vpop.f32.mrf.mxu0
        %v2654 = vadd.f32 %v2483, %v2653
        %v2655 = vpop.f32.mrf.mxu0
        %v2656 = vand.u32 %v2065, 4294901760
        %v2657 = vsub.f32 %v2065, %v2656
        %2658 = vmatprep.mubr.f32.mxu0 %v2657
        %v2659 = vand.u32 %v1999, 4294901760
        %v2660 = vsub.f32 %v1999, %v2659
        %2661 = vmatmul.mubr.f32.gmra.mxu0 %v2660
        %v2662 = vpop.f32.mrf.mxu0
        %v2663 = vadd.f32 %v2490, %v2662
        %v2664 = vpop.f32.mrf.mxu0
        %v2665 = vand.u32 %v2068, 4294901760
        %v2666 = vsub.f32 %v2068, %v2665
        %2667 = vmatprep.mubr.f32.mxu0 %v2666
        %v2668 = vand.u32 %v2001, 4294901760
        %v2669 = vsub.f32 %v2001, %v2668
        %2670 = vmatmul.mubr.f32.gmra.mxu0 %v2669
        %v2671 = vpop.f32.mrf.mxu0
        %v2672 = vadd.f32 %v2497, %v2671
        %v2673 = vpop.f32.mrf.mxu0
        %v2674 = vand.u32 %v2071, 4294901760
        %v2675 = vsub.f32 %v2071, %v2674
        %2676 = vmatprep.mubr.f32.mxu0 %v2675
        %v2677 = vand.u32 %v2003, 4294901760
        %v2678 = vsub.f32 %v2003, %v2677
        %2679 = vmatmul.mubr.f32.gmra.mxu0 %v2678
        %v2680 = vpop.f32.mrf.mxu0
        %v2681 = vadd.f32 %v2504, %v2680
        %v2682 = vpop.f32.mrf.mxu0
        %v2683 = vand.u32 %v2074, 4294901760
        %v2684 = vsub.f32 %v2074, %v2683
        %2685 = vmatprep.mubr.f32.mxu0 %v2684
        %v2686 = vand.u32 %v2005, 4294901760
        %v2687 = vsub.f32 %v2005, %v2686
        %2688 = vmatmul.mubr.f32.gmra.mxu0 %v2687
        %v2689 = vpop.f32.mrf.mxu0
        %v2690 = vadd.f32 %v2511, %v2689
        %v2691 = vpop.f32.mrf.mxu0
        %v2692 = vand.u32 %v2077, 4294901760
        %v2693 = vsub.f32 %v2077, %v2692
        %2694 = vmatprep.mubr.f32.mxu0 %v2693
        %v2695 = vand.u32 %v2007, 4294901760
        %v2696 = vsub.f32 %v2007, %v2695
        %2697 = vmatmul.mubr.f32.gmra.mxu0 %v2696
        %v2698 = vpop.f32.mrf.mxu0
        %v2699 = vadd.f32 %v2518, %v2698
        %v2700 = vpop.f32.mrf.mxu0
        %v2701 = vand.u32 %v2080, 4294901760
        %v2702 = vsub.f32 %v2080, %v2701
        %2703 = vmatprep.mubr.f32.mxu0 %v2702
        %v2704 = vand.u32 %v2009, 4294901760
        %v2705 = vsub.f32 %v2009, %v2704
        %2706 = vmatmul.mubr.f32.gmra.mxu0 %v2705
        %v2707 = vpop.f32.mrf.mxu0
        %v2708 = vadd.f32 %v2525, %v2707
        %v2709 = vpop.f32.mrf.mxu0
        %v2710 = vand.u32 %v2083, 4294901760
        %v2711 = vsub.f32 %v2083, %v2710
        %2712 = vmatprep.mubr.f32.mxu0 %v2711
        %v2713 = vand.u32 %v2011, 4294901760
        %v2714 = vsub.f32 %v2011, %v2713
        %2715 = vmatmul.mubr.f32.gmra.mxu0 %v2714
        %v2716 = vpop.f32.mrf.mxu0
        %v2717 = vadd.f32 %v2532, %v2716
        %v2718 = vpop.f32.mrf.mxu0
        %2719 = vdwg.mxu0
        %2720 = vmatprep.subr.mxu0 0.0
        %v2721 = vand.u32 %v1948, 4294901760
        %2722 = vmatpush1.msra.mxu0 %v2721
        %2723 = vmatprep.subr.mxu0 0.0
        %v2724 = vand.u32 %v1947, 4294901760
        %2725 = vmatpush1.msra.mxu0 %v2724
        %2726 = vmatprep.subr.mxu0 0.0
        %v2727 = vand.u32 %v1946, 4294901760
        %2728 = vmatpush1.msra.mxu0 %v2727
        %2729 = vmatprep.subr.mxu0 0.0
        %v2730 = vand.u32 %v1945, 4294901760
        %2731 = vmatpush1.msra.mxu0 %v2730
        %2732 = vmatprep.subr.mxu0 0.0
        %v2733 = vand.u32 %v1944, 4294901760
        %2734 = vmatpush1.msra.mxu0 %v2733
        %2735 = vmatprep.subr.mxu0 0.0
        %v2736 = vand.u32 %v1943, 4294901760
        %2737 = vmatpush1.msra.mxu0 %v2736
        %2738 = vmatprep.subr.mxu0 0.0
        %v2739 = vand.u32 %v1942, 4294901760
        %2740 = vmatpush1.msra.mxu0 %v2739
        %2741 = vmatprep.subr.mxu0 0.0
        %v2742 = vand.u32 %v1941, 4294901760
        %2743 = vmatpush1.msra.mxu0 %v2742
        %2744 = vmatprep.subr.mxu0 0.0
        %v2745 = vand.u32 %v1972, 4294901760
        %2746 = vmatpush1.msra.mxu0 %v2745
        %2747 = vmatprep.subr.mxu0 0.0
        %v2748 = vand.u32 %v1971, 4294901760
        %2749 = vmatpush1.msra.mxu0 %v2748
        %2750 = vmatprep.subr.mxu0 0.0
        %v2751 = vand.u32 %v1970, 4294901760
        %2752 = vmatpush1.msra.mxu0 %v2751
        %2753 = vmatprep.subr.mxu0 0.0
        %v2754 = vand.u32 %v1969, 4294901760
        %2755 = vmatpush1.msra.mxu0 %v2754
        %2756 = vmatprep.subr.mxu0 0.0
        %v2757 = vand.u32 %v1968, 4294901760
        %2758 = vmatpush1.msra.mxu0 %v2757
        %2759 = vmatprep.subr.mxu0 0.0
        %v2760 = vand.u32 %v1967, 4294901760
        %2761 = vmatpush1.msra.mxu0 %v2760
        %2762 = vmatprep.subr.mxu0 0.0
        %v2763 = vand.u32 %v1966, 4294901760
        %2764 = vmatpush1.msra.mxu0 %v2763
        %2765 = vmatprep.subr.mxu0 0.0
        %v2766 = vand.u32 %v1965, 4294901760
        %2767 = vmatpush1.msra.mxu0 %v2766
        %2768 = vmatprep.subr.mxu0 0.0
        %2769 = vmatpush2.msra.mxu0 0.0
        %2770 = vmatprep.subr.mxu0 0.0
        %2771 = vmatpush2.msra.mxu0 0.0
        %2772 = vmatprep.subr.mxu0 0.0
        %2773 = vmatpush2.msra.mxu0 0.0
        %2774 = vmatprep.subr.mxu0 0.0
        %2775 = vmatpush2.msra.mxu0 0.0
        %2776 = vmatprep.subr.mxu0 0.0
        %2777 = vmatpush2.msra.mxu0 0.0
        %2778 = vmatprep.subr.mxu0 0.0
        %2779 = vmatpush2.msra.mxu0 0.0
        %2780 = vmatprep.subr.mxu0 0.0
        %2781 = vmatpush2.msra.mxu0 0.0
        %2782 = vmatprep.subr.mxu0 0.0
        %2783 = vmatpush2.msra.mxu0 0.0
        %2784 = vmatprep.subr.mxu0 0.0
        %v2785 = vand.u32 %v1996, 4294901760
        %2786 = vmatpush2.msra.mxu0 %v2785
        %2787 = vmatprep.subr.mxu0 0.0
        %v2788 = vand.u32 %v1995, 4294901760
        %2789 = vmatpush2.msra.mxu0 %v2788
        %2790 = vmatprep.subr.mxu0 0.0
        %v2791 = vand.u32 %v1994, 4294901760
        %2792 = vmatpush2.msra.mxu0 %v2791
        %2793 = vmatprep.subr.mxu0 0.0
        %v2794 = vand.u32 %v1993, 4294901760
        %2795 = vmatpush2.msra.mxu0 %v2794
        %2796 = vmatprep.subr.mxu0 0.0
        %v2797 = vand.u32 %v1992, 4294901760
        %2798 = vmatpush2.msra.mxu0 %v2797
        %2799 = vmatprep.subr.mxu0 0.0
        %v2800 = vand.u32 %v1991, 4294901760
        %2801 = vmatpush2.msra.mxu0 %v2800
        %2802 = vmatprep.subr.mxu0 0.0
        %v2803 = vand.u32 %v1990, 4294901760
        %2804 = vmatpush2.msra.mxu0 %v2803
        %2805 = vmatprep.subr.mxu0 0.0
        %v2806 = vand.u32 %v1989, 4294901760
        %2807 = vmatpush2.msra.mxu0 %v2806
        %v2808 = vand.u32 %v2062, 4294901760
        %v2809 = vsub.f32 %v2062, %v2808
        %v2810 = vand.u32 %v2809, 4294901760
        %2811 = vmatprep.mubr.f32.mxu0 %v2810
        %v2812 = vand.u32 %v1997, 4294901760
        %v2813 = vsub.f32 %v1997, %v2812
        %v2814 = vand.u32 %v2813, 4294901760
        %2815 = vmatmul.mubr.f32.gmra.mxu0 %v2814
        %v2816 = vpop.f32.mrf.mxu0
        %v2817 = vadd.f32 %v2654, %v2816
        %v2818 = vpop.f32.mrf.mxu0
        %v2819 = vand.u32 %v2065, 4294901760
        %v2820 = vsub.f32 %v2065, %v2819
        %v2821 = vand.u32 %v2820, 4294901760
        %2822 = vmatprep.mubr.f32.mxu0 %v2821
        %v2823 = vand.u32 %v1999, 4294901760
        %v2824 = vsub.f32 %v1999, %v2823
        %v2825 = vand.u32 %v2824, 4294901760
        %2826 = vmatmul.mubr.f32.gmra.mxu0 %v2825
        %v2827 = vpop.f32.mrf.mxu0
        %v2828 = vadd.f32 %v2663, %v2827
        %v2829 = vpop.f32.mrf.mxu0
        %v2830 = vand.u32 %v2068, 4294901760
        %v2831 = vsub.f32 %v2068, %v2830
        %v2832 = vand.u32 %v2831, 4294901760
        %2833 = vmatprep.mubr.f32.mxu0 %v2832
        %v2834 = vand.u32 %v2001, 4294901760
        %v2835 = vsub.f32 %v2001, %v2834
        %v2836 = vand.u32 %v2835, 4294901760
        %2837 = vmatmul.mubr.f32.gmra.mxu0 %v2836
        %v2838 = vpop.f32.mrf.mxu0
        %v2839 = vadd.f32 %v2672, %v2838
        %v2840 = vpop.f32.mrf.mxu0
        %v2841 = vand.u32 %v2071, 4294901760
        %v2842 = vsub.f32 %v2071, %v2841
        %v2843 = vand.u32 %v2842, 4294901760
        %2844 = vmatprep.mubr.f32.mxu0 %v2843
        %v2845 = vand.u32 %v2003, 4294901760
        %v2846 = vsub.f32 %v2003, %v2845
        %v2847 = vand.u32 %v2846, 4294901760
        %2848 = vmatmul.mubr.f32.gmra.mxu0 %v2847
        %v2849 = vpop.f32.mrf.mxu0
        %v2850 = vadd.f32 %v2681, %v2849
        %v2851 = vpop.f32.mrf.mxu0
        %v2852 = vand.u32 %v2074, 4294901760
        %v2853 = vsub.f32 %v2074, %v2852
        %v2854 = vand.u32 %v2853, 4294901760
        %2855 = vmatprep.mubr.f32.mxu0 %v2854
        %v2856 = vand.u32 %v2005, 4294901760
        %v2857 = vsub.f32 %v2005, %v2856
        %v2858 = vand.u32 %v2857, 4294901760
        %2859 = vmatmul.mubr.f32.gmra.mxu0 %v2858
        %v2860 = vpop.f32.mrf.mxu0
        %v2861 = vadd.f32 %v2690, %v2860
        %v2862 = vpop.f32.mrf.mxu0
        %v2863 = vand.u32 %v2077, 4294901760
        %v2864 = vsub.f32 %v2077, %v2863
        %v2865 = vand.u32 %v2864, 4294901760
        %2866 = vmatprep.mubr.f32.mxu0 %v2865
        %v2867 = vand.u32 %v2007, 4294901760
        %v2868 = vsub.f32 %v2007, %v2867
        %v2869 = vand.u32 %v2868, 4294901760
        %2870 = vmatmul.mubr.f32.gmra.mxu0 %v2869
        %v2871 = vpop.f32.mrf.mxu0
        %v2872 = vadd.f32 %v2699, %v2871
        %v2873 = vpop.f32.mrf.mxu0
        %v2874 = vand.u32 %v2080, 4294901760
        %v2875 = vsub.f32 %v2080, %v2874
        %v2876 = vand.u32 %v2875, 4294901760
        %2877 = vmatprep.mubr.f32.mxu0 %v2876
        %v2878 = vand.u32 %v2009, 4294901760
        %v2879 = vsub.f32 %v2009, %v2878
        %v2880 = vand.u32 %v2879, 4294901760
        %2881 = vmatmul.mubr.f32.gmra.mxu0 %v2880
        %v2882 = vpop.f32.mrf.mxu0
        %v2883 = vadd.f32 %v2708, %v2882
        %v2884 = vpop.f32.mrf.mxu0
        %v2885 = vand.u32 %v2083, 4294901760
        %v2886 = vsub.f32 %v2083, %v2885
        %v2887 = vand.u32 %v2886, 4294901760
        %2888 = vmatprep.mubr.f32.mxu0 %v2887
        %v2889 = vand.u32 %v2011, 4294901760
        %v2890 = vsub.f32 %v2011, %v2889
        %v2891 = vand.u32 %v2890, 4294901760
        %2892 = vmatmul.mubr.f32.gmra.mxu0 %v2891
        %v2893 = vpop.f32.mrf.mxu0
        %v2894 = vadd.f32 %v2717, %v2893
        %v2895 = vpop.f32.mrf.mxu0
        %2896 = vdwg.mxu0
        %2897 = vmatprep.subr.mxu0 0.0
        %v2898 = vand.u32 %v1948, 4294901760
        %v2899 = vsub.f32 %v1948, %v2898
        %v2900 = vand.u32 %v2899, 4294901760
        %2901 = vmatpush1.msra.mxu0 %v2900
        %2902 = vmatprep.subr.mxu0 0.0
        %v2903 = vand.u32 %v1947, 4294901760
        %v2904 = vsub.f32 %v1947, %v2903
        %v2905 = vand.u32 %v2904, 4294901760
        %2906 = vmatpush1.msra.mxu0 %v2905
        %2907 = vmatprep.subr.mxu0 0.0
        %v2908 = vand.u32 %v1946, 4294901760
        %v2909 = vsub.f32 %v1946, %v2908
        %v2910 = vand.u32 %v2909, 4294901760
        %2911 = vmatpush1.msra.mxu0 %v2910
        %2912 = vmatprep.subr.mxu0 0.0
        %v2913 = vand.u32 %v1945, 4294901760
        %v2914 = vsub.f32 %v1945, %v2913
        %v2915 = vand.u32 %v2914, 4294901760
        %2916 = vmatpush1.msra.mxu0 %v2915
        %2917 = vmatprep.subr.mxu0 0.0
        %v2918 = vand.u32 %v1944, 4294901760
        %v2919 = vsub.f32 %v1944, %v2918
        %v2920 = vand.u32 %v2919, 4294901760
        %2921 = vmatpush1.msra.mxu0 %v2920
        %2922 = vmatprep.subr.mxu0 0.0
        %v2923 = vand.u32 %v1943, 4294901760
        %v2924 = vsub.f32 %v1943, %v2923
        %v2925 = vand.u32 %v2924, 4294901760
        %2926 = vmatpush1.msra.mxu0 %v2925
        %2927 = vmatprep.subr.mxu0 0.0
        %v2928 = vand.u32 %v1942, 4294901760
        %v2929 = vsub.f32 %v1942, %v2928
        %v2930 = vand.u32 %v2929, 4294901760
        %2931 = vmatpush1.msra.mxu0 %v2930
        %2932 = vmatprep.subr.mxu0 0.0
        %v2933 = vand.u32 %v1941, 4294901760
        %v2934 = vsub.f32 %v1941, %v2933
        %v2935 = vand.u32 %v2934, 4294901760
        %2936 = vmatpush1.msra.mxu0 %v2935
        %2937 = vmatprep.subr.mxu0 0.0
        %v2938 = vand.u32 %v1972, 4294901760
        %v2939 = vsub.f32 %v1972, %v2938
        %v2940 = vand.u32 %v2939, 4294901760
        %2941 = vmatpush1.msra.mxu0 %v2940
        %2942 = vmatprep.subr.mxu0 0.0
        %v2943 = vand.u32 %v1971, 4294901760
        %v2944 = vsub.f32 %v1971, %v2943
        %v2945 = vand.u32 %v2944, 4294901760
        %2946 = vmatpush1.msra.mxu0 %v2945
        %2947 = vmatprep.subr.mxu0 0.0
        %v2948 = vand.u32 %v1970, 4294901760
        %v2949 = vsub.f32 %v1970, %v2948
        %v2950 = vand.u32 %v2949, 4294901760
        %2951 = vmatpush1.msra.mxu0 %v2950
        %2952 = vmatprep.subr.mxu0 0.0
        %v2953 = vand.u32 %v1969, 4294901760
        %v2954 = vsub.f32 %v1969, %v2953
        %v2955 = vand.u32 %v2954, 4294901760
        %2956 = vmatpush1.msra.mxu0 %v2955
        %2957 = vmatprep.subr.mxu0 0.0
        %v2958 = vand.u32 %v1968, 4294901760
        %v2959 = vsub.f32 %v1968, %v2958
        %v2960 = vand.u32 %v2959, 4294901760
        %2961 = vmatpush1.msra.mxu0 %v2960
        %2962 = vmatprep.subr.mxu0 0.0
        %v2963 = vand.u32 %v1967, 4294901760
        %v2964 = vsub.f32 %v1967, %v2963
        %v2965 = vand.u32 %v2964, 4294901760
        %2966 = vmatpush1.msra.mxu0 %v2965
        %2967 = vmatprep.subr.mxu0 0.0
        %v2968 = vand.u32 %v1966, 4294901760
        %v2969 = vsub.f32 %v1966, %v2968
        %v2970 = vand.u32 %v2969, 4294901760
        %2971 = vmatpush1.msra.mxu0 %v2970
        %2972 = vmatprep.subr.mxu0 0.0
        %v2973 = vand.u32 %v1965, 4294901760
        %v2974 = vsub.f32 %v1965, %v2973
        %v2975 = vand.u32 %v2974, 4294901760
        %2976 = vmatpush1.msra.mxu0 %v2975
        %2977 = vmatprep.subr.mxu0 0.0
        %2978 = vmatpush2.msra.mxu0 0.0
        %2979 = vmatprep.subr.mxu0 0.0
        %2980 = vmatpush2.msra.mxu0 0.0
        %2981 = vmatprep.subr.mxu0 0.0
        %2982 = vmatpush2.msra.mxu0 0.0
        %2983 = vmatprep.subr.mxu0 0.0
        %2984 = vmatpush2.msra.mxu0 0.0
        %2985 = vmatprep.subr.mxu0 0.0
        %2986 = vmatpush2.msra.mxu0 0.0
        %2987 = vmatprep.subr.mxu0 0.0
        %2988 = vmatpush2.msra.mxu0 0.0
        %2989 = vmatprep.subr.mxu0 0.0
        %2990 = vmatpush2.msra.mxu0 0.0
        %2991 = vmatprep.subr.mxu0 0.0
        %2992 = vmatpush2.msra.mxu0 0.0
        %2993 = vmatprep.subr.mxu0 0.0
        %v2994 = vand.u32 %v1996, 4294901760
        %v2995 = vsub.f32 %v1996, %v2994
        %v2996 = vand.u32 %v2995, 4294901760
        %2997 = vmatpush2.msra.mxu0 %v2996
        %2998 = vmatprep.subr.mxu0 0.0
        %v2999 = vand.u32 %v1995, 4294901760
        %v3000 = vsub.f32 %v1995, %v2999
        %v3001 = vand.u32 %v3000, 4294901760
        %3002 = vmatpush2.msra.mxu0 %v3001
        %3003 = vmatprep.subr.mxu0 0.0
        %v3004 = vand.u32 %v1994, 4294901760
        %v3005 = vsub.f32 %v1994, %v3004
        %v3006 = vand.u32 %v3005, 4294901760
        %3007 = vmatpush2.msra.mxu0 %v3006
        %3008 = vmatprep.subr.mxu0 0.0
        %v3009 = vand.u32 %v1993, 4294901760
        %v3010 = vsub.f32 %v1993, %v3009
        %v3011 = vand.u32 %v3010, 4294901760
        %3012 = vmatpush2.msra.mxu0 %v3011
        %3013 = vmatprep.subr.mxu0 0.0
        %v3014 = vand.u32 %v1992, 4294901760
        %v3015 = vsub.f32 %v1992, %v3014
        %v3016 = vand.u32 %v3015, 4294901760
        %3017 = vmatpush2.msra.mxu0 %v3016
        %3018 = vmatprep.subr.mxu0 0.0
        %v3019 = vand.u32 %v1991, 4294901760
        %v3020 = vsub.f32 %v1991, %v3019
        %v3021 = vand.u32 %v3020, 4294901760
        %3022 = vmatpush2.msra.mxu0 %v3021
        %3023 = vmatprep.subr.mxu0 0.0
        %v3024 = vand.u32 %v1990, 4294901760
        %v3025 = vsub.f32 %v1990, %v3024
        %v3026 = vand.u32 %v3025, 4294901760
        %3027 = vmatpush2.msra.mxu0 %v3026
        %3028 = vmatprep.subr.mxu0 0.0
        %v3029 = vand.u32 %v1989, 4294901760
        %v3030 = vsub.f32 %v1989, %v3029
        %v3031 = vand.u32 %v3030, 4294901760
        %3032 = vmatpush2.msra.mxu0 %v3031
        %v3033 = vand.u32 %v2062, 4294901760
        %3034 = vmatprep.mubr.f32.mxu0 %v3033
        %v3035 = vand.u32 %v1997, 4294901760
        %3036 = vmatmul.mubr.f32.gmra.mxu0 %v3035
        %v3037 = vpop.f32.mrf.mxu0
        %v3038 = vadd.f32 %v2817, %v3037
        %v3039 = vpop.f32.mrf.mxu0
        %v3040 = vand.u32 %v2065, 4294901760
        %3041 = vmatprep.mubr.f32.mxu0 %v3040
        %v3042 = vand.u32 %v1999, 4294901760
        %3043 = vmatmul.mubr.f32.gmra.mxu0 %v3042
        %v3044 = vpop.f32.mrf.mxu0
        %v3045 = vadd.f32 %v2828, %v3044
        %v3046 = vpop.f32.mrf.mxu0
        %v3047 = vand.u32 %v2068, 4294901760
        %3048 = vmatprep.mubr.f32.mxu0 %v3047
        %v3049 = vand.u32 %v2001, 4294901760
        %3050 = vmatmul.mubr.f32.gmra.mxu0 %v3049
        %v3051 = vpop.f32.mrf.mxu0
        %v3052 = vadd.f32 %v2839, %v3051
        %v3053 = vpop.f32.mrf.mxu0
        %v3054 = vand.u32 %v2071, 4294901760
        %3055 = vmatprep.mubr.f32.mxu0 %v3054
        %v3056 = vand.u32 %v2003, 4294901760
        %3057 = vmatmul.mubr.f32.gmra.mxu0 %v3056
        %v3058 = vpop.f32.mrf.mxu0
        %v3059 = vadd.f32 %v2850, %v3058
        %v3060 = vpop.f32.mrf.mxu0
        %v3061 = vand.u32 %v2074, 4294901760
        %3062 = vmatprep.mubr.f32.mxu0 %v3061
        %v3063 = vand.u32 %v2005, 4294901760
        %3064 = vmatmul.mubr.f32.gmra.mxu0 %v3063
        %v3065 = vpop.f32.mrf.mxu0
        %v3066 = vadd.f32 %v2861, %v3065
        %v3067 = vpop.f32.mrf.mxu0
        %v3068 = vand.u32 %v2077, 4294901760
        %3069 = vmatprep.mubr.f32.mxu0 %v3068
        %v3070 = vand.u32 %v2007, 4294901760
        %3071 = vmatmul.mubr.f32.gmra.mxu0 %v3070
        %v3072 = vpop.f32.mrf.mxu0
        %v3073 = vadd.f32 %v2872, %v3072
        %v3074 = vpop.f32.mrf.mxu0
        %v3075 = vand.u32 %v2080, 4294901760
        %3076 = vmatprep.mubr.f32.mxu0 %v3075
        %v3077 = vand.u32 %v2009, 4294901760
        %3078 = vmatmul.mubr.f32.gmra.mxu0 %v3077
        %v3079 = vpop.f32.mrf.mxu0
        %v3080 = vadd.f32 %v2883, %v3079
        %v3081 = vpop.f32.mrf.mxu0
        %v3082 = vand.u32 %v2083, 4294901760
        %3083 = vmatprep.mubr.f32.mxu0 %v3082
        %v3084 = vand.u32 %v2011, 4294901760
        %3085 = vmatmul.mubr.f32.gmra.mxu0 %v3084
        %v3086 = vpop.f32.mrf.mxu0
        %v3087 = vadd.f32 %v2894, %v3086
        %v3088 = vpop.f32.mrf.mxu0
        %3089 = vdwg.mxu0
        %3090 = vmatprep.subr.mxu0 0.0
        %v3091 = vand.u32 %v1948, 4294901760
        %3092 = vmatpush1.msra.mxu0 %v3091
        %3093 = vmatprep.subr.mxu0 0.0
        %v3094 = vand.u32 %v1947, 4294901760
        %3095 = vmatpush1.msra.mxu0 %v3094
        %3096 = vmatprep.subr.mxu0 0.0
        %v3097 = vand.u32 %v1946, 4294901760
        %3098 = vmatpush1.msra.mxu0 %v3097
        %3099 = vmatprep.subr.mxu0 0.0
        %v3100 = vand.u32 %v1945, 4294901760
        %3101 = vmatpush1.msra.mxu0 %v3100
        %3102 = vmatprep.subr.mxu0 0.0
        %v3103 = vand.u32 %v1944, 4294901760
        %3104 = vmatpush1.msra.mxu0 %v3103
        %3105 = vmatprep.subr.mxu0 0.0
        %v3106 = vand.u32 %v1943, 4294901760
        %3107 = vmatpush1.msra.mxu0 %v3106
        %3108 = vmatprep.subr.mxu0 0.0
        %v3109 = vand.u32 %v1942, 4294901760
        %3110 = vmatpush1.msra.mxu0 %v3109
        %3111 = vmatprep.subr.mxu0 0.0
        %v3112 = vand.u32 %v1941, 4294901760
        %3113 = vmatpush1.msra.mxu0 %v3112
        %3114 = vmatprep.subr.mxu0 0.0
        %v3115 = vand.u32 %v1972, 4294901760
        %3116 = vmatpush1.msra.mxu0 %v3115
        %3117 = vmatprep.subr.mxu0 0.0
        %v3118 = vand.u32 %v1971, 4294901760
        %3119 = vmatpush1.msra.mxu0 %v3118
        %3120 = vmatprep.subr.mxu0 0.0
        %v3121 = vand.u32 %v1970, 4294901760
        %3122 = vmatpush1.msra.mxu0 %v3121
        %3123 = vmatprep.subr.mxu0 0.0
        %v3124 = vand.u32 %v1969, 4294901760
        %3125 = vmatpush1.msra.mxu0 %v3124
        %3126 = vmatprep.subr.mxu0 0.0
        %v3127 = vand.u32 %v1968, 4294901760
        %3128 = vmatpush1.msra.mxu0 %v3127
        %3129 = vmatprep.subr.mxu0 0.0
        %v3130 = vand.u32 %v1967, 4294901760
        %3131 = vmatpush1.msra.mxu0 %v3130
        %3132 = vmatprep.subr.mxu0 0.0
        %v3133 = vand.u32 %v1966, 4294901760
        %3134 = vmatpush1.msra.mxu0 %v3133
        %3135 = vmatprep.subr.mxu0 0.0
        %v3136 = vand.u32 %v1965, 4294901760
        %3137 = vmatpush1.msra.mxu0 %v3136
        %3138 = vmatprep.subr.mxu0 0.0
        %3139 = vmatpush2.msra.mxu0 0.0
        %3140 = vmatprep.subr.mxu0 0.0
        %3141 = vmatpush2.msra.mxu0 0.0
        %3142 = vmatprep.subr.mxu0 0.0
        %3143 = vmatpush2.msra.mxu0 0.0
        %3144 = vmatprep.subr.mxu0 0.0
        %3145 = vmatpush2.msra.mxu0 0.0
        %3146 = vmatprep.subr.mxu0 0.0
        %3147 = vmatpush2.msra.mxu0 0.0
        %3148 = vmatprep.subr.mxu0 0.0
        %3149 = vmatpush2.msra.mxu0 0.0
        %3150 = vmatprep.subr.mxu0 0.0
        %3151 = vmatpush2.msra.mxu0 0.0
        %3152 = vmatprep.subr.mxu0 0.0
        %3153 = vmatpush2.msra.mxu0 0.0
        %3154 = vmatprep.subr.mxu0 0.0
        %v3155 = vand.u32 %v1996, 4294901760
        %3156 = vmatpush2.msra.mxu0 %v3155
        %3157 = vmatprep.subr.mxu0 0.0
        %v3158 = vand.u32 %v1995, 4294901760
        %3159 = vmatpush2.msra.mxu0 %v3158
        %3160 = vmatprep.subr.mxu0 0.0
        %v3161 = vand.u32 %v1994, 4294901760
        %3162 = vmatpush2.msra.mxu0 %v3161
        %3163 = vmatprep.subr.mxu0 0.0
        %v3164 = vand.u32 %v1993, 4294901760
        %3165 = vmatpush2.msra.mxu0 %v3164
        %3166 = vmatprep.subr.mxu0 0.0
        %v3167 = vand.u32 %v1992, 4294901760
        %3168 = vmatpush2.msra.mxu0 %v3167
        %3169 = vmatprep.subr.mxu0 0.0
        %v3170 = vand.u32 %v1991, 4294901760
        %3171 = vmatpush2.msra.mxu0 %v3170
        %3172 = vmatprep.subr.mxu0 0.0
        %v3173 = vand.u32 %v1990, 4294901760
        %3174 = vmatpush2.msra.mxu0 %v3173
        %3175 = vmatprep.subr.mxu0 0.0
        %v3176 = vand.u32 %v1989, 4294901760
        %3177 = vmatpush2.msra.mxu0 %v3176
        %v3178 = vand.u32 %v2062, 4294901760
        %3179 = vmatprep.mubr.f32.mxu0 %v3178
        %v3180 = vand.u32 %v1997, 4294901760
        %3181 = vmatmul.mubr.f32.gmra.mxu0 %v3180
        %v3182 = vpop.f32.mrf.mxu0
        %v3183 = vadd.f32 %v3038, %v3182
        %v3184 = vpop.f32.mrf.mxu0
        %v3185 = vand.u32 %v2065, 4294901760
        %3186 = vmatprep.mubr.f32.mxu0 %v3185
        %v3187 = vand.u32 %v1999, 4294901760
        %3188 = vmatmul.mubr.f32.gmra.mxu0 %v3187
        %v3189 = vpop.f32.mrf.mxu0
        %v3190 = vadd.f32 %v3045, %v3189
        %v3191 = vpop.f32.mrf.mxu0
        %v3192 = vand.u32 %v2068, 4294901760
        %3193 = vmatprep.mubr.f32.mxu0 %v3192
        %v3194 = vand.u32 %v2001, 4294901760
        %3195 = vmatmul.mubr.f32.gmra.mxu0 %v3194
        %v3196 = vpop.f32.mrf.mxu0
        %v3197 = vadd.f32 %v3052, %v3196
        %v3198 = vpop.f32.mrf.mxu0
        %v3199 = vand.u32 %v2071, 4294901760
        %3200 = vmatprep.mubr.f32.mxu0 %v3199
        %v3201 = vand.u32 %v2003, 4294901760
        %3202 = vmatmul.mubr.f32.gmra.mxu0 %v3201
        %v3203 = vpop.f32.mrf.mxu0
        %v3204 = vadd.f32 %v3059, %v3203
        %v3205 = vpop.f32.mrf.mxu0
        %v3206 = vand.u32 %v2074, 4294901760
        %3207 = vmatprep.mubr.f32.mxu0 %v3206
        %v3208 = vand.u32 %v2005, 4294901760
        %3209 = vmatmul.mubr.f32.gmra.mxu0 %v3208
        %v3210 = vpop.f32.mrf.mxu0
        %v3211 = vadd.f32 %v3066, %v3210
        %v3212 = vpop.f32.mrf.mxu0
        %v3213 = vand.u32 %v2077, 4294901760
        %3214 = vmatprep.mubr.f32.mxu0 %v3213
        %v3215 = vand.u32 %v2007, 4294901760
        %3216 = vmatmul.mubr.f32.gmra.mxu0 %v3215
        %v3217 = vpop.f32.mrf.mxu0
        %v3218 = vadd.f32 %v3073, %v3217
        %v3219 = vpop.f32.mrf.mxu0
        %v3220 = vand.u32 %v2080, 4294901760
        %3221 = vmatprep.mubr.f32.mxu0 %v3220
        %v3222 = vand.u32 %v2009, 4294901760
        %3223 = vmatmul.mubr.f32.gmra.mxu0 %v3222
        %v3224 = vpop.f32.mrf.mxu0
        %v3225 = vadd.f32 %v3080, %v3224
        %v3226 = vpop.f32.mrf.mxu0
        %v3227 = vand.u32 %v2083, 4294901760
        %3228 = vmatprep.mubr.f32.mxu0 %v3227
        %v3229 = vand.u32 %v2011, 4294901760
        %3230 = vmatmul.mubr.f32.gmra.mxu0 %v3229
        %v3231 = vpop.f32.mrf.mxu0
        %v3232 = vadd.f32 %v3087, %v3231
        %v3233 = vpop.f32.mrf.mxu0
        %3234 = vdwg.mxu0
        %v3235 = vadd.f32 %v3183, %v363
        %v3236 = vadd.f32 %v3190, %v364
        %v3237 = vadd.f32 %v3197, %v365
        %v3238 = vadd.f32 %v3204, %v366
        %v3239 = vadd.f32 %v3211, %v367
        %v3240 = vadd.f32 %v3218, %v368
        %v3241 = vadd.f32 %v3225, %v369
        %v3242 = vadd.f32 %v3232, %v370
        %3243 = vst [vmem:[%s355] sm:$0xff] %v3235
        %3244 = vst [vmem:[%s355 + $0x8] sm:$0xff] %v3236
        %3245 = vst [vmem:[%s355 + $0x10] sm:$0xff] %v3237
        %3246 = vst [vmem:[%s355 + $0x18] sm:$0xff] %v3238
        %3247 = vst [vmem:[%s355 + $0x20] sm:$0xff] %v3239
        %3248 = vst [vmem:[%s355 + $0x28] sm:$0xff] %v3240
        %3249 = vst [vmem:[%s355 + $0x30] sm:$0xff] %v3241
        %3250 = vst [vmem:[%s355 + $0x38] sm:$0xff] %v3242
        %s3251 = sand.u32 %s227, 1
        %s3252 = scalar_lea.sflag [#allocation4], %s3251
        %s3253 = sand.u32 %s227, 1
        %s3254 = smul.addr %s3253, 64
        %s3255 = scalar_lea.vmem [#allocation7], %s3254
        // Predicated region
        $region65: #{tpu_custom_call.1} parent=55 // pred_check
          %p3256 = pneg %p237
        $region66: #{tpu_custom_call.1} parent=55 // pred_check_branch
          %3258 = sbr.rel (%p3256) target = $region68
        $region67: #{tpu_custom_call.1} parent=55 // pred_region
          %s3260 = ssub.s32 1024, 1024
          %3261 = vsyncadd %s3252, %s3260
          %s3262 = smul.addr %s25, 8
          %s3263 = smul.addr %s3262, 128
          %s3264 = scalar_lea.hbm %s9, %s3263
          %s3265 = sshll.u32 %s3255, 4
          %s3266 = int_to_ptr.vmem [resolvable:$true] %s3265
          %3271 = dma.vmem_to_hbm [thread:$0]  %s3266, 1024, %s3264, %s3252, 128, 128, 8
        $region68: #{tpu_custom_call.1} parent=55 // pred_fallthru
          _
      $region56: #{tpu_custom_call.1} parent=5 // pred_fallthru
        _
      %p3272 = scmp.le.s32.totalorder 2, %s20
      // Predicated region
      $region69: #{tpu_custom_call.1} parent=5 // pred_check
        %p3273 = pneg %p3272
      $region70: #{tpu_custom_call.1} parent=5 // pred_check_branch
        %3275 = sbr.rel (%p3273) target = $region72
      $region71: #{tpu_custom_call.1} parent=5 // pred_region
        %s3276 = ssub.s32 %s20, 2
        // Predicated region
        $region73: #{tpu_custom_call.1} parent=71 // pred_check
          %p3277 = pneg %p243
        $region74: #{tpu_custom_call.1} parent=71 // pred_check_branch
          %3279 = sbr.rel (%p3277) target = $region76
        $region75: #{tpu_custom_call.1} parent=71 // pred_region
          %s3280 = sand.u32 %s228, 1
          %s3281 = scalar_lea.sflag [#allocation4], %s3280
          %s3282 = sand.u32 %s228, 1
          %s3283 = smul.addr %s3282, 64
          %s3284 = scalar_lea.vmem [#allocation7], %s3283
          %3285 = dma.done %s3281, 1024
        $region76: #{tpu_custom_call.1} parent=71 // pred_fallthru
          _
      $region72: #{tpu_custom_call.1} parent=5 // pred_fallthru
        _
    $region6: #{tpu_custom_call.1} parent=1 // loop_footer
      %s24 = sadd.s32 1, %s20
    $region7: #{tpu_custom_call.1} parent=1 // loop_footer_branch
      %19 = sbr.rel target = $region3
    $region8: #{tpu_custom_call.1} parent=1 // loop_exit
      _
    %3286 = vsyncpa [#allocation3], 1
    %s3287 = scalar_lea.sflag [#allocation3], 1
    %3288 = vsyncpa %s3287, 1
    %3289 = vsyncpa [#allocation6], 1
    %3290 = vsyncpa [#allocation4], 1
    %s3291 = scalar_lea.sflag [#allocation4], 1
    %3292 = vsyncpa %s3291, 1

</llo_original>
